<compile_context>
chip_gen: v7x
topology: tpu7x:2x2x1
jax: 0.10.0
libtpu: 0.0.40
codegen_flags: <defaults>
</compile_context>

<pallas_src>
import functools

import jax
import jax.numpy as jnp
import numpy as np
from jax.experimental import pallas as pl
from jax.experimental.pallas import tpu as pltpu


# (oy, ox) neighbor offsets of the 3x3 stencil, row-major — matches
# w.reshape(9, Cin, Cout) flattening of a (3, 3, Cin, Cout) weight.
_TAP_OFFSETS = [(oy, ox) for oy in (-1, 0, 1) for ox in (-1, 0, 1)]


# ----------------------------------------------------------------------------
# Fused kernel: full DDIM sampling loop for ONE batch element per grid point
# ----------------------------------------------------------------------------
def _fused_ddim_kernel(coef_ref, bt_ref, w1xt_ref, w1xn_ref, w2_ref, mask_ref,
                       xn_ref, xinit_ref, out_ref, *, img_w, hw, steps):
    """Grid point b = the whole DDIM loop for image b.

    coef_ref : SMEM (steps*3,) f32      -- per step [c1, c2, c2*conv2_bias]
    bt_ref   : VMEM (steps, hidden, 1)  -- conv1 bias + time embedding, all steps
    w1xt_ref : VMEM (hidden, 9) bf16    -- conv1 weights for the x_t channel taps
    w1xn_ref : VMEM (hidden, 9) bf16    -- conv1 weights for the x_n channel taps
    w2_ref   : VMEM (9, hidden) f32     -- conv2 weights (tap-major)
    mask_ref : VMEM (9, 1, HW) f32      -- zero-padding masks for the 9 taps
    xn_ref   : VMEM (1, 1, HW) f32      -- conditioning image (flattened)
    xinit_ref: VMEM (1, 1, HW) f32      -- initial Gaussian x_T (flattened)
    out_ref  : VMEM (1, 1, HW) f32      -- x_0
    """

    def taps9(v):
        """v: (1, HW) -> (9, HW): in-kernel im2col via lane rolls + border masks."""
        rows = []
        for ti, (oy, ox) in enumerate(_TAP_OFFSETS):
            off = oy * img_w + ox
            if off == 0:
                rows.append(v)                                     # center tap
            else:
                r = pltpu.roll(v, shift=(-off) % hw, axis=1)       # out[p] = in[p + off]
                rows.append(r * mask_ref[ti])                      # zero the padded border
        return jnp.concatenate(rows, axis=0)

    # ---- step-invariant conv1 contribution of x_n (hoisted out of the loop) --
    xn = xn_ref[0]                                                 # (1, HW) f32
    h_n = jnp.dot(w1xn_ref[...], taps9(xn).astype(jnp.bfloat16),
                  preferred_element_type=jnp.float32)              # (hidden, HW)

    x_t = xinit_ref[0]                                             # (1, HW) f32

    # ---- DDIM reverse loop, fully in-kernel (x_t stays in vregs) -------------
    for s in range(steps):
        # conv1 on x_t taps: one small MXU matmul, K = 9
        xt_taps = taps9(x_t).astype(jnp.bfloat16)                  # (9, HW) bf16
        h = jnp.dot(w1xt_ref[...], xt_taps,
                    preferred_element_type=jnp.float32)            # (hidden, HW)
        h = jnp.maximum(h + h_n + bt_ref[s], 0.0)                  # bias + temb + ReLU

        # conv2 (hidden -> 1): channel contraction on the MXU, then (1, HW) rolls
        g = jnp.dot(w2_ref[...], h, preferred_element_type=jnp.float32)   # (9, HW)
        eps = None
        for ti, (oy, ox) in enumerate(_TAP_OFFSETS):
            off = oy * img_w + ox
            if off == 0:
                term = g[ti:ti + 1]
            else:
                term = pltpu.roll(g[ti:ti + 1], shift=(-off) % hw, axis=1) * mask_ref[ti]
            eps = term if eps is None else eps + term              # (1, HW)

        # DDIM update (eta == 0 -> sigma == 0, no stochastic term)
        c1 = coef_ref[3 * s + 0]
        c2 = coef_ref[3 * s + 1]
        ca = coef_ref[3 * s + 2]                                   # c2 * conv2_bias folded
        x_t = c1 * x_t + c2 * eps + ca

    out_ref[0] = x_t


# ----------------------------------------------------------------------------
# Host-side precomputation (schedule, time embedding, weight / mask tables)
# ----------------------------------------------------------------------------
def _schedule_tables(params, T, steps, beta_start, beta_end):
    """DDIM coefficients and (conv1_bias + time-emb) table, in EXECUTION order."""
    hidden = int(np.asarray(params["b1"]).shape[0])

    beta = np.linspace(beta_start, beta_end, T).astype(np.float64)
    alpha = 1.0 - beta
    alpha_bar = np.cumprod(alpha)

    a = T // steps
    time_steps = np.arange(0, T, a) + 1                            # matches the PyTorch module
    time_steps_prev = np.concatenate([[0], time_steps[:-1]])

    c1 = np.empty(steps, np.float64)
    c2 = np.empty(steps, np.float64)
    ts = np.empty(steps, np.int64)
    for s, i in enumerate(reversed(range(steps))):                 # loop runs i = steps-1 .. 0
        t, pt = int(time_steps[i]), int(time_steps_prev[i])
        at, atp = alpha_bar[t], alpha_bar[pt]
        # eta = 0  ->  sigma = 0
        c1[s] = np.sqrt(atp / at)
        c2[s] = np.sqrt(1.0 - atp) - np.sqrt(atp * (1.0 - at) / at)
        ts[s] = t

    # sinusoidal time embedding -> linear projection, folded with conv1 bias
    half = hidden // 2
    freqs = np.exp(-np.log(10000.0) * np.arange(half) / half)
    ang = ts[:, None] * freqs[None, :]
    feat = np.concatenate([np.sin(ang), np.cos(ang)], axis=1).astype(np.float32)
    temb = feat @ np.asarray(params["w_time"], np.float32) + np.asarray(params["b_time"], np.float32)
    bt = (temb + np.asarray(params["b1"], np.float32))[:, :, None]        # (steps, hidden, 1)

    b2 = float(np.asarray(params["b2"], np.float32).reshape(-1)[0])
    coefs = np.stack([c1, c2, c2 * b2], axis=1).astype(np.float32)        # (steps, 3)
    return coefs, bt


def _model_tables(params):
    hidden = params["b1"].shape[0]
    w1 = jnp.asarray(params["w1"], jnp.float32).reshape(9, 2, hidden)
    w1_xt = jnp.transpose(w1[:, 0, :]).astype(jnp.bfloat16)               # (hidden, 9)
    w1_xn = jnp.transpose(w1[:, 1, :]).astype(jnp.bfloat16)               # (hidden, 9)
    w2 = jnp.asarray(params["w2"], jnp.float32).reshape(9, hidden)        # (9, hidden)
    return w1_xt, w1_xn, w2


def _conv_masks(H, W):
    """mask[tap, 0, p] = 1 iff pixel p has an in-bounds neighbor at that tap offset."""
    m = np.zeros((9, 1, H * W), np.float32)
    yy, xx = np.meshgrid(np.arange(H), np.arange(W), indexing="ij")
    for ti, (oy, ox) in enumerate(_TAP_OFFSETS):
        ok = (yy + oy >= 0) & (yy + oy < H) & (xx + ox >= 0) & (xx + ox < W)
        m[ti, 0] = ok.reshape(-1).astype(np.float32)
    return m


# ----------------------------------------------------------------------------
# Jitted sampler: single pallas_call for the full loop + tiny quantize epilogue
# ----------------------------------------------------------------------------
@jax.jit
def _ddim_sample_jit(coefs, bt, w1_xt, w1_xn, w2, masks, x_n_nchw, x_init_flat):
    B = x_n_nchw.shape[0]
    H = x_n_nchw.shape[-1]
    hw = H * H
    steps, hidden = bt.shape[0], bt.shape[1]

    x_n_flat = x_n_nchw.astype(jnp.float32).reshape(B, 1, hw)      # C == 1 -> plain reshape

    kernel = functools.partial(_fused_ddim_kernel, img_w=H, hw=hw, steps=steps)
    x0 = pl.pallas_call(
        kernel,
        out_shape=jax.ShapeDtypeStruct((B, 1, hw), jnp.float32),
        grid=(B,),
        in_specs=[
            pl.BlockSpec(memory_space=pltpu.MemorySpace.SMEM),             # coefs (steps*3,)
            pl.BlockSpec((steps, hidden, 1), lambda b: (0, 0, 0)),         # bias + temb, resident
            pl.BlockSpec((hidden, 9), lambda b: (0, 0)),                   # conv1 x_t weights
            pl.BlockSpec((hidden, 9), lambda b: (0, 0)),                   # conv1 x_n weights
            pl.BlockSpec((9, hidden), lambda b: (0, 0)),                   # conv2 weights
            pl.BlockSpec((9, 1, hw), lambda b: (0, 0, 0)),                 # padding masks
            pl.BlockSpec((1, 1, hw), lambda b: (b, 0, 0)),                 # x_n (conditioning)
            pl.BlockSpec((1, 1, hw), lambda b: (b, 0, 0)),                 # x_T (initial noise)
        ],
        out_specs=pl.BlockSpec((1, 1, hw), lambda b: (b, 0, 0)),           # x_0
        compiler_params=pltpu.CompilerParams(
            dimension_semantics=("parallel",)),
    )(coefs, bt, w1_xt, w1_xn, w2, masks, x_n_flat, x_init_flat)

    # clamp == 1 path of the reference module: clamp to [0,1], scale to uint8
    img = jnp.clip(x0, 0.0, 1.0)
    img = (img * 255.0).astype(jnp.uint8).reshape(B, 1, H, H)              # NCHW, like PyTorch
    return img, x0


def diffusion_forward(params, x_n_nchw, *, T, steps, img_size,
                      beta_start=1e-4, beta_end=0.02, key=None, x_init=None):
    """Diffusion.forward with defaults (sample='ddim', eta=0, method='linear', clamp=1).

    Returns (uint8 NCHW image, float32 x_0 flattened to (B, 1, H*W))."""
    B = x_n_nchw.shape[0]
    if x_init is None:
        if key is None:
            key = jax.random.PRNGKey(0)
        x_init = jax.random.normal(key, (B, 1, img_size * img_size), jnp.float32)

    coefs, bt = _schedule_tables(params, T, steps, beta_start, beta_end)
    w1_xt, w1_xn, w2 = _model_tables(params)
    masks = jnp.asarray(_conv_masks(img_size, img_size))

    return _ddim_sample_jit(jnp.asarray(coefs.reshape(-1)), jnp.asarray(bt),
                            w1_xt, w1_xn, w2, masks,
                            jnp.asarray(x_n_nchw, jnp.float32), x_init)


# ----------------------------------------------------------------------------
# Pure-JAX (non-Pallas) reference of the same sampler, for a numerical check
# ----------------------------------------------------------------------------
def _im2col_3x3(x):
    """x: (B, H, W, C) -> (B, H*W, 9*C) with SAME zero padding, (tap, cin) order."""
    B, H, W, C = x.shape
    xp = jnp.pad(x, ((0, 0), (1, 1), (1, 1), (0, 0)))
    cols = [xp[:, dy:dy + H, dx:dx + W, :] for dy in range(3) for dx in range(3)]
    p = jnp.stack(cols, axis=3)                                    # (B, H, W, 9, C)
    return p.reshape(B, H * W, 9 * C)


def _reference_x0(params, x_n_nchw, x_init_flat, *, T, steps, beta_start, beta_end):
    coefs, bt = _schedule_tables(params, T, steps, beta_start, beta_end)
    B = x_n_nchw.shape[0]
    H = W = x_n_nchw.shape[-1]
    hidden = params["b1"].shape[0]

    x_n = jnp.asarray(x_n_nchw, jnp.float32).reshape(B, H, W, 1)
    x_t = jnp.asarray(x_init_flat, jnp.float32).reshape(B, H, W, 1)
    w1m = jnp.asarray(params["w1"], jnp.float32).reshape(9 * 2, hidden).astype(jnp.bfloat16)
    w2v = jnp.asarray(params["w2"], jnp.float32).reshape(9 * hidden)
    b2 = float(np.asarray(params["b2"], np.float32).reshape(-1)[0])

    for s in range(steps):
        x_in = jnp.concatenate([x_t, x_n], axis=-1)                # (B, H, W, 2)
        p1 = _im2col_3x3(x_in)                                     # (B, HW, 18)
        h = jnp.dot(p1.astype(jnp.bfloat16), w1m,
                    preferred_element_type=jnp.float32)            # (B, HW, hidden)
        h = jnp.maximum(h + jnp.asarray(bt[s]).reshape(1, 1, hidden), 0.0)
        h = h.reshape(B, H, W, hidden)
        p2 = _im2col_3x3(h)                                        # (B, HW, 9*hidden)
        eps = jnp.sum(p2 * w2v[None, None, :], axis=-1) + b2       # (B, HW)
        c1, c2 = float(coefs[s, 0]), float(coefs[s, 1])
        x_t = c1 * x_t + c2 * eps.reshape(B, H, W, 1)              # eta = 0 -> no noise term
    return x_t.reshape(B, H * W)


# ----------------------------------------------------------------------------
# Deterministic parameter init for the synthetic denoising model
# ----------------------------------------------------------------------------
def init_params(key, hidden=16):
    k1, k2, k3 = jax.random.split(key, 3)
    return {
        "w1": 0.1 * jax.random.normal(k1, (3, 3, 2, hidden), jnp.float32),
        "b1": jnp.zeros((hidden,), jnp.float32),
        "w2": 0.1 * jax.random.normal(k2, (3, 3, hidden, 1), jnp.float32),
        "b2": jnp.zeros((1,), jnp.float32),
        "w_time": 0.1 * jax.random.normal(k3, (hidden, hidden), jnp.float32),
        "b_time": jnp.zeros((hidden,), jnp.float32),
    }


if __name__ == "__main__":
    B, C, IMG = 2, 1, 16
    T, STEPS, HIDDEN = 40, 8, 16

    root = jax.random.PRNGKey(0)
    k_params, k_input, k_sample = jax.random.split(root, 3)

    params = init_params(k_params, hidden=HIDDEN)
    x_n = jax.random.normal(k_input, (B, C, IMG, IMG), jnp.float32)        # NCHW like PyTorch
    x_init = jax.random.normal(k_sample, (B, 1, IMG * IMG), jnp.float32)   # x_T noise

    img, x0 = diffusion_forward(params, x_n, T=T, steps=STEPS, img_size=IMG,
                                x_init=x_init)
    img = jax.block_until_ready(img)
    assert img.shape == (B, 1, IMG, IMG) and img.dtype == jnp.uint8

    # numerical check of the fused kernel against a pure-JAX reference sampler
    ref_x0 = _reference_x0(params, x_n, x_init, T=T, steps=STEPS,
                           beta_start=1e-4, beta_end=0.02)
    np.testing.assert_allclose(np.asarray(x0).reshape(B, -1),
                               np.asarray(ref_x0).reshape(B, -1),
                               rtol=2e-3, atol=2e-3)

    print("KERNEL_OK")
</pallas_src>

<mosaic_0001>
module attributes {stable_mosaic.version = 11 : i64} {
  func.func @_fused_ddim_kernel(%arg0: i32, %arg1: memref<24xf32, #tpu.memory_space<smem>>, %arg2: memref<8x16x1xf32, #tpu.memory_space<vmem>>, %arg3: memref<16x9xbf16, #tpu.memory_space<vmem>>, %arg4: memref<16x9xbf16, #tpu.memory_space<vmem>>, %arg5: memref<9x16xf32, #tpu.memory_space<vmem>>, %arg6: memref<9x1x256xf32, #tpu.memory_space<vmem>>, %arg7: memref<1x1x256xf32, #tpu.memory_space<vmem>>, %arg8: memref<1x1x256xf32, #tpu.memory_space<vmem>>, %arg9: memref<1x1x256xf32, #tpu.memory_space<vmem>>) attributes {dimension_semantics = [#tpu.dimension_semantics<parallel>], iteration_bounds = array<i64: 2>, scalar_prefetch = 0 : i64, scratch_operands = 0 : i64, tpu.core_type = #tpu.core_type<tc>, window_params = [{transform_indices = @transform_0, window_bounds = array<i64: 24>}, {pipeline_mode = #tpu.pipeline_mode<synchronous>, transform_indices = @transform_1, window_bounds = array<i64: 8, 16, 1>}, {pipeline_mode = #tpu.pipeline_mode<synchronous>, transform_indices = @transform_2, window_bounds = array<i64: 16, 9>}, {pipeline_mode = #tpu.pipeline_mode<synchronous>, transform_indices = @transform_3, window_bounds = array<i64: 16, 9>}, {pipeline_mode = #tpu.pipeline_mode<synchronous>, transform_indices = @transform_4, window_bounds = array<i64: 9, 16>}, {pipeline_mode = #tpu.pipeline_mode<synchronous>, transform_indices = @transform_5, window_bounds = array<i64: 9, 1, 256>}, {transform_indices = @transform_6, window_bounds = array<i64: 1, 1, 256>}, {transform_indices = @transform_7, window_bounds = array<i64: 1, 1, 256>}, {transform_indices = @transform_8, window_bounds = array<i64: 1, 1, 256>}]} {
    %c0 = arith.constant 0 : index
    %c0_0 = arith.constant 0 : index
    %c0_1 = arith.constant 0 : index
    %0 = vector.load %arg7[%c0, %c0_0, %c0_1] : memref<1x1x256xf32, #tpu.memory_space<vmem>>, vector<1x1x256xf32>
    %1 = vector.shape_cast %0 : vector<1x1x256xf32> to vector<1x256xf32>
    %c0_2 = arith.constant 0 : index
    %c0_3 = arith.constant 0 : index
    %2 = vector.load %arg4[%c0_2, %c0_3] : memref<16x9xbf16, #tpu.memory_space<vmem>>, vector<16x9xbf16>
    %c17_i32 = arith.constant 17 : i32
    %3 = tpu.dynamic_rotate %1 by %c17_i32 dim 1 : vector<1x256xf32>, i32 -> vector<1x256xf32>
    %c0_4 = arith.constant 0 : index
    %c0_5 = arith.constant 0 : index
    %c0_6 = arith.constant 0 : index
    %4 = vector.load %arg6[%c0_4, %c0_5, %c0_6] : memref<9x1x256xf32, #tpu.memory_space<vmem>>, vector<1x1x256xf32>
    %5 = vector.shape_cast %4 : vector<1x1x256xf32> to vector<1x256xf32>
    %6 = arith.mulf %3, %5 : vector<1x256xf32>
    %c16_i32 = arith.constant 16 : i32
    %7 = tpu.dynamic_rotate %1 by %c16_i32 dim 1 : vector<1x256xf32>, i32 -> vector<1x256xf32>
    %c1 = arith.constant 1 : index
    %c0_7 = arith.constant 0 : index
    %c0_8 = arith.constant 0 : index
    %8 = vector.load %arg6[%c1, %c0_7, %c0_8] : memref<9x1x256xf32, #tpu.memory_space<vmem>>, vector<1x1x256xf32>
    %9 = vector.shape_cast %8 : vector<1x1x256xf32> to vector<1x256xf32>
    %10 = arith.mulf %7, %9 : vector<1x256xf32>
    %c15_i32 = arith.constant 15 : i32
    %11 = tpu.dynamic_rotate %1 by %c15_i32 dim 1 : vector<1x256xf32>, i32 -> vector<1x256xf32>
    %c2 = arith.constant 2 : index
    %c0_9 = arith.constant 0 : index
    %c0_10 = arith.constant 0 : index
    %12 = vector.load %arg6[%c2, %c0_9, %c0_10] : memref<9x1x256xf32, #tpu.memory_space<vmem>>, vector<1x1x256xf32>
    %13 = vector.shape_cast %12 : vector<1x1x256xf32> to vector<1x256xf32>
    %14 = arith.mulf %11, %13 : vector<1x256xf32>
    %c1_i32 = arith.constant 1 : i32
    %15 = tpu.dynamic_rotate %1 by %c1_i32 dim 1 : vector<1x256xf32>, i32 -> vector<1x256xf32>
    %c3 = arith.constant 3 : index
    %c0_11 = arith.constant 0 : index
    %c0_12 = arith.constant 0 : index
    %16 = vector.load %arg6[%c3, %c0_11, %c0_12] : memref<9x1x256xf32, #tpu.memory_space<vmem>>, vector<1x1x256xf32>
    %17 = vector.shape_cast %16 : vector<1x1x256xf32> to vector<1x256xf32>
    %18 = arith.mulf %15, %17 : vector<1x256xf32>
    %c255_i32 = arith.constant 255 : i32
    %19 = tpu.dynamic_rotate %1 by %c255_i32 dim 1 : vector<1x256xf32>, i32 -> vector<1x256xf32>
    %c5 = arith.constant 5 : index
    %c0_13 = arith.constant 0 : index
    %c0_14 = arith.constant 0 : index
    %20 = vector.load %arg6[%c5, %c0_13, %c0_14] : memref<9x1x256xf32, #tpu.memory_space<vmem>>, vector<1x1x256xf32>
    %21 = vector.shape_cast %20 : vector<1x1x256xf32> to vector<1x256xf32>
    %22 = arith.mulf %19, %21 : vector<1x256xf32>
    %c241_i32 = arith.constant 241 : i32
    %23 = tpu.dynamic_rotate %1 by %c241_i32 dim 1 : vector<1x256xf32>, i32 -> vector<1x256xf32>
    %c6 = arith.constant 6 : index
    %c0_15 = arith.constant 0 : index
    %c0_16 = arith.constant 0 : index
    %24 = vector.load %arg6[%c6, %c0_15, %c0_16] : memref<9x1x256xf32, #tpu.memory_space<vmem>>, vector<1x1x256xf32>
    %25 = vector.shape_cast %24 : vector<1x1x256xf32> to vector<1x256xf32>
    %26 = arith.mulf %23, %25 : vector<1x256xf32>
    %c240_i32 = arith.constant 240 : i32
    %27 = tpu.dynamic_rotate %1 by %c240_i32 dim 1 : vector<1x256xf32>, i32 -> vector<1x256xf32>
    %c7 = arith.constant 7 : index
    %c0_17 = arith.constant 0 : index
    %c0_18 = arith.constant 0 : index
    %28 = vector.load %arg6[%c7, %c0_17, %c0_18] : memref<9x1x256xf32, #tpu.memory_space<vmem>>, vector<1x1x256xf32>
    %29 = vector.shape_cast %28 : vector<1x1x256xf32> to vector<1x256xf32>
    %30 = arith.mulf %27, %29 : vector<1x256xf32>
    %c239_i32 = arith.constant 239 : i32
    %31 = tpu.dynamic_rotate %1 by %c239_i32 dim 1 : vector<1x256xf32>, i32 -> vector<1x256xf32>
    %c8 = arith.constant 8 : index
    %c0_19 = arith.constant 0 : index
    %c0_20 = arith.constant 0 : index
    %32 = vector.load %arg6[%c8, %c0_19, %c0_20] : memref<9x1x256xf32, #tpu.memory_space<vmem>>, vector<1x1x256xf32>
    %33 = vector.shape_cast %32 : vector<1x1x256xf32> to vector<1x256xf32>
    %34 = arith.mulf %31, %33 : vector<1x256xf32>
    %35 = tpu.concatenate %6, %10, %14, %18, %1, %22, %26, %30, %34 in 0 : vector<1x256xf32>, vector<1x256xf32>, vector<1x256xf32>, vector<1x256xf32>, vector<1x256xf32>, vector<1x256xf32>, vector<1x256xf32>, vector<1x256xf32>, vector<1x256xf32> -> vector<9x256xf32>
    %36 = arith.truncf %35 : vector<9x256xf32> to vector<9x256xbf16>
    %cst = arith.constant dense<0.000000e+00> : vector<16x256xf32>
    %37 = tpu.matmul %2, %36, %cst {dimension_numbers = #tpu.dot_dimension_numbers<[1], [0], [0], [1], [0, 0, 1, 1], [], []>} : vector<16x9xbf16>, vector<9x256xbf16>, vector<16x256xf32> -> vector<16x256xf32>
    %c0_21 = arith.constant 0 : index
    %c0_22 = arith.constant 0 : index
    %c0_23 = arith.constant 0 : index
    %38 = vector.load %arg8[%c0_21, %c0_22, %c0_23] : memref<1x1x256xf32, #tpu.memory_space<vmem>>, vector<1x1x256xf32>
    %39 = vector.shape_cast %38 : vector<1x1x256xf32> to vector<1x256xf32>
    %c17_i32_24 = arith.constant 17 : i32
    %40 = tpu.dynamic_rotate %39 by %c17_i32_24 dim 1 : vector<1x256xf32>, i32 -> vector<1x256xf32>
    %c0_25 = arith.constant 0 : index
    %c0_26 = arith.constant 0 : index
    %c0_27 = arith.constant 0 : index
    %41 = vector.load %arg6[%c0_25, %c0_26, %c0_27] : memref<9x1x256xf32, #tpu.memory_space<vmem>>, vector<1x1x256xf32>
    %42 = vector.shape_cast %41 : vector<1x1x256xf32> to vector<1x256xf32>
    %43 = arith.mulf %40, %42 : vector<1x256xf32>
    %c16_i32_28 = arith.constant 16 : i32
    %44 = tpu.dynamic_rotate %39 by %c16_i32_28 dim 1 : vector<1x256xf32>, i32 -> vector<1x256xf32>
    %c1_29 = arith.constant 1 : index
    %c0_30 = arith.constant 0 : index
    %c0_31 = arith.constant 0 : index
    %45 = vector.load %arg6[%c1_29, %c0_30, %c0_31] : memref<9x1x256xf32, #tpu.memory_space<vmem>>, vector<1x1x256xf32>
    %46 = vector.shape_cast %45 : vector<1x1x256xf32> to vector<1x256xf32>
    %47 = arith.mulf %44, %46 : vector<1x256xf32>
    %c15_i32_32 = arith.constant 15 : i32
    %48 = tpu.dynamic_rotate %39 by %c15_i32_32 dim 1 : vector<1x256xf32>, i32 -> vector<1x256xf32>
    %c2_33 = arith.constant 2 : index
    %c0_34 = arith.constant 0 : index
    %c0_35 = arith.constant 0 : index
    %49 = vector.load %arg6[%c2_33, %c0_34, %c0_35] : memref<9x1x256xf32, #tpu.memory_space<vmem>>, vector<1x1x256xf32>
    %50 = vector.shape_cast %49 : vector<1x1x256xf32> to vector<1x256xf32>
    %51 = arith.mulf %48, %50 : vector<1x256xf32>
    %c1_i32_36 = arith.constant 1 : i32
    %52 = tpu.dynamic_rotate %39 by %c1_i32_36 dim 1 : vector<1x256xf32>, i32 -> vector<1x256xf32>
    %c3_37 = arith.constant 3 : index
    %c0_38 = arith.constant 0 : index
    %c0_39 = arith.constant 0 : index
    %53 = vector.load %arg6[%c3_37, %c0_38, %c0_39] : memref<9x1x256xf32, #tpu.memory_space<vmem>>, vector<1x1x256xf32>
    %54 = vector.shape_cast %53 : vector<1x1x256xf32> to vector<1x256xf32>
    %55 = arith.mulf %52, %54 : vector<1x256xf32>
    %c255_i32_40 = arith.constant 255 : i32
    %56 = tpu.dynamic_rotate %39 by %c255_i32_40 dim 1 : vector<1x256xf32>, i32 -> vector<1x256xf32>
    %c5_41 = arith.constant 5 : index
    %c0_42 = arith.constant 0 : index
    %c0_43 = arith.constant 0 : index
    %57 = vector.load %arg6[%c5_41, %c0_42, %c0_43] : memref<9x1x256xf32, #tpu.memory_space<vmem>>, vector<1x1x256xf32>
    %58 = vector.shape_cast %57 : vector<1x1x256xf32> to vector<1x256xf32>
    %59 = arith.mulf %56, %58 : vector<1x256xf32>
    %c241_i32_44 = arith.constant 241 : i32
    %60 = tpu.dynamic_rotate %39 by %c241_i32_44 dim 1 : vector<1x256xf32>, i32 -> vector<1x256xf32>
    %c6_45 = arith.constant 6 : index
    %c0_46 = arith.constant 0 : index
    %c0_47 = arith.constant 0 : index
    %61 = vector.load %arg6[%c6_45, %c0_46, %c0_47] : memref<9x1x256xf32, #tpu.memory_space<vmem>>, vector<1x1x256xf32>
    %62 = vector.shape_cast %61 : vector<1x1x256xf32> to vector<1x256xf32>
    %63 = arith.mulf %60, %62 : vector<1x256xf32>
    %c240_i32_48 = arith.constant 240 : i32
    %64 = tpu.dynamic_rotate %39 by %c240_i32_48 dim 1 : vector<1x256xf32>, i32 -> vector<1x256xf32>
    %c7_49 = arith.constant 7 : index
    %c0_50 = arith.constant 0 : index
    %c0_51 = arith.constant 0 : index
    %65 = vector.load %arg6[%c7_49, %c0_50, %c0_51] : memref<9x1x256xf32, #tpu.memory_space<vmem>>, vector<1x1x256xf32>
    %66 = vector.shape_cast %65 : vector<1x1x256xf32> to vector<1x256xf32>
    %67 = arith.mulf %64, %66 : vector<1x256xf32>
    %c239_i32_52 = arith.constant 239 : i32
    %68 = tpu.dynamic_rotate %39 by %c239_i32_52 dim 1 : vector<1x256xf32>, i32 -> vector<1x256xf32>
    %c8_53 = arith.constant 8 : index
    %c0_54 = arith.constant 0 : index
    %c0_55 = arith.constant 0 : index
    %69 = vector.load %arg6[%c8_53, %c0_54, %c0_55] : memref<9x1x256xf32, #tpu.memory_space<vmem>>, vector<1x1x256xf32>
    %70 = vector.shape_cast %69 : vector<1x1x256xf32> to vector<1x256xf32>
    %71 = arith.mulf %68, %70 : vector<1x256xf32>
    %72 = tpu.concatenate %43, %47, %51, %55, %39, %59, %63, %67, %71 in 0 : vector<1x256xf32>, vector<1x256xf32>, vector<1x256xf32>, vector<1x256xf32>, vector<1x256xf32>, vector<1x256xf32>, vector<1x256xf32>, vector<1x256xf32>, vector<1x256xf32> -> vector<9x256xf32>
    %73 = arith.truncf %72 : vector<9x256xf32> to vector<9x256xbf16>
    %c0_56 = arith.constant 0 : index
    %c0_57 = arith.constant 0 : index
    %74 = vector.load %arg3[%c0_56, %c0_57] : memref<16x9xbf16, #tpu.memory_space<vmem>>, vector<16x9xbf16>
    %cst_58 = arith.constant dense<0.000000e+00> : vector<16x256xf32>
    %75 = tpu.matmul %74, %73, %cst_58 {dimension_numbers = #tpu.dot_dimension_numbers<[1], [0], [0], [1], [0, 0, 1, 1], [], []>} : vector<16x9xbf16>, vector<9x256xbf16>, vector<16x256xf32> -> vector<16x256xf32>
    %76 = arith.addf %75, %37 : vector<16x256xf32>
    %c0_59 = arith.constant 0 : index
    %c0_60 = arith.constant 0 : index
    %c0_61 = arith.constant 0 : index
    %77 = vector.load %arg2[%c0_59, %c0_60, %c0_61] : memref<8x16x1xf32, #tpu.memory_space<vmem>>, vector<1x16x1xf32>
    %78 = vector.shape_cast %77 : vector<1x16x1xf32> to vector<16x1xf32>
    %79 = vector.broadcast %78 : vector<16x1xf32> to vector<16x256xf32>
    %80 = arith.addf %76, %79 : vector<16x256xf32>
    %cst_62 = arith.constant 0.000000e+00 : f32
    %81 = vector.broadcast %cst_62 : f32 to vector<16x256xf32>
    %82 = arith.maximumf %80, %81 : vector<16x256xf32>
    %c0_63 = arith.constant 0 : index
    %c0_64 = arith.constant 0 : index
    %83 = vector.load %arg5[%c0_63, %c0_64] : memref<9x16xf32, #tpu.memory_space<vmem>>, vector<9x16xf32>
    %cst_65 = arith.constant dense<0.000000e+00> : vector<9x256xf32>
    %84 = tpu.matmul %83, %82, %cst_65 {dimension_numbers = #tpu.dot_dimension_numbers<[1], [0], [0], [1], [0, 0, 1, 1], [], []>} : vector<9x16xf32>, vector<16x256xf32>, vector<9x256xf32> -> vector<9x256xf32>
    %85 = vector.extract_strided_slice %84 {offsets = [0, 0], sizes = [1, 256], strides = [1, 1]} : vector<9x256xf32> to vector<1x256xf32>
    %c17_i32_66 = arith.constant 17 : i32
    %86 = tpu.dynamic_rotate %85 by %c17_i32_66 dim 1 : vector<1x256xf32>, i32 -> vector<1x256xf32>
    %c0_67 = arith.constant 0 : index
    %c0_68 = arith.constant 0 : index
    %c0_69 = arith.constant 0 : index
    %87 = vector.load %arg6[%c0_67, %c0_68, %c0_69] : memref<9x1x256xf32, #tpu.memory_space<vmem>>, vector<1x1x256xf32>
    %88 = vector.shape_cast %87 : vector<1x1x256xf32> to vector<1x256xf32>
    %89 = arith.mulf %86, %88 : vector<1x256xf32>
    %90 = vector.extract_strided_slice %84 {offsets = [1, 0], sizes = [1, 256], strides = [1, 1]} : vector<9x256xf32> to vector<1x256xf32>
    %c16_i32_70 = arith.constant 16 : i32
    %91 = tpu.dynamic_rotate %90 by %c16_i32_70 dim 1 : vector<1x256xf32>, i32 -> vector<1x256xf32>
    %c1_71 = arith.constant 1 : index
    %c0_72 = arith.constant 0 : index
    %c0_73 = arith.constant 0 : index
    %92 = vector.load %arg6[%c1_71, %c0_72, %c0_73] : memref<9x1x256xf32, #tpu.memory_space<vmem>>, vector<1x1x256xf32>
    %93 = vector.shape_cast %92 : vector<1x1x256xf32> to vector<1x256xf32>
    %94 = arith.mulf %91, %93 : vector<1x256xf32>
    %95 = arith.addf %89, %94 : vector<1x256xf32>
    %96 = vector.extract_strided_slice %84 {offsets = [2, 0], sizes = [1, 256], strides = [1, 1]} : vector<9x256xf32> to vector<1x256xf32>
    %c15_i32_74 = arith.constant 15 : i32
    %97 = tpu.dynamic_rotate %96 by %c15_i32_74 dim 1 : vector<1x256xf32>, i32 -> vector<1x256xf32>
    %c2_75 = arith.constant 2 : index
    %c0_76 = arith.constant 0 : index
    %c0_77 = arith.constant 0 : index
    %98 = vector.load %arg6[%c2_75, %c0_76, %c0_77] : memref<9x1x256xf32, #tpu.memory_space<vmem>>, vector<1x1x256xf32>
    %99 = vector.shape_cast %98 : vector<1x1x256xf32> to vector<1x256xf32>
    %100 = arith.mulf %97, %99 : vector<1x256xf32>
    %101 = arith.addf %95, %100 : vector<1x256xf32>
    %102 = vector.extract_strided_slice %84 {offsets = [3, 0], sizes = [1, 256], strides = [1, 1]} : vector<9x256xf32> to vector<1x256xf32>
    %c1_i32_78 = arith.constant 1 : i32
    %103 = tpu.dynamic_rotate %102 by %c1_i32_78 dim 1 : vector<1x256xf32>, i32 -> vector<1x256xf32>
    %c3_79 = arith.constant 3 : index
    %c0_80 = arith.constant 0 : index
    %c0_81 = arith.constant 0 : index
    %104 = vector.load %arg6[%c3_79, %c0_80, %c0_81] : memref<9x1x256xf32, #tpu.memory_space<vmem>>, vector<1x1x256xf32>
    %105 = vector.shape_cast %104 : vector<1x1x256xf32> to vector<1x256xf32>
    %106 = arith.mulf %103, %105 : vector<1x256xf32>
    %107 = arith.addf %101, %106 : vector<1x256xf32>
    %108 = vector.extract_strided_slice %84 {offsets = [4, 0], sizes = [1, 256], strides = [1, 1]} : vector<9x256xf32> to vector<1x256xf32>
    %109 = arith.addf %107, %108 : vector<1x256xf32>
    %110 = vector.extract_strided_slice %84 {offsets = [5, 0], sizes = [1, 256], strides = [1, 1]} : vector<9x256xf32> to vector<1x256xf32>
    %c255_i32_82 = arith.constant 255 : i32
    %111 = tpu.dynamic_rotate %110 by %c255_i32_82 dim 1 : vector<1x256xf32>, i32 -> vector<1x256xf32>
    %c5_83 = arith.constant 5 : index
    %c0_84 = arith.constant 0 : index
    %c0_85 = arith.constant 0 : index
    %112 = vector.load %arg6[%c5_83, %c0_84, %c0_85] : memref<9x1x256xf32, #tpu.memory_space<vmem>>, vector<1x1x256xf32>
    %113 = vector.shape_cast %112 : vector<1x1x256xf32> to vector<1x256xf32>
    %114 = arith.mulf %111, %113 : vector<1x256xf32>
    %115 = arith.addf %109, %114 : vector<1x256xf32>
    %116 = vector.extract_strided_slice %84 {offsets = [6, 0], sizes = [1, 256], strides = [1, 1]} : vector<9x256xf32> to vector<1x256xf32>
    %c241_i32_86 = arith.constant 241 : i32
    %117 = tpu.dynamic_rotate %116 by %c241_i32_86 dim 1 : vector<1x256xf32>, i32 -> vector<1x256xf32>
    %c6_87 = arith.constant 6 : index
    %c0_88 = arith.constant 0 : index
    %c0_89 = arith.constant 0 : index
    %118 = vector.load %arg6[%c6_87, %c0_88, %c0_89] : memref<9x1x256xf32, #tpu.memory_space<vmem>>, vector<1x1x256xf32>
    %119 = vector.shape_cast %118 : vector<1x1x256xf32> to vector<1x256xf32>
    %120 = arith.mulf %117, %119 : vector<1x256xf32>
    %121 = arith.addf %115, %120 : vector<1x256xf32>
    %122 = vector.extract_strided_slice %84 {offsets = [7, 0], sizes = [1, 256], strides = [1, 1]} : vector<9x256xf32> to vector<1x256xf32>
    %c240_i32_90 = arith.constant 240 : i32
    %123 = tpu.dynamic_rotate %122 by %c240_i32_90 dim 1 : vector<1x256xf32>, i32 -> vector<1x256xf32>
    %c7_91 = arith.constant 7 : index
    %c0_92 = arith.constant 0 : index
    %c0_93 = arith.constant 0 : index
    %124 = vector.load %arg6[%c7_91, %c0_92, %c0_93] : memref<9x1x256xf32, #tpu.memory_space<vmem>>, vector<1x1x256xf32>
    %125 = vector.shape_cast %124 : vector<1x1x256xf32> to vector<1x256xf32>
    %126 = arith.mulf %123, %125 : vector<1x256xf32>
    %127 = arith.addf %121, %126 : vector<1x256xf32>
    %128 = vector.extract_strided_slice %84 {offsets = [8, 0], sizes = [1, 256], strides = [1, 1]} : vector<9x256xf32> to vector<1x256xf32>
    %c239_i32_94 = arith.constant 239 : i32
    %129 = tpu.dynamic_rotate %128 by %c239_i32_94 dim 1 : vector<1x256xf32>, i32 -> vector<1x256xf32>
    %c8_95 = arith.constant 8 : index
    %c0_96 = arith.constant 0 : index
    %c0_97 = arith.constant 0 : index
    %130 = vector.load %arg6[%c8_95, %c0_96, %c0_97] : memref<9x1x256xf32, #tpu.memory_space<vmem>>, vector<1x1x256xf32>
    %131 = vector.shape_cast %130 : vector<1x1x256xf32> to vector<1x256xf32>
    %132 = arith.mulf %129, %131 : vector<1x256xf32>
    %133 = arith.addf %127, %132 : vector<1x256xf32>
    %c0_98 = arith.constant 0 : index
    %134 = memref.load %arg1[%c0_98] : memref<24xf32, #tpu.memory_space<smem>>
    %c1_99 = arith.constant 1 : index
    %135 = memref.load %arg1[%c1_99] : memref<24xf32, #tpu.memory_space<smem>>
    %c2_100 = arith.constant 2 : index
    %136 = memref.load %arg1[%c2_100] : memref<24xf32, #tpu.memory_space<smem>>
    %137 = vector.broadcast %134 : f32 to vector<1x256xf32>
    %138 = arith.mulf %137, %39 : vector<1x256xf32>
    %139 = vector.broadcast %135 : f32 to vector<1x256xf32>
    %140 = arith.mulf %139, %133 : vector<1x256xf32>
    %141 = arith.addf %138, %140 : vector<1x256xf32>
    %142 = vector.broadcast %136 : f32 to vector<1x256xf32>
    %143 = arith.addf %141, %142 : vector<1x256xf32>
    %c17_i32_101 = arith.constant 17 : i32
    %144 = tpu.dynamic_rotate %143 by %c17_i32_101 dim 1 : vector<1x256xf32>, i32 -> vector<1x256xf32>
    %c0_102 = arith.constant 0 : index
    %c0_103 = arith.constant 0 : index
    %c0_104 = arith.constant 0 : index
    %145 = vector.load %arg6[%c0_102, %c0_103, %c0_104] : memref<9x1x256xf32, #tpu.memory_space<vmem>>, vector<1x1x256xf32>
    %146 = vector.shape_cast %145 : vector<1x1x256xf32> to vector<1x256xf32>
    %147 = arith.mulf %144, %146 : vector<1x256xf32>
    %c16_i32_105 = arith.constant 16 : i32
    %148 = tpu.dynamic_rotate %143 by %c16_i32_105 dim 1 : vector<1x256xf32>, i32 -> vector<1x256xf32>
    %c1_106 = arith.constant 1 : index
    %c0_107 = arith.constant 0 : index
    %c0_108 = arith.constant 0 : index
    %149 = vector.load %arg6[%c1_106, %c0_107, %c0_108] : memref<9x1x256xf32, #tpu.memory_space<vmem>>, vector<1x1x256xf32>
    %150 = vector.shape_cast %149 : vector<1x1x256xf32> to vector<1x256xf32>
    %151 = arith.mulf %148, %150 : vector<1x256xf32>
    %c15_i32_109 = arith.constant 15 : i32
    %152 = tpu.dynamic_rotate %143 by %c15_i32_109 dim 1 : vector<1x256xf32>, i32 -> vector<1x256xf32>
    %c2_110 = arith.constant 2 : index
    %c0_111 = arith.constant 0 : index
    %c0_112 = arith.constant 0 : index
    %153 = vector.load %arg6[%c2_110, %c0_111, %c0_112] : memref<9x1x256xf32, #tpu.memory_space<vmem>>, vector<1x1x256xf32>
    %154 = vector.shape_cast %153 : vector<1x1x256xf32> to vector<1x256xf32>
    %155 = arith.mulf %152, %154 : vector<1x256xf32>
    %c1_i32_113 = arith.constant 1 : i32
    %156 = tpu.dynamic_rotate %143 by %c1_i32_113 dim 1 : vector<1x256xf32>, i32 -> vector<1x256xf32>
    %c3_114 = arith.constant 3 : index
    %c0_115 = arith.constant 0 : index
    %c0_116 = arith.constant 0 : index
    %157 = vector.load %arg6[%c3_114, %c0_115, %c0_116] : memref<9x1x256xf32, #tpu.memory_space<vmem>>, vector<1x1x256xf32>
    %158 = vector.shape_cast %157 : vector<1x1x256xf32> to vector<1x256xf32>
    %159 = arith.mulf %156, %158 : vector<1x256xf32>
    %c255_i32_117 = arith.constant 255 : i32
    %160 = tpu.dynamic_rotate %143 by %c255_i32_117 dim 1 : vector<1x256xf32>, i32 -> vector<1x256xf32>
    %c5_118 = arith.constant 5 : index
    %c0_119 = arith.constant 0 : index
    %c0_120 = arith.constant 0 : index
    %161 = vector.load %arg6[%c5_118, %c0_119, %c0_120] : memref<9x1x256xf32, #tpu.memory_space<vmem>>, vector<1x1x256xf32>
    %162 = vector.shape_cast %161 : vector<1x1x256xf32> to vector<1x256xf32>
    %163 = arith.mulf %160, %162 : vector<1x256xf32>
    %c241_i32_121 = arith.constant 241 : i32
    %164 = tpu.dynamic_rotate %143 by %c241_i32_121 dim 1 : vector<1x256xf32>, i32 -> vector<1x256xf32>
    %c6_122 = arith.constant 6 : index
    %c0_123 = arith.constant 0 : index
    %c0_124 = arith.constant 0 : index
    %165 = vector.load %arg6[%c6_122, %c0_123, %c0_124] : memref<9x1x256xf32, #tpu.memory_space<vmem>>, vector<1x1x256xf32>
    %166 = vector.shape_cast %165 : vector<1x1x256xf32> to vector<1x256xf32>
    %167 = arith.mulf %164, %166 : vector<1x256xf32>
    %c240_i32_125 = arith.constant 240 : i32
    %168 = tpu.dynamic_rotate %143 by %c240_i32_125 dim 1 : vector<1x256xf32>, i32 -> vector<1x256xf32>
    %c7_126 = arith.constant 7 : index
    %c0_127 = arith.constant 0 : index
    %c0_128 = arith.constant 0 : index
    %169 = vector.load %arg6[%c7_126, %c0_127, %c0_128] : memref<9x1x256xf32, #tpu.memory_space<vmem>>, vector<1x1x256xf32>
    %170 = vector.shape_cast %169 : vector<1x1x256xf32> to vector<1x256xf32>
    %171 = arith.mulf %168, %170 : vector<1x256xf32>
    %c239_i32_129 = arith.constant 239 : i32
    %172 = tpu.dynamic_rotate %143 by %c239_i32_129 dim 1 : vector<1x256xf32>, i32 -> vector<1x256xf32>
    %c8_130 = arith.constant 8 : index
    %c0_131 = arith.constant 0 : index
    %c0_132 = arith.constant 0 : index
    %173 = vector.load %arg6[%c8_130, %c0_131, %c0_132] : memref<9x1x256xf32, #tpu.memory_space<vmem>>, vector<1x1x256xf32>
    %174 = vector.shape_cast %173 : vector<1x1x256xf32> to vector<1x256xf32>
    %175 = arith.mulf %172, %174 : vector<1x256xf32>
    %176 = tpu.concatenate %147, %151, %155, %159, %143, %163, %167, %171, %175 in 0 : vector<1x256xf32>, vector<1x256xf32>, vector<1x256xf32>, vector<1x256xf32>, vector<1x256xf32>, vector<1x256xf32>, vector<1x256xf32>, vector<1x256xf32>, vector<1x256xf32> -> vector<9x256xf32>
    %177 = arith.truncf %176 : vector<9x256xf32> to vector<9x256xbf16>
    %c0_133 = arith.constant 0 : index
    %c0_134 = arith.constant 0 : index
    %178 = vector.load %arg3[%c0_133, %c0_134] : memref<16x9xbf16, #tpu.memory_space<vmem>>, vector<16x9xbf16>
    %cst_135 = arith.constant dense<0.000000e+00> : vector<16x256xf32>
    %179 = tpu.matmul %178, %177, %cst_135 {dimension_numbers = #tpu.dot_dimension_numbers<[1], [0], [0], [1], [0, 0, 1, 1], [], []>} : vector<16x9xbf16>, vector<9x256xbf16>, vector<16x256xf32> -> vector<16x256xf32>
    %180 = arith.addf %179, %37 : vector<16x256xf32>
    %c1_136 = arith.constant 1 : index
    %c0_137 = arith.constant 0 : index
    %c0_138 = arith.constant 0 : index
    %181 = vector.load %arg2[%c1_136, %c0_137, %c0_138] : memref<8x16x1xf32, #tpu.memory_space<vmem>>, vector<1x16x1xf32>
    %182 = vector.shape_cast %181 : vector<1x16x1xf32> to vector<16x1xf32>
    %183 = vector.broadcast %182 : vector<16x1xf32> to vector<16x256xf32>
    %184 = arith.addf %180, %183 : vector<16x256xf32>
    %cst_139 = arith.constant 0.000000e+00 : f32
    %185 = vector.broadcast %cst_139 : f32 to vector<16x256xf32>
    %186 = arith.maximumf %184, %185 : vector<16x256xf32>
    %c0_140 = arith.constant 0 : index
    %c0_141 = arith.constant 0 : index
    %187 = vector.load %arg5[%c0_140, %c0_141] : memref<9x16xf32, #tpu.memory_space<vmem>>, vector<9x16xf32>
    %cst_142 = arith.constant dense<0.000000e+00> : vector<9x256xf32>
    %188 = tpu.matmul %187, %186, %cst_142 {dimension_numbers = #tpu.dot_dimension_numbers<[1], [0], [0], [1], [0, 0, 1, 1], [], []>} : vector<9x16xf32>, vector<16x256xf32>, vector<9x256xf32> -> vector<9x256xf32>
    %189 = vector.extract_strided_slice %188 {offsets = [0, 0], sizes = [1, 256], strides = [1, 1]} : vector<9x256xf32> to vector<1x256xf32>
    %c17_i32_143 = arith.constant 17 : i32
    %190 = tpu.dynamic_rotate %189 by %c17_i32_143 dim 1 : vector<1x256xf32>, i32 -> vector<1x256xf32>
    %c0_144 = arith.constant 0 : index
    %c0_145 = arith.constant 0 : index
    %c0_146 = arith.constant 0 : index
    %191 = vector.load %arg6[%c0_144, %c0_145, %c0_146] : memref<9x1x256xf32, #tpu.memory_space<vmem>>, vector<1x1x256xf32>
    %192 = vector.shape_cast %191 : vector<1x1x256xf32> to vector<1x256xf32>
    %193 = arith.mulf %190, %192 : vector<1x256xf32>
    %194 = vector.extract_strided_slice %188 {offsets = [1, 0], sizes = [1, 256], strides = [1, 1]} : vector<9x256xf32> to vector<1x256xf32>
    %c16_i32_147 = arith.constant 16 : i32
    %195 = tpu.dynamic_rotate %194 by %c16_i32_147 dim 1 : vector<1x256xf32>, i32 -> vector<1x256xf32>
    %c1_148 = arith.constant 1 : index
    %c0_149 = arith.constant 0 : index
    %c0_150 = arith.constant 0 : index
    %196 = vector.load %arg6[%c1_148, %c0_149, %c0_150] : memref<9x1x256xf32, #tpu.memory_space<vmem>>, vector<1x1x256xf32>
    %197 = vector.shape_cast %196 : vector<1x1x256xf32> to vector<1x256xf32>
    %198 = arith.mulf %195, %197 : vector<1x256xf32>
    %199 = arith.addf %193, %198 : vector<1x256xf32>
    %200 = vector.extract_strided_slice %188 {offsets = [2, 0], sizes = [1, 256], strides = [1, 1]} : vector<9x256xf32> to vector<1x256xf32>
    %c15_i32_151 = arith.constant 15 : i32
    %201 = tpu.dynamic_rotate %200 by %c15_i32_151 dim 1 : vector<1x256xf32>, i32 -> vector<1x256xf32>
    %c2_152 = arith.constant 2 : index
    %c0_153 = arith.constant 0 : index
    %c0_154 = arith.constant 0 : index
    %202 = vector.load %arg6[%c2_152, %c0_153, %c0_154] : memref<9x1x256xf32, #tpu.memory_space<vmem>>, vector<1x1x256xf32>
    %203 = vector.shape_cast %202 : vector<1x1x256xf32> to vector<1x256xf32>
    %204 = arith.mulf %201, %203 : vector<1x256xf32>
    %205 = arith.addf %199, %204 : vector<1x256xf32>
    %206 = vector.extract_strided_slice %188 {offsets = [3, 0], sizes = [1, 256], strides = [1, 1]} : vector<9x256xf32> to vector<1x256xf32>
    %c1_i32_155 = arith.constant 1 : i32
    %207 = tpu.dynamic_rotate %206 by %c1_i32_155 dim 1 : vector<1x256xf32>, i32 -> vector<1x256xf32>
    %c3_156 = arith.constant 3 : index
    %c0_157 = arith.constant 0 : index
    %c0_158 = arith.constant 0 : index
    %208 = vector.load %arg6[%c3_156, %c0_157, %c0_158] : memref<9x1x256xf32, #tpu.memory_space<vmem>>, vector<1x1x256xf32>
    %209 = vector.shape_cast %208 : vector<1x1x256xf32> to vector<1x256xf32>
    %210 = arith.mulf %207, %209 : vector<1x256xf32>
    %211 = arith.addf %205, %210 : vector<1x256xf32>
    %212 = vector.extract_strided_slice %188 {offsets = [4, 0], sizes = [1, 256], strides = [1, 1]} : vector<9x256xf32> to vector<1x256xf32>
    %213 = arith.addf %211, %212 : vector<1x256xf32>
    %214 = vector.extract_strided_slice %188 {offsets = [5, 0], sizes = [1, 256], strides = [1, 1]} : vector<9x256xf32> to vector<1x256xf32>
    %c255_i32_159 = arith.constant 255 : i32
    %215 = tpu.dynamic_rotate %214 by %c255_i32_159 dim 1 : vector<1x256xf32>, i32 -> vector<1x256xf32>
    %c5_160 = arith.constant 5 : index
    %c0_161 = arith.constant 0 : index
    %c0_162 = arith.constant 0 : index
    %216 = vector.load %arg6[%c5_160, %c0_161, %c0_162] : memref<9x1x256xf32, #tpu.memory_space<vmem>>, vector<1x1x256xf32>
    %217 = vector.shape_cast %216 : vector<1x1x256xf32> to vector<1x256xf32>
    %218 = arith.mulf %215, %217 : vector<1x256xf32>
    %219 = arith.addf %213, %218 : vector<1x256xf32>
    %220 = vector.extract_strided_slice %188 {offsets = [6, 0], sizes = [1, 256], strides = [1, 1]} : vector<9x256xf32> to vector<1x256xf32>
    %c241_i32_163 = arith.constant 241 : i32
    %221 = tpu.dynamic_rotate %220 by %c241_i32_163 dim 1 : vector<1x256xf32>, i32 -> vector<1x256xf32>
    %c6_164 = arith.constant 6 : index
    %c0_165 = arith.constant 0 : index
    %c0_166 = arith.constant 0 : index
    %222 = vector.load %arg6[%c6_164, %c0_165, %c0_166] : memref<9x1x256xf32, #tpu.memory_space<vmem>>, vector<1x1x256xf32>
    %223 = vector.shape_cast %222 : vector<1x1x256xf32> to vector<1x256xf32>
    %224 = arith.mulf %221, %223 : vector<1x256xf32>
    %225 = arith.addf %219, %224 : vector<1x256xf32>
    %226 = vector.extract_strided_slice %188 {offsets = [7, 0], sizes = [1, 256], strides = [1, 1]} : vector<9x256xf32> to vector<1x256xf32>
    %c240_i32_167 = arith.constant 240 : i32
    %227 = tpu.dynamic_rotate %226 by %c240_i32_167 dim 1 : vector<1x256xf32>, i32 -> vector<1x256xf32>
    %c7_168 = arith.constant 7 : index
    %c0_169 = arith.constant 0 : index
    %c0_170 = arith.constant 0 : index
    %228 = vector.load %arg6[%c7_168, %c0_169, %c0_170] : memref<9x1x256xf32, #tpu.memory_space<vmem>>, vector<1x1x256xf32>
    %229 = vector.shape_cast %228 : vector<1x1x256xf32> to vector<1x256xf32>
    %230 = arith.mulf %227, %229 : vector<1x256xf32>
    %231 = arith.addf %225, %230 : vector<1x256xf32>
    %232 = vector.extract_strided_slice %188 {offsets = [8, 0], sizes = [1, 256], strides = [1, 1]} : vector<9x256xf32> to vector<1x256xf32>
    %c239_i32_171 = arith.constant 239 : i32
    %233 = tpu.dynamic_rotate %232 by %c239_i32_171 dim 1 : vector<1x256xf32>, i32 -> vector<1x256xf32>
    %c8_172 = arith.constant 8 : index
    %c0_173 = arith.constant 0 : index
    %c0_174 = arith.constant 0 : index
    %234 = vector.load %arg6[%c8_172, %c0_173, %c0_174] : memref<9x1x256xf32, #tpu.memory_space<vmem>>, vector<1x1x256xf32>
    %235 = vector.shape_cast %234 : vector<1x1x256xf32> to vector<1x256xf32>
    %236 = arith.mulf %233, %235 : vector<1x256xf32>
    %237 = arith.addf %231, %236 : vector<1x256xf32>
    %c3_175 = arith.constant 3 : index
    %238 = memref.load %arg1[%c3_175] : memref<24xf32, #tpu.memory_space<smem>>
    %c4 = arith.constant 4 : index
    %239 = memref.load %arg1[%c4] : memref<24xf32, #tpu.memory_space<smem>>
    %c5_176 = arith.constant 5 : index
    %240 = memref.load %arg1[%c5_176] : memref<24xf32, #tpu.memory_space<smem>>
    %241 = vector.broadcast %238 : f32 to vector<1x256xf32>
    %242 = arith.mulf %241, %143 : vector<1x256xf32>
    %243 = vector.broadcast %239 : f32 to vector<1x256xf32>
    %244 = arith.mulf %243, %237 : vector<1x256xf32>
    %245 = arith.addf %242, %244 : vector<1x256xf32>
    %246 = vector.broadcast %240 : f32 to vector<1x256xf32>
    %247 = arith.addf %245, %246 : vector<1x256xf32>
    %c17_i32_177 = arith.constant 17 : i32
    %248 = tpu.dynamic_rotate %247 by %c17_i32_177 dim 1 : vector<1x256xf32>, i32 -> vector<1x256xf32>
    %c0_178 = arith.constant 0 : index
    %c0_179 = arith.constant 0 : index
    %c0_180 = arith.constant 0 : index
    %249 = vector.load %arg6[%c0_178, %c0_179, %c0_180] : memref<9x1x256xf32, #tpu.memory_space<vmem>>, vector<1x1x256xf32>
    %250 = vector.shape_cast %249 : vector<1x1x256xf32> to vector<1x256xf32>
    %251 = arith.mulf %248, %250 : vector<1x256xf32>
    %c16_i32_181 = arith.constant 16 : i32
    %252 = tpu.dynamic_rotate %247 by %c16_i32_181 dim 1 : vector<1x256xf32>, i32 -> vector<1x256xf32>
    %c1_182 = arith.constant 1 : index
    %c0_183 = arith.constant 0 : index
    %c0_184 = arith.constant 0 : index
    %253 = vector.load %arg6[%c1_182, %c0_183, %c0_184] : memref<9x1x256xf32, #tpu.memory_space<vmem>>, vector<1x1x256xf32>
    %254 = vector.shape_cast %253 : vector<1x1x256xf32> to vector<1x256xf32>
    %255 = arith.mulf %252, %254 : vector<1x256xf32>
    %c15_i32_185 = arith.constant 15 : i32
    %256 = tpu.dynamic_rotate %247 by %c15_i32_185 dim 1 : vector<1x256xf32>, i32 -> vector<1x256xf32>
    %c2_186 = arith.constant 2 : index
    %c0_187 = arith.constant 0 : index
    %c0_188 = arith.constant 0 : index
    %257 = vector.load %arg6[%c2_186, %c0_187, %c0_188] : memref<9x1x256xf32, #tpu.memory_space<vmem>>, vector<1x1x256xf32>
    %258 = vector.shape_cast %257 : vector<1x1x256xf32> to vector<1x256xf32>
    %259 = arith.mulf %256, %258 : vector<1x256xf32>
    %c1_i32_189 = arith.constant 1 : i32
    %260 = tpu.dynamic_rotate %247 by %c1_i32_189 dim 1 : vector<1x256xf32>, i32 -> vector<1x256xf32>
    %c3_190 = arith.constant 3 : index
    %c0_191 = arith.constant 0 : index
    %c0_192 = arith.constant 0 : index
    %261 = vector.load %arg6[%c3_190, %c0_191, %c0_192] : memref<9x1x256xf32, #tpu.memory_space<vmem>>, vector<1x1x256xf32>
    %262 = vector.shape_cast %261 : vector<1x1x256xf32> to vector<1x256xf32>
    %263 = arith.mulf %260, %262 : vector<1x256xf32>
    %c255_i32_193 = arith.constant 255 : i32
    %264 = tpu.dynamic_rotate %247 by %c255_i32_193 dim 1 : vector<1x256xf32>, i32 -> vector<1x256xf32>
    %c5_194 = arith.constant 5 : index
    %c0_195 = arith.constant 0 : index
    %c0_196 = arith.constant 0 : index
    %265 = vector.load %arg6[%c5_194, %c0_195, %c0_196] : memref<9x1x256xf32, #tpu.memory_space<vmem>>, vector<1x1x256xf32>
    %266 = vector.shape_cast %265 : vector<1x1x256xf32> to vector<1x256xf32>
    %267 = arith.mulf %264, %266 : vector<1x256xf32>
    %c241_i32_197 = arith.constant 241 : i32
    %268 = tpu.dynamic_rotate %247 by %c241_i32_197 dim 1 : vector<1x256xf32>, i32 -> vector<1x256xf32>
    %c6_198 = arith.constant 6 : index
    %c0_199 = arith.constant 0 : index
    %c0_200 = arith.constant 0 : index
    %269 = vector.load %arg6[%c6_198, %c0_199, %c0_200] : memref<9x1x256xf32, #tpu.memory_space<vmem>>, vector<1x1x256xf32>
    %270 = vector.shape_cast %269 : vector<1x1x256xf32> to vector<1x256xf32>
    %271 = arith.mulf %268, %270 : vector<1x256xf32>
    %c240_i32_201 = arith.constant 240 : i32
    %272 = tpu.dynamic_rotate %247 by %c240_i32_201 dim 1 : vector<1x256xf32>, i32 -> vector<1x256xf32>
    %c7_202 = arith.constant 7 : index
    %c0_203 = arith.constant 0 : index
    %c0_204 = arith.constant 0 : index
    %273 = vector.load %arg6[%c7_202, %c0_203, %c0_204] : memref<9x1x256xf32, #tpu.memory_space<vmem>>, vector<1x1x256xf32>
    %274 = vector.shape_cast %273 : vector<1x1x256xf32> to vector<1x256xf32>
    %275 = arith.mulf %272, %274 : vector<1x256xf32>
    %c239_i32_205 = arith.constant 239 : i32
    %276 = tpu.dynamic_rotate %247 by %c239_i32_205 dim 1 : vector<1x256xf32>, i32 -> vector<1x256xf32>
    %c8_206 = arith.constant 8 : index
    %c0_207 = arith.constant 0 : index
    %c0_208 = arith.constant 0 : index
    %277 = vector.load %arg6[%c8_206, %c0_207, %c0_208] : memref<9x1x256xf32, #tpu.memory_space<vmem>>, vector<1x1x256xf32>
    %278 = vector.shape_cast %277 : vector<1x1x256xf32> to vector<1x256xf32>
    %279 = arith.mulf %276, %278 : vector<1x256xf32>
    %280 = tpu.concatenate %251, %255, %259, %263, %247, %267, %271, %275, %279 in 0 : vector<1x256xf32>, vector<1x256xf32>, vector<1x256xf32>, vector<1x256xf32>, vector<1x256xf32>, vector<1x256xf32>, vector<1x256xf32>, vector<1x256xf32>, vector<1x256xf32> -> vector<9x256xf32>
    %281 = arith.truncf %280 : vector<9x256xf32> to vector<9x256xbf16>
    %c0_209 = arith.constant 0 : index
    %c0_210 = arith.constant 0 : index
    %282 = vector.load %arg3[%c0_209, %c0_210] : memref<16x9xbf16, #tpu.memory_space<vmem>>, vector<16x9xbf16>
    %cst_211 = arith.constant dense<0.000000e+00> : vector<16x256xf32>
    %283 = tpu.matmul %282, %281, %cst_211 {dimension_numbers = #tpu.dot_dimension_numbers<[1], [0], [0], [1], [0, 0, 1, 1], [], []>} : vector<16x9xbf16>, vector<9x256xbf16>, vector<16x256xf32> -> vector<16x256xf32>
    %284 = arith.addf %283, %37 : vector<16x256xf32>
    %c2_212 = arith.constant 2 : index
    %c0_213 = arith.constant 0 : index
    %c0_214 = arith.constant 0 : index
    %285 = vector.load %arg2[%c2_212, %c0_213, %c0_214] : memref<8x16x1xf32, #tpu.memory_space<vmem>>, vector<1x16x1xf32>
    %286 = vector.shape_cast %285 : vector<1x16x1xf32> to vector<16x1xf32>
    %287 = vector.broadcast %286 : vector<16x1xf32> to vector<16x256xf32>
    %288 = arith.addf %284, %287 : vector<16x256xf32>
    %cst_215 = arith.constant 0.000000e+00 : f32
    %289 = vector.broadcast %cst_215 : f32 to vector<16x256xf32>
    %290 = arith.maximumf %288, %289 : vector<16x256xf32>
    %c0_216 = arith.constant 0 : index
    %c0_217 = arith.constant 0 : index
    %291 = vector.load %arg5[%c0_216, %c0_217] : memref<9x16xf32, #tpu.memory_space<vmem>>, vector<9x16xf32>
    %cst_218 = arith.constant dense<0.000000e+00> : vector<9x256xf32>
    %292 = tpu.matmul %291, %290, %cst_218 {dimension_numbers = #tpu.dot_dimension_numbers<[1], [0], [0], [1], [0, 0, 1, 1], [], []>} : vector<9x16xf32>, vector<16x256xf32>, vector<9x256xf32> -> vector<9x256xf32>
    %293 = vector.extract_strided_slice %292 {offsets = [0, 0], sizes = [1, 256], strides = [1, 1]} : vector<9x256xf32> to vector<1x256xf32>
    %c17_i32_219 = arith.constant 17 : i32
    %294 = tpu.dynamic_rotate %293 by %c17_i32_219 dim 1 : vector<1x256xf32>, i32 -> vector<1x256xf32>
    %c0_220 = arith.constant 0 : index
    %c0_221 = arith.constant 0 : index
    %c0_222 = arith.constant 0 : index
    %295 = vector.load %arg6[%c0_220, %c0_221, %c0_222] : memref<9x1x256xf32, #tpu.memory_space<vmem>>, vector<1x1x256xf32>
    %296 = vector.shape_cast %295 : vector<1x1x256xf32> to vector<1x256xf32>
    %297 = arith.mulf %294, %296 : vector<1x256xf32>
    %298 = vector.extract_strided_slice %292 {offsets = [1, 0], sizes = [1, 256], strides = [1, 1]} : vector<9x256xf32> to vector<1x256xf32>
    %c16_i32_223 = arith.constant 16 : i32
    %299 = tpu.dynamic_rotate %298 by %c16_i32_223 dim 1 : vector<1x256xf32>, i32 -> vector<1x256xf32>
    %c1_224 = arith.constant 1 : index
    %c0_225 = arith.constant 0 : index
    %c0_226 = arith.constant 0 : index
    %300 = vector.load %arg6[%c1_224, %c0_225, %c0_226] : memref<9x1x256xf32, #tpu.memory_space<vmem>>, vector<1x1x256xf32>
    %301 = vector.shape_cast %300 : vector<1x1x256xf32> to vector<1x256xf32>
    %302 = arith.mulf %299, %301 : vector<1x256xf32>
    %303 = arith.addf %297, %302 : vector<1x256xf32>
    %304 = vector.extract_strided_slice %292 {offsets = [2, 0], sizes = [1, 256], strides = [1, 1]} : vector<9x256xf32> to vector<1x256xf32>
    %c15_i32_227 = arith.constant 15 : i32
    %305 = tpu.dynamic_rotate %304 by %c15_i32_227 dim 1 : vector<1x256xf32>, i32 -> vector<1x256xf32>
    %c2_228 = arith.constant 2 : index
    %c0_229 = arith.constant 0 : index
    %c0_230 = arith.constant 0 : index
    %306 = vector.load %arg6[%c2_228, %c0_229, %c0_230] : memref<9x1x256xf32, #tpu.memory_space<vmem>>, vector<1x1x256xf32>
    %307 = vector.shape_cast %306 : vector<1x1x256xf32> to vector<1x256xf32>
    %308 = arith.mulf %305, %307 : vector<1x256xf32>
    %309 = arith.addf %303, %308 : vector<1x256xf32>
    %310 = vector.extract_strided_slice %292 {offsets = [3, 0], sizes = [1, 256], strides = [1, 1]} : vector<9x256xf32> to vector<1x256xf32>
    %c1_i32_231 = arith.constant 1 : i32
    %311 = tpu.dynamic_rotate %310 by %c1_i32_231 dim 1 : vector<1x256xf32>, i32 -> vector<1x256xf32>
    %c3_232 = arith.constant 3 : index
    %c0_233 = arith.constant 0 : index
    %c0_234 = arith.constant 0 : index
    %312 = vector.load %arg6[%c3_232, %c0_233, %c0_234] : memref<9x1x256xf32, #tpu.memory_space<vmem>>, vector<1x1x256xf32>
    %313 = vector.shape_cast %312 : vector<1x1x256xf32> to vector<1x256xf32>
    %314 = arith.mulf %311, %313 : vector<1x256xf32>
    %315 = arith.addf %309, %314 : vector<1x256xf32>
    %316 = vector.extract_strided_slice %292 {offsets = [4, 0], sizes = [1, 256], strides = [1, 1]} : vector<9x256xf32> to vector<1x256xf32>
    %317 = arith.addf %315, %316 : vector<1x256xf32>
    %318 = vector.extract_strided_slice %292 {offsets = [5, 0], sizes = [1, 256], strides = [1, 1]} : vector<9x256xf32> to vector<1x256xf32>
    %c255_i32_235 = arith.constant 255 : i32
    %319 = tpu.dynamic_rotate %318 by %c255_i32_235 dim 1 : vector<1x256xf32>, i32 -> vector<1x256xf32>
    %c5_236 = arith.constant 5 : index
    %c0_237 = arith.constant 0 : index
    %c0_238 = arith.constant 0 : index
    %320 = vector.load %arg6[%c5_236, %c0_237, %c0_238] : memref<9x1x256xf32, #tpu.memory_space<vmem>>, vector<1x1x256xf32>
    %321 = vector.shape_cast %320 : vector<1x1x256xf32> to vector<1x256xf32>
    %322 = arith.mulf %319, %321 : vector<1x256xf32>
    %323 = arith.addf %317, %322 : vector<1x256xf32>
    %324 = vector.extract_strided_slice %292 {offsets = [6, 0], sizes = [1, 256], strides = [1, 1]} : vector<9x256xf32> to vector<1x256xf32>
    %c241_i32_239 = arith.constant 241 : i32
    %325 = tpu.dynamic_rotate %324 by %c241_i32_239 dim 1 : vector<1x256xf32>, i32 -> vector<1x256xf32>
    %c6_240 = arith.constant 6 : index
    %c0_241 = arith.constant 0 : index
    %c0_242 = arith.constant 0 : index
    %326 = vector.load %arg6[%c6_240, %c0_241, %c0_242] : memref<9x1x256xf32, #tpu.memory_space<vmem>>, vector<1x1x256xf32>
    %327 = vector.shape_cast %326 : vector<1x1x256xf32> to vector<1x256xf32>
    %328 = arith.mulf %325, %327 : vector<1x256xf32>
    %329 = arith.addf %323, %328 : vector<1x256xf32>
    %330 = vector.extract_strided_slice %292 {offsets = [7, 0], sizes = [1, 256], strides = [1, 1]} : vector<9x256xf32> to vector<1x256xf32>
    %c240_i32_243 = arith.constant 240 : i32
    %331 = tpu.dynamic_rotate %330 by %c240_i32_243 dim 1 : vector<1x256xf32>, i32 -> vector<1x256xf32>
    %c7_244 = arith.constant 7 : index
    %c0_245 = arith.constant 0 : index
    %c0_246 = arith.constant 0 : index
    %332 = vector.load %arg6[%c7_244, %c0_245, %c0_246] : memref<9x1x256xf32, #tpu.memory_space<vmem>>, vector<1x1x256xf32>
    %333 = vector.shape_cast %332 : vector<1x1x256xf32> to vector<1x256xf32>
    %334 = arith.mulf %331, %333 : vector<1x256xf32>
    %335 = arith.addf %329, %334 : vector<1x256xf32>
    %336 = vector.extract_strided_slice %292 {offsets = [8, 0], sizes = [1, 256], strides = [1, 1]} : vector<9x256xf32> to vector<1x256xf32>
    %c239_i32_247 = arith.constant 239 : i32
    %337 = tpu.dynamic_rotate %336 by %c239_i32_247 dim 1 : vector<1x256xf32>, i32 -> vector<1x256xf32>
    %c8_248 = arith.constant 8 : index
    %c0_249 = arith.constant 0 : index
    %c0_250 = arith.constant 0 : index
    %338 = vector.load %arg6[%c8_248, %c0_249, %c0_250] : memref<9x1x256xf32, #tpu.memory_space<vmem>>, vector<1x1x256xf32>
    %339 = vector.shape_cast %338 : vector<1x1x256xf32> to vector<1x256xf32>
    %340 = arith.mulf %337, %339 : vector<1x256xf32>
    %341 = arith.addf %335, %340 : vector<1x256xf32>
    %c6_251 = arith.constant 6 : index
    %342 = memref.load %arg1[%c6_251] : memref<24xf32, #tpu.memory_space<smem>>
    %c7_252 = arith.constant 7 : index
    %343 = memref.load %arg1[%c7_252] : memref<24xf32, #tpu.memory_space<smem>>
    %c8_253 = arith.constant 8 : index
    %344 = memref.load %arg1[%c8_253] : memref<24xf32, #tpu.memory_space<smem>>
    %345 = vector.broadcast %342 : f32 to vector<1x256xf32>
    %346 = arith.mulf %345, %247 : vector<1x256xf32>
    %347 = vector.broadcast %343 : f32 to vector<1x256xf32>
    %348 = arith.mulf %347, %341 : vector<1x256xf32>
    %349 = arith.addf %346, %348 : vector<1x256xf32>
    %350 = vector.broadcast %344 : f32 to vector<1x256xf32>
    %351 = arith.addf %349, %350 : vector<1x256xf32>
    %c17_i32_254 = arith.constant 17 : i32
    %352 = tpu.dynamic_rotate %351 by %c17_i32_254 dim 1 : vector<1x256xf32>, i32 -> vector<1x256xf32>
    %c0_255 = arith.constant 0 : index
    %c0_256 = arith.constant 0 : index
    %c0_257 = arith.constant 0 : index
    %353 = vector.load %arg6[%c0_255, %c0_256, %c0_257] : memref<9x1x256xf32, #tpu.memory_space<vmem>>, vector<1x1x256xf32>
    %354 = vector.shape_cast %353 : vector<1x1x256xf32> to vector<1x256xf32>
    %355 = arith.mulf %352, %354 : vector<1x256xf32>
    %c16_i32_258 = arith.constant 16 : i32
    %356 = tpu.dynamic_rotate %351 by %c16_i32_258 dim 1 : vector<1x256xf32>, i32 -> vector<1x256xf32>
    %c1_259 = arith.constant 1 : index
    %c0_260 = arith.constant 0 : index
    %c0_261 = arith.constant 0 : index
    %357 = vector.load %arg6[%c1_259, %c0_260, %c0_261] : memref<9x1x256xf32, #tpu.memory_space<vmem>>, vector<1x1x256xf32>
    %358 = vector.shape_cast %357 : vector<1x1x256xf32> to vector<1x256xf32>
    %359 = arith.mulf %356, %358 : vector<1x256xf32>
    %c15_i32_262 = arith.constant 15 : i32
    %360 = tpu.dynamic_rotate %351 by %c15_i32_262 dim 1 : vector<1x256xf32>, i32 -> vector<1x256xf32>
    %c2_263 = arith.constant 2 : index
    %c0_264 = arith.constant 0 : index
    %c0_265 = arith.constant 0 : index
    %361 = vector.load %arg6[%c2_263, %c0_264, %c0_265] : memref<9x1x256xf32, #tpu.memory_space<vmem>>, vector<1x1x256xf32>
    %362 = vector.shape_cast %361 : vector<1x1x256xf32> to vector<1x256xf32>
    %363 = arith.mulf %360, %362 : vector<1x256xf32>
    %c1_i32_266 = arith.constant 1 : i32
    %364 = tpu.dynamic_rotate %351 by %c1_i32_266 dim 1 : vector<1x256xf32>, i32 -> vector<1x256xf32>
    %c3_267 = arith.constant 3 : index
    %c0_268 = arith.constant 0 : index
    %c0_269 = arith.constant 0 : index
    %365 = vector.load %arg6[%c3_267, %c0_268, %c0_269] : memref<9x1x256xf32, #tpu.memory_space<vmem>>, vector<1x1x256xf32>
    %366 = vector.shape_cast %365 : vector<1x1x256xf32> to vector<1x256xf32>
    %367 = arith.mulf %364, %366 : vector<1x256xf32>
    %c255_i32_270 = arith.constant 255 : i32
    %368 = tpu.dynamic_rotate %351 by %c255_i32_270 dim 1 : vector<1x256xf32>, i32 -> vector<1x256xf32>
    %c5_271 = arith.constant 5 : index
    %c0_272 = arith.constant 0 : index
    %c0_273 = arith.constant 0 : index
    %369 = vector.load %arg6[%c5_271, %c0_272, %c0_273] : memref<9x1x256xf32, #tpu.memory_space<vmem>>, vector<1x1x256xf32>
    %370 = vector.shape_cast %369 : vector<1x1x256xf32> to vector<1x256xf32>
    %371 = arith.mulf %368, %370 : vector<1x256xf32>
    %c241_i32_274 = arith.constant 241 : i32
    %372 = tpu.dynamic_rotate %351 by %c241_i32_274 dim 1 : vector<1x256xf32>, i32 -> vector<1x256xf32>
    %c6_275 = arith.constant 6 : index
    %c0_276 = arith.constant 0 : index
    %c0_277 = arith.constant 0 : index
    %373 = vector.load %arg6[%c6_275, %c0_276, %c0_277] : memref<9x1x256xf32, #tpu.memory_space<vmem>>, vector<1x1x256xf32>
    %374 = vector.shape_cast %373 : vector<1x1x256xf32> to vector<1x256xf32>
    %375 = arith.mulf %372, %374 : vector<1x256xf32>
    %c240_i32_278 = arith.constant 240 : i32
    %376 = tpu.dynamic_rotate %351 by %c240_i32_278 dim 1 : vector<1x256xf32>, i32 -> vector<1x256xf32>
    %c7_279 = arith.constant 7 : index
    %c0_280 = arith.constant 0 : index
    %c0_281 = arith.constant 0 : index
    %377 = vector.load %arg6[%c7_279, %c0_280, %c0_281] : memref<9x1x256xf32, #tpu.memory_space<vmem>>, vector<1x1x256xf32>
    %378 = vector.shape_cast %377 : vector<1x1x256xf32> to vector<1x256xf32>
    %379 = arith.mulf %376, %378 : vector<1x256xf32>
    %c239_i32_282 = arith.constant 239 : i32
    %380 = tpu.dynamic_rotate %351 by %c239_i32_282 dim 1 : vector<1x256xf32>, i32 -> vector<1x256xf32>
    %c8_283 = arith.constant 8 : index
    %c0_284 = arith.constant 0 : index
    %c0_285 = arith.constant 0 : index
    %381 = vector.load %arg6[%c8_283, %c0_284, %c0_285] : memref<9x1x256xf32, #tpu.memory_space<vmem>>, vector<1x1x256xf32>
    %382 = vector.shape_cast %381 : vector<1x1x256xf32> to vector<1x256xf32>
    %383 = arith.mulf %380, %382 : vector<1x256xf32>
    %384 = tpu.concatenate %355, %359, %363, %367, %351, %371, %375, %379, %383 in 0 : vector<1x256xf32>, vector<1x256xf32>, vector<1x256xf32>, vector<1x256xf32>, vector<1x256xf32>, vector<1x256xf32>, vector<1x256xf32>, vector<1x256xf32>, vector<1x256xf32> -> vector<9x256xf32>
    %385 = arith.truncf %384 : vector<9x256xf32> to vector<9x256xbf16>
    %c0_286 = arith.constant 0 : index
    %c0_287 = arith.constant 0 : index
    %386 = vector.load %arg3[%c0_286, %c0_287] : memref<16x9xbf16, #tpu.memory_space<vmem>>, vector<16x9xbf16>
    %cst_288 = arith.constant dense<0.000000e+00> : vector<16x256xf32>
    %387 = tpu.matmul %386, %385, %cst_288 {dimension_numbers = #tpu.dot_dimension_numbers<[1], [0], [0], [1], [0, 0, 1, 1], [], []>} : vector<16x9xbf16>, vector<9x256xbf16>, vector<16x256xf32> -> vector<16x256xf32>
    %388 = arith.addf %387, %37 : vector<16x256xf32>
    %c3_289 = arith.constant 3 : index
    %c0_290 = arith.constant 0 : index
    %c0_291 = arith.constant 0 : index
    %389 = vector.load %arg2[%c3_289, %c0_290, %c0_291] : memref<8x16x1xf32, #tpu.memory_space<vmem>>, vector<1x16x1xf32>
    %390 = vector.shape_cast %389 : vector<1x16x1xf32> to vector<16x1xf32>
    %391 = vector.broadcast %390 : vector<16x1xf32> to vector<16x256xf32>
    %392 = arith.addf %388, %391 : vector<16x256xf32>
    %cst_292 = arith.constant 0.000000e+00 : f32
    %393 = vector.broadcast %cst_292 : f32 to vector<16x256xf32>
    %394 = arith.maximumf %392, %393 : vector<16x256xf32>
    %c0_293 = arith.constant 0 : index
    %c0_294 = arith.constant 0 : index
    %395 = vector.load %arg5[%c0_293, %c0_294] : memref<9x16xf32, #tpu.memory_space<vmem>>, vector<9x16xf32>
    %cst_295 = arith.constant dense<0.000000e+00> : vector<9x256xf32>
    %396 = tpu.matmul %395, %394, %cst_295 {dimension_numbers = #tpu.dot_dimension_numbers<[1], [0], [0], [1], [0, 0, 1, 1], [], []>} : vector<9x16xf32>, vector<16x256xf32>, vector<9x256xf32> -> vector<9x256xf32>
    %397 = vector.extract_strided_slice %396 {offsets = [0, 0], sizes = [1, 256], strides = [1, 1]} : vector<9x256xf32> to vector<1x256xf32>
    %c17_i32_296 = arith.constant 17 : i32
    %398 = tpu.dynamic_rotate %397 by %c17_i32_296 dim 1 : vector<1x256xf32>, i32 -> vector<1x256xf32>
    %c0_297 = arith.constant 0 : index
    %c0_298 = arith.constant 0 : index
    %c0_299 = arith.constant 0 : index
    %399 = vector.load %arg6[%c0_297, %c0_298, %c0_299] : memref<9x1x256xf32, #tpu.memory_space<vmem>>, vector<1x1x256xf32>
    %400 = vector.shape_cast %399 : vector<1x1x256xf32> to vector<1x256xf32>
    %401 = arith.mulf %398, %400 : vector<1x256xf32>
    %402 = vector.extract_strided_slice %396 {offsets = [1, 0], sizes = [1, 256], strides = [1, 1]} : vector<9x256xf32> to vector<1x256xf32>
    %c16_i32_300 = arith.constant 16 : i32
    %403 = tpu.dynamic_rotate %402 by %c16_i32_300 dim 1 : vector<1x256xf32>, i32 -> vector<1x256xf32>
    %c1_301 = arith.constant 1 : index
    %c0_302 = arith.constant 0 : index
    %c0_303 = arith.constant 0 : index
    %404 = vector.load %arg6[%c1_301, %c0_302, %c0_303] : memref<9x1x256xf32, #tpu.memory_space<vmem>>, vector<1x1x256xf32>
    %405 = vector.shape_cast %404 : vector<1x1x256xf32> to vector<1x256xf32>
    %406 = arith.mulf %403, %405 : vector<1x256xf32>
    %407 = arith.addf %401, %406 : vector<1x256xf32>
    %408 = vector.extract_strided_slice %396 {offsets = [2, 0], sizes = [1, 256], strides = [1, 1]} : vector<9x256xf32> to vector<1x256xf32>
    %c15_i32_304 = arith.constant 15 : i32
    %409 = tpu.dynamic_rotate %408 by %c15_i32_304 dim 1 : vector<1x256xf32>, i32 -> vector<1x256xf32>
    %c2_305 = arith.constant 2 : index
    %c0_306 = arith.constant 0 : index
    %c0_307 = arith.constant 0 : index
    %410 = vector.load %arg6[%c2_305, %c0_306, %c0_307] : memref<9x1x256xf32, #tpu.memory_space<vmem>>, vector<1x1x256xf32>
    %411 = vector.shape_cast %410 : vector<1x1x256xf32> to vector<1x256xf32>
    %412 = arith.mulf %409, %411 : vector<1x256xf32>
    %413 = arith.addf %407, %412 : vector<1x256xf32>
    %414 = vector.extract_strided_slice %396 {offsets = [3, 0], sizes = [1, 256], strides = [1, 1]} : vector<9x256xf32> to vector<1x256xf32>
    %c1_i32_308 = arith.constant 1 : i32
    %415 = tpu.dynamic_rotate %414 by %c1_i32_308 dim 1 : vector<1x256xf32>, i32 -> vector<1x256xf32>
    %c3_309 = arith.constant 3 : index
    %c0_310 = arith.constant 0 : index
    %c0_311 = arith.constant 0 : index
    %416 = vector.load %arg6[%c3_309, %c0_310, %c0_311] : memref<9x1x256xf32, #tpu.memory_space<vmem>>, vector<1x1x256xf32>
    %417 = vector.shape_cast %416 : vector<1x1x256xf32> to vector<1x256xf32>
    %418 = arith.mulf %415, %417 : vector<1x256xf32>
    %419 = arith.addf %413, %418 : vector<1x256xf32>
    %420 = vector.extract_strided_slice %396 {offsets = [4, 0], sizes = [1, 256], strides = [1, 1]} : vector<9x256xf32> to vector<1x256xf32>
    %421 = arith.addf %419, %420 : vector<1x256xf32>
    %422 = vector.extract_strided_slice %396 {offsets = [5, 0], sizes = [1, 256], strides = [1, 1]} : vector<9x256xf32> to vector<1x256xf32>
    %c255_i32_312 = arith.constant 255 : i32
    %423 = tpu.dynamic_rotate %422 by %c255_i32_312 dim 1 : vector<1x256xf32>, i32 -> vector<1x256xf32>
    %c5_313 = arith.constant 5 : index
    %c0_314 = arith.constant 0 : index
    %c0_315 = arith.constant 0 : index
    %424 = vector.load %arg6[%c5_313, %c0_314, %c0_315] : memref<9x1x256xf32, #tpu.memory_space<vmem>>, vector<1x1x256xf32>
    %425 = vector.shape_cast %424 : vector<1x1x256xf32> to vector<1x256xf32>
    %426 = arith.mulf %423, %425 : vector<1x256xf32>
    %427 = arith.addf %421, %426 : vector<1x256xf32>
    %428 = vector.extract_strided_slice %396 {offsets = [6, 0], sizes = [1, 256], strides = [1, 1]} : vector<9x256xf32> to vector<1x256xf32>
    %c241_i32_316 = arith.constant 241 : i32
    %429 = tpu.dynamic_rotate %428 by %c241_i32_316 dim 1 : vector<1x256xf32>, i32 -> vector<1x256xf32>
    %c6_317 = arith.constant 6 : index
    %c0_318 = arith.constant 0 : index
    %c0_319 = arith.constant 0 : index
    %430 = vector.load %arg6[%c6_317, %c0_318, %c0_319] : memref<9x1x256xf32, #tpu.memory_space<vmem>>, vector<1x1x256xf32>
    %431 = vector.shape_cast %430 : vector<1x1x256xf32> to vector<1x256xf32>
    %432 = arith.mulf %429, %431 : vector<1x256xf32>
    %433 = arith.addf %427, %432 : vector<1x256xf32>
    %434 = vector.extract_strided_slice %396 {offsets = [7, 0], sizes = [1, 256], strides = [1, 1]} : vector<9x256xf32> to vector<1x256xf32>
    %c240_i32_320 = arith.constant 240 : i32
    %435 = tpu.dynamic_rotate %434 by %c240_i32_320 dim 1 : vector<1x256xf32>, i32 -> vector<1x256xf32>
    %c7_321 = arith.constant 7 : index
    %c0_322 = arith.constant 0 : index
    %c0_323 = arith.constant 0 : index
    %436 = vector.load %arg6[%c7_321, %c0_322, %c0_323] : memref<9x1x256xf32, #tpu.memory_space<vmem>>, vector<1x1x256xf32>
    %437 = vector.shape_cast %436 : vector<1x1x256xf32> to vector<1x256xf32>
    %438 = arith.mulf %435, %437 : vector<1x256xf32>
    %439 = arith.addf %433, %438 : vector<1x256xf32>
    %440 = vector.extract_strided_slice %396 {offsets = [8, 0], sizes = [1, 256], strides = [1, 1]} : vector<9x256xf32> to vector<1x256xf32>
    %c239_i32_324 = arith.constant 239 : i32
    %441 = tpu.dynamic_rotate %440 by %c239_i32_324 dim 1 : vector<1x256xf32>, i32 -> vector<1x256xf32>
    %c8_325 = arith.constant 8 : index
    %c0_326 = arith.constant 0 : index
    %c0_327 = arith.constant 0 : index
    %442 = vector.load %arg6[%c8_325, %c0_326, %c0_327] : memref<9x1x256xf32, #tpu.memory_space<vmem>>, vector<1x1x256xf32>
    %443 = vector.shape_cast %442 : vector<1x1x256xf32> to vector<1x256xf32>
    %444 = arith.mulf %441, %443 : vector<1x256xf32>
    %445 = arith.addf %439, %444 : vector<1x256xf32>
    %c9 = arith.constant 9 : index
    %446 = memref.load %arg1[%c9] : memref<24xf32, #tpu.memory_space<smem>>
    %c10 = arith.constant 10 : index
    %447 = memref.load %arg1[%c10] : memref<24xf32, #tpu.memory_space<smem>>
    %c11 = arith.constant 11 : index
    %448 = memref.load %arg1[%c11] : memref<24xf32, #tpu.memory_space<smem>>
    %449 = vector.broadcast %446 : f32 to vector<1x256xf32>
    %450 = arith.mulf %449, %351 : vector<1x256xf32>
    %451 = vector.broadcast %447 : f32 to vector<1x256xf32>
    %452 = arith.mulf %451, %445 : vector<1x256xf32>
    %453 = arith.addf %450, %452 : vector<1x256xf32>
    %454 = vector.broadcast %448 : f32 to vector<1x256xf32>
    %455 = arith.addf %453, %454 : vector<1x256xf32>
    %c17_i32_328 = arith.constant 17 : i32
    %456 = tpu.dynamic_rotate %455 by %c17_i32_328 dim 1 : vector<1x256xf32>, i32 -> vector<1x256xf32>
    %c0_329 = arith.constant 0 : index
    %c0_330 = arith.constant 0 : index
    %c0_331 = arith.constant 0 : index
    %457 = vector.load %arg6[%c0_329, %c0_330, %c0_331] : memref<9x1x256xf32, #tpu.memory_space<vmem>>, vector<1x1x256xf32>
    %458 = vector.shape_cast %457 : vector<1x1x256xf32> to vector<1x256xf32>
    %459 = arith.mulf %456, %458 : vector<1x256xf32>
    %c16_i32_332 = arith.constant 16 : i32
    %460 = tpu.dynamic_rotate %455 by %c16_i32_332 dim 1 : vector<1x256xf32>, i32 -> vector<1x256xf32>
    %c1_333 = arith.constant 1 : index
    %c0_334 = arith.constant 0 : index
    %c0_335 = arith.constant 0 : index
    %461 = vector.load %arg6[%c1_333, %c0_334, %c0_335] : memref<9x1x256xf32, #tpu.memory_space<vmem>>, vector<1x1x256xf32>
    %462 = vector.shape_cast %461 : vector<1x1x256xf32> to vector<1x256xf32>
    %463 = arith.mulf %460, %462 : vector<1x256xf32>
    %c15_i32_336 = arith.constant 15 : i32
    %464 = tpu.dynamic_rotate %455 by %c15_i32_336 dim 1 : vector<1x256xf32>, i32 -> vector<1x256xf32>
    %c2_337 = arith.constant 2 : index
    %c0_338 = arith.constant 0 : index
    %c0_339 = arith.constant 0 : index
    %465 = vector.load %arg6[%c2_337, %c0_338, %c0_339] : memref<9x1x256xf32, #tpu.memory_space<vmem>>, vector<1x1x256xf32>
    %466 = vector.shape_cast %465 : vector<1x1x256xf32> to vector<1x256xf32>
    %467 = arith.mulf %464, %466 : vector<1x256xf32>
    %c1_i32_340 = arith.constant 1 : i32
    %468 = tpu.dynamic_rotate %455 by %c1_i32_340 dim 1 : vector<1x256xf32>, i32 -> vector<1x256xf32>
    %c3_341 = arith.constant 3 : index
    %c0_342 = arith.constant 0 : index
    %c0_343 = arith.constant 0 : index
    %469 = vector.load %arg6[%c3_341, %c0_342, %c0_343] : memref<9x1x256xf32, #tpu.memory_space<vmem>>, vector<1x1x256xf32>
    %470 = vector.shape_cast %469 : vector<1x1x256xf32> to vector<1x256xf32>
    %471 = arith.mulf %468, %470 : vector<1x256xf32>
    %c255_i32_344 = arith.constant 255 : i32
    %472 = tpu.dynamic_rotate %455 by %c255_i32_344 dim 1 : vector<1x256xf32>, i32 -> vector<1x256xf32>
    %c5_345 = arith.constant 5 : index
    %c0_346 = arith.constant 0 : index
    %c0_347 = arith.constant 0 : index
    %473 = vector.load %arg6[%c5_345, %c0_346, %c0_347] : memref<9x1x256xf32, #tpu.memory_space<vmem>>, vector<1x1x256xf32>
    %474 = vector.shape_cast %473 : vector<1x1x256xf32> to vector<1x256xf32>
    %475 = arith.mulf %472, %474 : vector<1x256xf32>
    %c241_i32_348 = arith.constant 241 : i32
    %476 = tpu.dynamic_rotate %455 by %c241_i32_348 dim 1 : vector<1x256xf32>, i32 -> vector<1x256xf32>
    %c6_349 = arith.constant 6 : index
    %c0_350 = arith.constant 0 : index
    %c0_351 = arith.constant 0 : index
    %477 = vector.load %arg6[%c6_349, %c0_350, %c0_351] : memref<9x1x256xf32, #tpu.memory_space<vmem>>, vector<1x1x256xf32>
    %478 = vector.shape_cast %477 : vector<1x1x256xf32> to vector<1x256xf32>
    %479 = arith.mulf %476, %478 : vector<1x256xf32>
    %c240_i32_352 = arith.constant 240 : i32
    %480 = tpu.dynamic_rotate %455 by %c240_i32_352 dim 1 : vector<1x256xf32>, i32 -> vector<1x256xf32>
    %c7_353 = arith.constant 7 : index
    %c0_354 = arith.constant 0 : index
    %c0_355 = arith.constant 0 : index
    %481 = vector.load %arg6[%c7_353, %c0_354, %c0_355] : memref<9x1x256xf32, #tpu.memory_space<vmem>>, vector<1x1x256xf32>
    %482 = vector.shape_cast %481 : vector<1x1x256xf32> to vector<1x256xf32>
    %483 = arith.mulf %480, %482 : vector<1x256xf32>
    %c239_i32_356 = arith.constant 239 : i32
    %484 = tpu.dynamic_rotate %455 by %c239_i32_356 dim 1 : vector<1x256xf32>, i32 -> vector<1x256xf32>
    %c8_357 = arith.constant 8 : index
    %c0_358 = arith.constant 0 : index
    %c0_359 = arith.constant 0 : index
    %485 = vector.load %arg6[%c8_357, %c0_358, %c0_359] : memref<9x1x256xf32, #tpu.memory_space<vmem>>, vector<1x1x256xf32>
    %486 = vector.shape_cast %485 : vector<1x1x256xf32> to vector<1x256xf32>
    %487 = arith.mulf %484, %486 : vector<1x256xf32>
    %488 = tpu.concatenate %459, %463, %467, %471, %455, %475, %479, %483, %487 in 0 : vector<1x256xf32>, vector<1x256xf32>, vector<1x256xf32>, vector<1x256xf32>, vector<1x256xf32>, vector<1x256xf32>, vector<1x256xf32>, vector<1x256xf32>, vector<1x256xf32> -> vector<9x256xf32>
    %489 = arith.truncf %488 : vector<9x256xf32> to vector<9x256xbf16>
    %c0_360 = arith.constant 0 : index
    %c0_361 = arith.constant 0 : index
    %490 = vector.load %arg3[%c0_360, %c0_361] : memref<16x9xbf16, #tpu.memory_space<vmem>>, vector<16x9xbf16>
    %cst_362 = arith.constant dense<0.000000e+00> : vector<16x256xf32>
    %491 = tpu.matmul %490, %489, %cst_362 {dimension_numbers = #tpu.dot_dimension_numbers<[1], [0], [0], [1], [0, 0, 1, 1], [], []>} : vector<16x9xbf16>, vector<9x256xbf16>, vector<16x256xf32> -> vector<16x256xf32>
    %492 = arith.addf %491, %37 : vector<16x256xf32>
    %c4_363 = arith.constant 4 : index
    %c0_364 = arith.constant 0 : index
    %c0_365 = arith.constant 0 : index
    %493 = vector.load %arg2[%c4_363, %c0_364, %c0_365] : memref<8x16x1xf32, #tpu.memory_space<vmem>>, vector<1x16x1xf32>
    %494 = vector.shape_cast %493 : vector<1x16x1xf32> to vector<16x1xf32>
    %495 = vector.broadcast %494 : vector<16x1xf32> to vector<16x256xf32>
    %496 = arith.addf %492, %495 : vector<16x256xf32>
    %cst_366 = arith.constant 0.000000e+00 : f32
    %497 = vector.broadcast %cst_366 : f32 to vector<16x256xf32>
    %498 = arith.maximumf %496, %497 : vector<16x256xf32>
    %c0_367 = arith.constant 0 : index
    %c0_368 = arith.constant 0 : index
    %499 = vector.load %arg5[%c0_367, %c0_368] : memref<9x16xf32, #tpu.memory_space<vmem>>, vector<9x16xf32>
    %cst_369 = arith.constant dense<0.000000e+00> : vector<9x256xf32>
    %500 = tpu.matmul %499, %498, %cst_369 {dimension_numbers = #tpu.dot_dimension_numbers<[1], [0], [0], [1], [0, 0, 1, 1], [], []>} : vector<9x16xf32>, vector<16x256xf32>, vector<9x256xf32> -> vector<9x256xf32>
    %501 = vector.extract_strided_slice %500 {offsets = [0, 0], sizes = [1, 256], strides = [1, 1]} : vector<9x256xf32> to vector<1x256xf32>
    %c17_i32_370 = arith.constant 17 : i32
    %502 = tpu.dynamic_rotate %501 by %c17_i32_370 dim 1 : vector<1x256xf32>, i32 -> vector<1x256xf32>
    %c0_371 = arith.constant 0 : index
    %c0_372 = arith.constant 0 : index
    %c0_373 = arith.constant 0 : index
    %503 = vector.load %arg6[%c0_371, %c0_372, %c0_373] : memref<9x1x256xf32, #tpu.memory_space<vmem>>, vector<1x1x256xf32>
    %504 = vector.shape_cast %503 : vector<1x1x256xf32> to vector<1x256xf32>
    %505 = arith.mulf %502, %504 : vector<1x256xf32>
    %506 = vector.extract_strided_slice %500 {offsets = [1, 0], sizes = [1, 256], strides = [1, 1]} : vector<9x256xf32> to vector<1x256xf32>
    %c16_i32_374 = arith.constant 16 : i32
    %507 = tpu.dynamic_rotate %506 by %c16_i32_374 dim 1 : vector<1x256xf32>, i32 -> vector<1x256xf32>
    %c1_375 = arith.constant 1 : index
    %c0_376 = arith.constant 0 : index
    %c0_377 = arith.constant 0 : index
    %508 = vector.load %arg6[%c1_375, %c0_376, %c0_377] : memref<9x1x256xf32, #tpu.memory_space<vmem>>, vector<1x1x256xf32>
    %509 = vector.shape_cast %508 : vector<1x1x256xf32> to vector<1x256xf32>
    %510 = arith.mulf %507, %509 : vector<1x256xf32>
    %511 = arith.addf %505, %510 : vector<1x256xf32>
    %512 = vector.extract_strided_slice %500 {offsets = [2, 0], sizes = [1, 256], strides = [1, 1]} : vector<9x256xf32> to vector<1x256xf32>
    %c15_i32_378 = arith.constant 15 : i32
    %513 = tpu.dynamic_rotate %512 by %c15_i32_378 dim 1 : vector<1x256xf32>, i32 -> vector<1x256xf32>
    %c2_379 = arith.constant 2 : index
    %c0_380 = arith.constant 0 : index
    %c0_381 = arith.constant 0 : index
    %514 = vector.load %arg6[%c2_379, %c0_380, %c0_381] : memref<9x1x256xf32, #tpu.memory_space<vmem>>, vector<1x1x256xf32>
    %515 = vector.shape_cast %514 : vector<1x1x256xf32> to vector<1x256xf32>
    %516 = arith.mulf %513, %515 : vector<1x256xf32>
    %517 = arith.addf %511, %516 : vector<1x256xf32>
    %518 = vector.extract_strided_slice %500 {offsets = [3, 0], sizes = [1, 256], strides = [1, 1]} : vector<9x256xf32> to vector<1x256xf32>
    %c1_i32_382 = arith.constant 1 : i32
    %519 = tpu.dynamic_rotate %518 by %c1_i32_382 dim 1 : vector<1x256xf32>, i32 -> vector<1x256xf32>
    %c3_383 = arith.constant 3 : index
    %c0_384 = arith.constant 0 : index
    %c0_385 = arith.constant 0 : index
    %520 = vector.load %arg6[%c3_383, %c0_384, %c0_385] : memref<9x1x256xf32, #tpu.memory_space<vmem>>, vector<1x1x256xf32>
    %521 = vector.shape_cast %520 : vector<1x1x256xf32> to vector<1x256xf32>
    %522 = arith.mulf %519, %521 : vector<1x256xf32>
    %523 = arith.addf %517, %522 : vector<1x256xf32>
    %524 = vector.extract_strided_slice %500 {offsets = [4, 0], sizes = [1, 256], strides = [1, 1]} : vector<9x256xf32> to vector<1x256xf32>
    %525 = arith.addf %523, %524 : vector<1x256xf32>
    %526 = vector.extract_strided_slice %500 {offsets = [5, 0], sizes = [1, 256], strides = [1, 1]} : vector<9x256xf32> to vector<1x256xf32>
    %c255_i32_386 = arith.constant 255 : i32
    %527 = tpu.dynamic_rotate %526 by %c255_i32_386 dim 1 : vector<1x256xf32>, i32 -> vector<1x256xf32>
    %c5_387 = arith.constant 5 : index
    %c0_388 = arith.constant 0 : index
    %c0_389 = arith.constant 0 : index
    %528 = vector.load %arg6[%c5_387, %c0_388, %c0_389] : memref<9x1x256xf32, #tpu.memory_space<vmem>>, vector<1x1x256xf32>
    %529 = vector.shape_cast %528 : vector<1x1x256xf32> to vector<1x256xf32>
    %530 = arith.mulf %527, %529 : vector<1x256xf32>
    %531 = arith.addf %525, %530 : vector<1x256xf32>
    %532 = vector.extract_strided_slice %500 {offsets = [6, 0], sizes = [1, 256], strides = [1, 1]} : vector<9x256xf32> to vector<1x256xf32>
    %c241_i32_390 = arith.constant 241 : i32
    %533 = tpu.dynamic_rotate %532 by %c241_i32_390 dim 1 : vector<1x256xf32>, i32 -> vector<1x256xf32>
    %c6_391 = arith.constant 6 : index
    %c0_392 = arith.constant 0 : index
    %c0_393 = arith.constant 0 : index
    %534 = vector.load %arg6[%c6_391, %c0_392, %c0_393] : memref<9x1x256xf32, #tpu.memory_space<vmem>>, vector<1x1x256xf32>
    %535 = vector.shape_cast %534 : vector<1x1x256xf32> to vector<1x256xf32>
    %536 = arith.mulf %533, %535 : vector<1x256xf32>
    %537 = arith.addf %531, %536 : vector<1x256xf32>
    %538 = vector.extract_strided_slice %500 {offsets = [7, 0], sizes = [1, 256], strides = [1, 1]} : vector<9x256xf32> to vector<1x256xf32>
    %c240_i32_394 = arith.constant 240 : i32
    %539 = tpu.dynamic_rotate %538 by %c240_i32_394 dim 1 : vector<1x256xf32>, i32 -> vector<1x256xf32>
    %c7_395 = arith.constant 7 : index
    %c0_396 = arith.constant 0 : index
    %c0_397 = arith.constant 0 : index
    %540 = vector.load %arg6[%c7_395, %c0_396, %c0_397] : memref<9x1x256xf32, #tpu.memory_space<vmem>>, vector<1x1x256xf32>
    %541 = vector.shape_cast %540 : vector<1x1x256xf32> to vector<1x256xf32>
    %542 = arith.mulf %539, %541 : vector<1x256xf32>
    %543 = arith.addf %537, %542 : vector<1x256xf32>
    %544 = vector.extract_strided_slice %500 {offsets = [8, 0], sizes = [1, 256], strides = [1, 1]} : vector<9x256xf32> to vector<1x256xf32>
    %c239_i32_398 = arith.constant 239 : i32
    %545 = tpu.dynamic_rotate %544 by %c239_i32_398 dim 1 : vector<1x256xf32>, i32 -> vector<1x256xf32>
    %c8_399 = arith.constant 8 : index
    %c0_400 = arith.constant 0 : index
    %c0_401 = arith.constant 0 : index
    %546 = vector.load %arg6[%c8_399, %c0_400, %c0_401] : memref<9x1x256xf32, #tpu.memory_space<vmem>>, vector<1x1x256xf32>
    %547 = vector.shape_cast %546 : vector<1x1x256xf32> to vector<1x256xf32>
    %548 = arith.mulf %545, %547 : vector<1x256xf32>
    %549 = arith.addf %543, %548 : vector<1x256xf32>
    %c12 = arith.constant 12 : index
    %550 = memref.load %arg1[%c12] : memref<24xf32, #tpu.memory_space<smem>>
    %c13 = arith.constant 13 : index
    %551 = memref.load %arg1[%c13] : memref<24xf32, #tpu.memory_space<smem>>
    %c14 = arith.constant 14 : index
    %552 = memref.load %arg1[%c14] : memref<24xf32, #tpu.memory_space<smem>>
    %553 = vector.broadcast %550 : f32 to vector<1x256xf32>
    %554 = arith.mulf %553, %455 : vector<1x256xf32>
    %555 = vector.broadcast %551 : f32 to vector<1x256xf32>
    %556 = arith.mulf %555, %549 : vector<1x256xf32>
    %557 = arith.addf %554, %556 : vector<1x256xf32>
    %558 = vector.broadcast %552 : f32 to vector<1x256xf32>
    %559 = arith.addf %557, %558 : vector<1x256xf32>
    %c17_i32_402 = arith.constant 17 : i32
    %560 = tpu.dynamic_rotate %559 by %c17_i32_402 dim 1 : vector<1x256xf32>, i32 -> vector<1x256xf32>
    %c0_403 = arith.constant 0 : index
    %c0_404 = arith.constant 0 : index
    %c0_405 = arith.constant 0 : index
    %561 = vector.load %arg6[%c0_403, %c0_404, %c0_405] : memref<9x1x256xf32, #tpu.memory_space<vmem>>, vector<1x1x256xf32>
    %562 = vector.shape_cast %561 : vector<1x1x256xf32> to vector<1x256xf32>
    %563 = arith.mulf %560, %562 : vector<1x256xf32>
    %c16_i32_406 = arith.constant 16 : i32
    %564 = tpu.dynamic_rotate %559 by %c16_i32_406 dim 1 : vector<1x256xf32>, i32 -> vector<1x256xf32>
    %c1_407 = arith.constant 1 : index
    %c0_408 = arith.constant 0 : index
    %c0_409 = arith.constant 0 : index
    %565 = vector.load %arg6[%c1_407, %c0_408, %c0_409] : memref<9x1x256xf32, #tpu.memory_space<vmem>>, vector<1x1x256xf32>
    %566 = vector.shape_cast %565 : vector<1x1x256xf32> to vector<1x256xf32>
    %567 = arith.mulf %564, %566 : vector<1x256xf32>
    %c15_i32_410 = arith.constant 15 : i32
    %568 = tpu.dynamic_rotate %559 by %c15_i32_410 dim 1 : vector<1x256xf32>, i32 -> vector<1x256xf32>
    %c2_411 = arith.constant 2 : index
    %c0_412 = arith.constant 0 : index
    %c0_413 = arith.constant 0 : index
    %569 = vector.load %arg6[%c2_411, %c0_412, %c0_413] : memref<9x1x256xf32, #tpu.memory_space<vmem>>, vector<1x1x256xf32>
    %570 = vector.shape_cast %569 : vector<1x1x256xf32> to vector<1x256xf32>
    %571 = arith.mulf %568, %570 : vector<1x256xf32>
    %c1_i32_414 = arith.constant 1 : i32
    %572 = tpu.dynamic_rotate %559 by %c1_i32_414 dim 1 : vector<1x256xf32>, i32 -> vector<1x256xf32>
    %c3_415 = arith.constant 3 : index
    %c0_416 = arith.constant 0 : index
    %c0_417 = arith.constant 0 : index
    %573 = vector.load %arg6[%c3_415, %c0_416, %c0_417] : memref<9x1x256xf32, #tpu.memory_space<vmem>>, vector<1x1x256xf32>
    %574 = vector.shape_cast %573 : vector<1x1x256xf32> to vector<1x256xf32>
    %575 = arith.mulf %572, %574 : vector<1x256xf32>
    %c255_i32_418 = arith.constant 255 : i32
    %576 = tpu.dynamic_rotate %559 by %c255_i32_418 dim 1 : vector<1x256xf32>, i32 -> vector<1x256xf32>
    %c5_419 = arith.constant 5 : index
    %c0_420 = arith.constant 0 : index
    %c0_421 = arith.constant 0 : index
    %577 = vector.load %arg6[%c5_419, %c0_420, %c0_421] : memref<9x1x256xf32, #tpu.memory_space<vmem>>, vector<1x1x256xf32>
    %578 = vector.shape_cast %577 : vector<1x1x256xf32> to vector<1x256xf32>
    %579 = arith.mulf %576, %578 : vector<1x256xf32>
    %c241_i32_422 = arith.constant 241 : i32
    %580 = tpu.dynamic_rotate %559 by %c241_i32_422 dim 1 : vector<1x256xf32>, i32 -> vector<1x256xf32>
    %c6_423 = arith.constant 6 : index
    %c0_424 = arith.constant 0 : index
    %c0_425 = arith.constant 0 : index
    %581 = vector.load %arg6[%c6_423, %c0_424, %c0_425] : memref<9x1x256xf32, #tpu.memory_space<vmem>>, vector<1x1x256xf32>
    %582 = vector.shape_cast %581 : vector<1x1x256xf32> to vector<1x256xf32>
    %583 = arith.mulf %580, %582 : vector<1x256xf32>
    %c240_i32_426 = arith.constant 240 : i32
    %584 = tpu.dynamic_rotate %559 by %c240_i32_426 dim 1 : vector<1x256xf32>, i32 -> vector<1x256xf32>
    %c7_427 = arith.constant 7 : index
    %c0_428 = arith.constant 0 : index
    %c0_429 = arith.constant 0 : index
    %585 = vector.load %arg6[%c7_427, %c0_428, %c0_429] : memref<9x1x256xf32, #tpu.memory_space<vmem>>, vector<1x1x256xf32>
    %586 = vector.shape_cast %585 : vector<1x1x256xf32> to vector<1x256xf32>
    %587 = arith.mulf %584, %586 : vector<1x256xf32>
    %c239_i32_430 = arith.constant 239 : i32
    %588 = tpu.dynamic_rotate %559 by %c239_i32_430 dim 1 : vector<1x256xf32>, i32 -> vector<1x256xf32>
    %c8_431 = arith.constant 8 : index
    %c0_432 = arith.constant 0 : index
    %c0_433 = arith.constant 0 : index
    %589 = vector.load %arg6[%c8_431, %c0_432, %c0_433] : memref<9x1x256xf32, #tpu.memory_space<vmem>>, vector<1x1x256xf32>
    %590 = vector.shape_cast %589 : vector<1x1x256xf32> to vector<1x256xf32>
    %591 = arith.mulf %588, %590 : vector<1x256xf32>
    %592 = tpu.concatenate %563, %567, %571, %575, %559, %579, %583, %587, %591 in 0 : vector<1x256xf32>, vector<1x256xf32>, vector<1x256xf32>, vector<1x256xf32>, vector<1x256xf32>, vector<1x256xf32>, vector<1x256xf32>, vector<1x256xf32>, vector<1x256xf32> -> vector<9x256xf32>
    %593 = arith.truncf %592 : vector<9x256xf32> to vector<9x256xbf16>
    %c0_434 = arith.constant 0 : index
    %c0_435 = arith.constant 0 : index
    %594 = vector.load %arg3[%c0_434, %c0_435] : memref<16x9xbf16, #tpu.memory_space<vmem>>, vector<16x9xbf16>
    %cst_436 = arith.constant dense<0.000000e+00> : vector<16x256xf32>
    %595 = tpu.matmul %594, %593, %cst_436 {dimension_numbers = #tpu.dot_dimension_numbers<[1], [0], [0], [1], [0, 0, 1, 1], [], []>} : vector<16x9xbf16>, vector<9x256xbf16>, vector<16x256xf32> -> vector<16x256xf32>
    %596 = arith.addf %595, %37 : vector<16x256xf32>
    %c5_437 = arith.constant 5 : index
    %c0_438 = arith.constant 0 : index
    %c0_439 = arith.constant 0 : index
    %597 = vector.load %arg2[%c5_437, %c0_438, %c0_439] : memref<8x16x1xf32, #tpu.memory_space<vmem>>, vector<1x16x1xf32>
    %598 = vector.shape_cast %597 : vector<1x16x1xf32> to vector<16x1xf32>
    %599 = vector.broadcast %598 : vector<16x1xf32> to vector<16x256xf32>
    %600 = arith.addf %596, %599 : vector<16x256xf32>
    %cst_440 = arith.constant 0.000000e+00 : f32
    %601 = vector.broadcast %cst_440 : f32 to vector<16x256xf32>
    %602 = arith.maximumf %600, %601 : vector<16x256xf32>
    %c0_441 = arith.constant 0 : index
    %c0_442 = arith.constant 0 : index
    %603 = vector.load %arg5[%c0_441, %c0_442] : memref<9x16xf32, #tpu.memory_space<vmem>>, vector<9x16xf32>
    %cst_443 = arith.constant dense<0.000000e+00> : vector<9x256xf32>
    %604 = tpu.matmul %603, %602, %cst_443 {dimension_numbers = #tpu.dot_dimension_numbers<[1], [0], [0], [1], [0, 0, 1, 1], [], []>} : vector<9x16xf32>, vector<16x256xf32>, vector<9x256xf32> -> vector<9x256xf32>
    %605 = vector.extract_strided_slice %604 {offsets = [0, 0], sizes = [1, 256], strides = [1, 1]} : vector<9x256xf32> to vector<1x256xf32>
    %c17_i32_444 = arith.constant 17 : i32
    %606 = tpu.dynamic_rotate %605 by %c17_i32_444 dim 1 : vector<1x256xf32>, i32 -> vector<1x256xf32>
    %c0_445 = arith.constant 0 : index
    %c0_446 = arith.constant 0 : index
    %c0_447 = arith.constant 0 : index
    %607 = vector.load %arg6[%c0_445, %c0_446, %c0_447] : memref<9x1x256xf32, #tpu.memory_space<vmem>>, vector<1x1x256xf32>
    %608 = vector.shape_cast %607 : vector<1x1x256xf32> to vector<1x256xf32>
    %609 = arith.mulf %606, %608 : vector<1x256xf32>
    %610 = vector.extract_strided_slice %604 {offsets = [1, 0], sizes = [1, 256], strides = [1, 1]} : vector<9x256xf32> to vector<1x256xf32>
    %c16_i32_448 = arith.constant 16 : i32
    %611 = tpu.dynamic_rotate %610 by %c16_i32_448 dim 1 : vector<1x256xf32>, i32 -> vector<1x256xf32>
    %c1_449 = arith.constant 1 : index
    %c0_450 = arith.constant 0 : index
    %c0_451 = arith.constant 0 : index
    %612 = vector.load %arg6[%c1_449, %c0_450, %c0_451] : memref<9x1x256xf32, #tpu.memory_space<vmem>>, vector<1x1x256xf32>
    %613 = vector.shape_cast %612 : vector<1x1x256xf32> to vector<1x256xf32>
    %614 = arith.mulf %611, %613 : vector<1x256xf32>
    %615 = arith.addf %609, %614 : vector<1x256xf32>
    %616 = vector.extract_strided_slice %604 {offsets = [2, 0], sizes = [1, 256], strides = [1, 1]} : vector<9x256xf32> to vector<1x256xf32>
    %c15_i32_452 = arith.constant 15 : i32
    %617 = tpu.dynamic_rotate %616 by %c15_i32_452 dim 1 : vector<1x256xf32>, i32 -> vector<1x256xf32>
    %c2_453 = arith.constant 2 : index
    %c0_454 = arith.constant 0 : index
    %c0_455 = arith.constant 0 : index
    %618 = vector.load %arg6[%c2_453, %c0_454, %c0_455] : memref<9x1x256xf32, #tpu.memory_space<vmem>>, vector<1x1x256xf32>
    %619 = vector.shape_cast %618 : vector<1x1x256xf32> to vector<1x256xf32>
    %620 = arith.mulf %617, %619 : vector<1x256xf32>
    %621 = arith.addf %615, %620 : vector<1x256xf32>
    %622 = vector.extract_strided_slice %604 {offsets = [3, 0], sizes = [1, 256], strides = [1, 1]} : vector<9x256xf32> to vector<1x256xf32>
    %c1_i32_456 = arith.constant 1 : i32
    %623 = tpu.dynamic_rotate %622 by %c1_i32_456 dim 1 : vector<1x256xf32>, i32 -> vector<1x256xf32>
    %c3_457 = arith.constant 3 : index
    %c0_458 = arith.constant 0 : index
    %c0_459 = arith.constant 0 : index
    %624 = vector.load %arg6[%c3_457, %c0_458, %c0_459] : memref<9x1x256xf32, #tpu.memory_space<vmem>>, vector<1x1x256xf32>
    %625 = vector.shape_cast %624 : vector<1x1x256xf32> to vector<1x256xf32>
    %626 = arith.mulf %623, %625 : vector<1x256xf32>
    %627 = arith.addf %621, %626 : vector<1x256xf32>
    %628 = vector.extract_strided_slice %604 {offsets = [4, 0], sizes = [1, 256], strides = [1, 1]} : vector<9x256xf32> to vector<1x256xf32>
    %629 = arith.addf %627, %628 : vector<1x256xf32>
    %630 = vector.extract_strided_slice %604 {offsets = [5, 0], sizes = [1, 256], strides = [1, 1]} : vector<9x256xf32> to vector<1x256xf32>
    %c255_i32_460 = arith.constant 255 : i32
    %631 = tpu.dynamic_rotate %630 by %c255_i32_460 dim 1 : vector<1x256xf32>, i32 -> vector<1x256xf32>
    %c5_461 = arith.constant 5 : index
    %c0_462 = arith.constant 0 : index
    %c0_463 = arith.constant 0 : index
    %632 = vector.load %arg6[%c5_461, %c0_462, %c0_463] : memref<9x1x256xf32, #tpu.memory_space<vmem>>, vector<1x1x256xf32>
    %633 = vector.shape_cast %632 : vector<1x1x256xf32> to vector<1x256xf32>
    %634 = arith.mulf %631, %633 : vector<1x256xf32>
    %635 = arith.addf %629, %634 : vector<1x256xf32>
    %636 = vector.extract_strided_slice %604 {offsets = [6, 0], sizes = [1, 256], strides = [1, 1]} : vector<9x256xf32> to vector<1x256xf32>
    %c241_i32_464 = arith.constant 241 : i32
    %637 = tpu.dynamic_rotate %636 by %c241_i32_464 dim 1 : vector<1x256xf32>, i32 -> vector<1x256xf32>
    %c6_465 = arith.constant 6 : index
    %c0_466 = arith.constant 0 : index
    %c0_467 = arith.constant 0 : index
    %638 = vector.load %arg6[%c6_465, %c0_466, %c0_467] : memref<9x1x256xf32, #tpu.memory_space<vmem>>, vector<1x1x256xf32>
    %639 = vector.shape_cast %638 : vector<1x1x256xf32> to vector<1x256xf32>
    %640 = arith.mulf %637, %639 : vector<1x256xf32>
    %641 = arith.addf %635, %640 : vector<1x256xf32>
    %642 = vector.extract_strided_slice %604 {offsets = [7, 0], sizes = [1, 256], strides = [1, 1]} : vector<9x256xf32> to vector<1x256xf32>
    %c240_i32_468 = arith.constant 240 : i32
    %643 = tpu.dynamic_rotate %642 by %c240_i32_468 dim 1 : vector<1x256xf32>, i32 -> vector<1x256xf32>
    %c7_469 = arith.constant 7 : index
    %c0_470 = arith.constant 0 : index
    %c0_471 = arith.constant 0 : index
    %644 = vector.load %arg6[%c7_469, %c0_470, %c0_471] : memref<9x1x256xf32, #tpu.memory_space<vmem>>, vector<1x1x256xf32>
    %645 = vector.shape_cast %644 : vector<1x1x256xf32> to vector<1x256xf32>
    %646 = arith.mulf %643, %645 : vector<1x256xf32>
    %647 = arith.addf %641, %646 : vector<1x256xf32>
    %648 = vector.extract_strided_slice %604 {offsets = [8, 0], sizes = [1, 256], strides = [1, 1]} : vector<9x256xf32> to vector<1x256xf32>
    %c239_i32_472 = arith.constant 239 : i32
    %649 = tpu.dynamic_rotate %648 by %c239_i32_472 dim 1 : vector<1x256xf32>, i32 -> vector<1x256xf32>
    %c8_473 = arith.constant 8 : index
    %c0_474 = arith.constant 0 : index
    %c0_475 = arith.constant 0 : index
    %650 = vector.load %arg6[%c8_473, %c0_474, %c0_475] : memref<9x1x256xf32, #tpu.memory_space<vmem>>, vector<1x1x256xf32>
    %651 = vector.shape_cast %650 : vector<1x1x256xf32> to vector<1x256xf32>
    %652 = arith.mulf %649, %651 : vector<1x256xf32>
    %653 = arith.addf %647, %652 : vector<1x256xf32>
    %c15 = arith.constant 15 : index
    %654 = memref.load %arg1[%c15] : memref<24xf32, #tpu.memory_space<smem>>
    %c16 = arith.constant 16 : index
    %655 = memref.load %arg1[%c16] : memref<24xf32, #tpu.memory_space<smem>>
    %c17 = arith.constant 17 : index
    %656 = memref.load %arg1[%c17] : memref<24xf32, #tpu.memory_space<smem>>
    %657 = vector.broadcast %654 : f32 to vector<1x256xf32>
    %658 = arith.mulf %657, %559 : vector<1x256xf32>
    %659 = vector.broadcast %655 : f32 to vector<1x256xf32>
    %660 = arith.mulf %659, %653 : vector<1x256xf32>
    %661 = arith.addf %658, %660 : vector<1x256xf32>
    %662 = vector.broadcast %656 : f32 to vector<1x256xf32>
    %663 = arith.addf %661, %662 : vector<1x256xf32>
    %c17_i32_476 = arith.constant 17 : i32
    %664 = tpu.dynamic_rotate %663 by %c17_i32_476 dim 1 : vector<1x256xf32>, i32 -> vector<1x256xf32>
    %c0_477 = arith.constant 0 : index
    %c0_478 = arith.constant 0 : index
    %c0_479 = arith.constant 0 : index
    %665 = vector.load %arg6[%c0_477, %c0_478, %c0_479] : memref<9x1x256xf32, #tpu.memory_space<vmem>>, vector<1x1x256xf32>
    %666 = vector.shape_cast %665 : vector<1x1x256xf32> to vector<1x256xf32>
    %667 = arith.mulf %664, %666 : vector<1x256xf32>
    %c16_i32_480 = arith.constant 16 : i32
    %668 = tpu.dynamic_rotate %663 by %c16_i32_480 dim 1 : vector<1x256xf32>, i32 -> vector<1x256xf32>
    %c1_481 = arith.constant 1 : index
    %c0_482 = arith.constant 0 : index
    %c0_483 = arith.constant 0 : index
    %669 = vector.load %arg6[%c1_481, %c0_482, %c0_483] : memref<9x1x256xf32, #tpu.memory_space<vmem>>, vector<1x1x256xf32>
    %670 = vector.shape_cast %669 : vector<1x1x256xf32> to vector<1x256xf32>
    %671 = arith.mulf %668, %670 : vector<1x256xf32>
    %c15_i32_484 = arith.constant 15 : i32
    %672 = tpu.dynamic_rotate %663 by %c15_i32_484 dim 1 : vector<1x256xf32>, i32 -> vector<1x256xf32>
    %c2_485 = arith.constant 2 : index
    %c0_486 = arith.constant 0 : index
    %c0_487 = arith.constant 0 : index
    %673 = vector.load %arg6[%c2_485, %c0_486, %c0_487] : memref<9x1x256xf32, #tpu.memory_space<vmem>>, vector<1x1x256xf32>
    %674 = vector.shape_cast %673 : vector<1x1x256xf32> to vector<1x256xf32>
    %675 = arith.mulf %672, %674 : vector<1x256xf32>
    %c1_i32_488 = arith.constant 1 : i32
    %676 = tpu.dynamic_rotate %663 by %c1_i32_488 dim 1 : vector<1x256xf32>, i32 -> vector<1x256xf32>
    %c3_489 = arith.constant 3 : index
    %c0_490 = arith.constant 0 : index
    %c0_491 = arith.constant 0 : index
    %677 = vector.load %arg6[%c3_489, %c0_490, %c0_491] : memref<9x1x256xf32, #tpu.memory_space<vmem>>, vector<1x1x256xf32>
    %678 = vector.shape_cast %677 : vector<1x1x256xf32> to vector<1x256xf32>
    %679 = arith.mulf %676, %678 : vector<1x256xf32>
    %c255_i32_492 = arith.constant 255 : i32
    %680 = tpu.dynamic_rotate %663 by %c255_i32_492 dim 1 : vector<1x256xf32>, i32 -> vector<1x256xf32>
    %c5_493 = arith.constant 5 : index
    %c0_494 = arith.constant 0 : index
    %c0_495 = arith.constant 0 : index
    %681 = vector.load %arg6[%c5_493, %c0_494, %c0_495] : memref<9x1x256xf32, #tpu.memory_space<vmem>>, vector<1x1x256xf32>
    %682 = vector.shape_cast %681 : vector<1x1x256xf32> to vector<1x256xf32>
    %683 = arith.mulf %680, %682 : vector<1x256xf32>
    %c241_i32_496 = arith.constant 241 : i32
    %684 = tpu.dynamic_rotate %663 by %c241_i32_496 dim 1 : vector<1x256xf32>, i32 -> vector<1x256xf32>
    %c6_497 = arith.constant 6 : index
    %c0_498 = arith.constant 0 : index
    %c0_499 = arith.constant 0 : index
    %685 = vector.load %arg6[%c6_497, %c0_498, %c0_499] : memref<9x1x256xf32, #tpu.memory_space<vmem>>, vector<1x1x256xf32>
    %686 = vector.shape_cast %685 : vector<1x1x256xf32> to vector<1x256xf32>
    %687 = arith.mulf %684, %686 : vector<1x256xf32>
    %c240_i32_500 = arith.constant 240 : i32
    %688 = tpu.dynamic_rotate %663 by %c240_i32_500 dim 1 : vector<1x256xf32>, i32 -> vector<1x256xf32>
    %c7_501 = arith.constant 7 : index
    %c0_502 = arith.constant 0 : index
    %c0_503 = arith.constant 0 : index
    %689 = vector.load %arg6[%c7_501, %c0_502, %c0_503] : memref<9x1x256xf32, #tpu.memory_space<vmem>>, vector<1x1x256xf32>
    %690 = vector.shape_cast %689 : vector<1x1x256xf32> to vector<1x256xf32>
    %691 = arith.mulf %688, %690 : vector<1x256xf32>
    %c239_i32_504 = arith.constant 239 : i32
    %692 = tpu.dynamic_rotate %663 by %c239_i32_504 dim 1 : vector<1x256xf32>, i32 -> vector<1x256xf32>
    %c8_505 = arith.constant 8 : index
    %c0_506 = arith.constant 0 : index
    %c0_507 = arith.constant 0 : index
    %693 = vector.load %arg6[%c8_505, %c0_506, %c0_507] : memref<9x1x256xf32, #tpu.memory_space<vmem>>, vector<1x1x256xf32>
    %694 = vector.shape_cast %693 : vector<1x1x256xf32> to vector<1x256xf32>
    %695 = arith.mulf %692, %694 : vector<1x256xf32>
    %696 = tpu.concatenate %667, %671, %675, %679, %663, %683, %687, %691, %695 in 0 : vector<1x256xf32>, vector<1x256xf32>, vector<1x256xf32>, vector<1x256xf32>, vector<1x256xf32>, vector<1x256xf32>, vector<1x256xf32>, vector<1x256xf32>, vector<1x256xf32> -> vector<9x256xf32>
    %697 = arith.truncf %696 : vector<9x256xf32> to vector<9x256xbf16>
    %c0_508 = arith.constant 0 : index
    %c0_509 = arith.constant 0 : index
    %698 = vector.load %arg3[%c0_508, %c0_509] : memref<16x9xbf16, #tpu.memory_space<vmem>>, vector<16x9xbf16>
    %cst_510 = arith.constant dense<0.000000e+00> : vector<16x256xf32>
    %699 = tpu.matmul %698, %697, %cst_510 {dimension_numbers = #tpu.dot_dimension_numbers<[1], [0], [0], [1], [0, 0, 1, 1], [], []>} : vector<16x9xbf16>, vector<9x256xbf16>, vector<16x256xf32> -> vector<16x256xf32>
    %700 = arith.addf %699, %37 : vector<16x256xf32>
    %c6_511 = arith.constant 6 : index
    %c0_512 = arith.constant 0 : index
    %c0_513 = arith.constant 0 : index
    %701 = vector.load %arg2[%c6_511, %c0_512, %c0_513] : memref<8x16x1xf32, #tpu.memory_space<vmem>>, vector<1x16x1xf32>
    %702 = vector.shape_cast %701 : vector<1x16x1xf32> to vector<16x1xf32>
    %703 = vector.broadcast %702 : vector<16x1xf32> to vector<16x256xf32>
    %704 = arith.addf %700, %703 : vector<16x256xf32>
    %cst_514 = arith.constant 0.000000e+00 : f32
    %705 = vector.broadcast %cst_514 : f32 to vector<16x256xf32>
    %706 = arith.maximumf %704, %705 : vector<16x256xf32>
    %c0_515 = arith.constant 0 : index
    %c0_516 = arith.constant 0 : index
    %707 = vector.load %arg5[%c0_515, %c0_516] : memref<9x16xf32, #tpu.memory_space<vmem>>, vector<9x16xf32>
    %cst_517 = arith.constant dense<0.000000e+00> : vector<9x256xf32>
    %708 = tpu.matmul %707, %706, %cst_517 {dimension_numbers = #tpu.dot_dimension_numbers<[1], [0], [0], [1], [0, 0, 1, 1], [], []>} : vector<9x16xf32>, vector<16x256xf32>, vector<9x256xf32> -> vector<9x256xf32>
    %709 = vector.extract_strided_slice %708 {offsets = [0, 0], sizes = [1, 256], strides = [1, 1]} : vector<9x256xf32> to vector<1x256xf32>
    %c17_i32_518 = arith.constant 17 : i32
    %710 = tpu.dynamic_rotate %709 by %c17_i32_518 dim 1 : vector<1x256xf32>, i32 -> vector<1x256xf32>
    %c0_519 = arith.constant 0 : index
    %c0_520 = arith.constant 0 : index
    %c0_521 = arith.constant 0 : index
    %711 = vector.load %arg6[%c0_519, %c0_520, %c0_521] : memref<9x1x256xf32, #tpu.memory_space<vmem>>, vector<1x1x256xf32>
    %712 = vector.shape_cast %711 : vector<1x1x256xf32> to vector<1x256xf32>
    %713 = arith.mulf %710, %712 : vector<1x256xf32>
    %714 = vector.extract_strided_slice %708 {offsets = [1, 0], sizes = [1, 256], strides = [1, 1]} : vector<9x256xf32> to vector<1x256xf32>
    %c16_i32_522 = arith.constant 16 : i32
    %715 = tpu.dynamic_rotate %714 by %c16_i32_522 dim 1 : vector<1x256xf32>, i32 -> vector<1x256xf32>
    %c1_523 = arith.constant 1 : index
    %c0_524 = arith.constant 0 : index
    %c0_525 = arith.constant 0 : index
    %716 = vector.load %arg6[%c1_523, %c0_524, %c0_525] : memref<9x1x256xf32, #tpu.memory_space<vmem>>, vector<1x1x256xf32>
    %717 = vector.shape_cast %716 : vector<1x1x256xf32> to vector<1x256xf32>
    %718 = arith.mulf %715, %717 : vector<1x256xf32>
    %719 = arith.addf %713, %718 : vector<1x256xf32>
    %720 = vector.extract_strided_slice %708 {offsets = [2, 0], sizes = [1, 256], strides = [1, 1]} : vector<9x256xf32> to vector<1x256xf32>
    %c15_i32_526 = arith.constant 15 : i32
    %721 = tpu.dynamic_rotate %720 by %c15_i32_526 dim 1 : vector<1x256xf32>, i32 -> vector<1x256xf32>
    %c2_527 = arith.constant 2 : index
    %c0_528 = arith.constant 0 : index
    %c0_529 = arith.constant 0 : index
    %722 = vector.load %arg6[%c2_527, %c0_528, %c0_529] : memref<9x1x256xf32, #tpu.memory_space<vmem>>, vector<1x1x256xf32>
    %723 = vector.shape_cast %722 : vector<1x1x256xf32> to vector<1x256xf32>
    %724 = arith.mulf %721, %723 : vector<1x256xf32>
    %725 = arith.addf %719, %724 : vector<1x256xf32>
    %726 = vector.extract_strided_slice %708 {offsets = [3, 0], sizes = [1, 256], strides = [1, 1]} : vector<9x256xf32> to vector<1x256xf32>
    %c1_i32_530 = arith.constant 1 : i32
    %727 = tpu.dynamic_rotate %726 by %c1_i32_530 dim 1 : vector<1x256xf32>, i32 -> vector<1x256xf32>
    %c3_531 = arith.constant 3 : index
    %c0_532 = arith.constant 0 : index
    %c0_533 = arith.constant 0 : index
    %728 = vector.load %arg6[%c3_531, %c0_532, %c0_533] : memref<9x1x256xf32, #tpu.memory_space<vmem>>, vector<1x1x256xf32>
    %729 = vector.shape_cast %728 : vector<1x1x256xf32> to vector<1x256xf32>
    %730 = arith.mulf %727, %729 : vector<1x256xf32>
    %731 = arith.addf %725, %730 : vector<1x256xf32>
    %732 = vector.extract_strided_slice %708 {offsets = [4, 0], sizes = [1, 256], strides = [1, 1]} : vector<9x256xf32> to vector<1x256xf32>
    %733 = arith.addf %731, %732 : vector<1x256xf32>
    %734 = vector.extract_strided_slice %708 {offsets = [5, 0], sizes = [1, 256], strides = [1, 1]} : vector<9x256xf32> to vector<1x256xf32>
    %c255_i32_534 = arith.constant 255 : i32
    %735 = tpu.dynamic_rotate %734 by %c255_i32_534 dim 1 : vector<1x256xf32>, i32 -> vector<1x256xf32>
    %c5_535 = arith.constant 5 : index
    %c0_536 = arith.constant 0 : index
    %c0_537 = arith.constant 0 : index
    %736 = vector.load %arg6[%c5_535, %c0_536, %c0_537] : memref<9x1x256xf32, #tpu.memory_space<vmem>>, vector<1x1x256xf32>
    %737 = vector.shape_cast %736 : vector<1x1x256xf32> to vector<1x256xf32>
    %738 = arith.mulf %735, %737 : vector<1x256xf32>
    %739 = arith.addf %733, %738 : vector<1x256xf32>
    %740 = vector.extract_strided_slice %708 {offsets = [6, 0], sizes = [1, 256], strides = [1, 1]} : vector<9x256xf32> to vector<1x256xf32>
    %c241_i32_538 = arith.constant 241 : i32
    %741 = tpu.dynamic_rotate %740 by %c241_i32_538 dim 1 : vector<1x256xf32>, i32 -> vector<1x256xf32>
    %c6_539 = arith.constant 6 : index
    %c0_540 = arith.constant 0 : index
    %c0_541 = arith.constant 0 : index
    %742 = vector.load %arg6[%c6_539, %c0_540, %c0_541] : memref<9x1x256xf32, #tpu.memory_space<vmem>>, vector<1x1x256xf32>
    %743 = vector.shape_cast %742 : vector<1x1x256xf32> to vector<1x256xf32>
    %744 = arith.mulf %741, %743 : vector<1x256xf32>
    %745 = arith.addf %739, %744 : vector<1x256xf32>
    %746 = vector.extract_strided_slice %708 {offsets = [7, 0], sizes = [1, 256], strides = [1, 1]} : vector<9x256xf32> to vector<1x256xf32>
    %c240_i32_542 = arith.constant 240 : i32
    %747 = tpu.dynamic_rotate %746 by %c240_i32_542 dim 1 : vector<1x256xf32>, i32 -> vector<1x256xf32>
    %c7_543 = arith.constant 7 : index
    %c0_544 = arith.constant 0 : index
    %c0_545 = arith.constant 0 : index
    %748 = vector.load %arg6[%c7_543, %c0_544, %c0_545] : memref<9x1x256xf32, #tpu.memory_space<vmem>>, vector<1x1x256xf32>
    %749 = vector.shape_cast %748 : vector<1x1x256xf32> to vector<1x256xf32>
    %750 = arith.mulf %747, %749 : vector<1x256xf32>
    %751 = arith.addf %745, %750 : vector<1x256xf32>
    %752 = vector.extract_strided_slice %708 {offsets = [8, 0], sizes = [1, 256], strides = [1, 1]} : vector<9x256xf32> to vector<1x256xf32>
    %c239_i32_546 = arith.constant 239 : i32
    %753 = tpu.dynamic_rotate %752 by %c239_i32_546 dim 1 : vector<1x256xf32>, i32 -> vector<1x256xf32>
    %c8_547 = arith.constant 8 : index
    %c0_548 = arith.constant 0 : index
    %c0_549 = arith.constant 0 : index
    %754 = vector.load %arg6[%c8_547, %c0_548, %c0_549] : memref<9x1x256xf32, #tpu.memory_space<vmem>>, vector<1x1x256xf32>
    %755 = vector.shape_cast %754 : vector<1x1x256xf32> to vector<1x256xf32>
    %756 = arith.mulf %753, %755 : vector<1x256xf32>
    %757 = arith.addf %751, %756 : vector<1x256xf32>
    %c18 = arith.constant 18 : index
    %758 = memref.load %arg1[%c18] : memref<24xf32, #tpu.memory_space<smem>>
    %c19 = arith.constant 19 : index
    %759 = memref.load %arg1[%c19] : memref<24xf32, #tpu.memory_space<smem>>
    %c20 = arith.constant 20 : index
    %760 = memref.load %arg1[%c20] : memref<24xf32, #tpu.memory_space<smem>>
    %761 = vector.broadcast %758 : f32 to vector<1x256xf32>
    %762 = arith.mulf %761, %663 : vector<1x256xf32>
    %763 = vector.broadcast %759 : f32 to vector<1x256xf32>
    %764 = arith.mulf %763, %757 : vector<1x256xf32>
    %765 = arith.addf %762, %764 : vector<1x256xf32>
    %766 = vector.broadcast %760 : f32 to vector<1x256xf32>
    %767 = arith.addf %765, %766 : vector<1x256xf32>
    %c17_i32_550 = arith.constant 17 : i32
    %768 = tpu.dynamic_rotate %767 by %c17_i32_550 dim 1 : vector<1x256xf32>, i32 -> vector<1x256xf32>
    %c0_551 = arith.constant 0 : index
    %c0_552 = arith.constant 0 : index
    %c0_553 = arith.constant 0 : index
    %769 = vector.load %arg6[%c0_551, %c0_552, %c0_553] : memref<9x1x256xf32, #tpu.memory_space<vmem>>, vector<1x1x256xf32>
    %770 = vector.shape_cast %769 : vector<1x1x256xf32> to vector<1x256xf32>
    %771 = arith.mulf %768, %770 : vector<1x256xf32>
    %c16_i32_554 = arith.constant 16 : i32
    %772 = tpu.dynamic_rotate %767 by %c16_i32_554 dim 1 : vector<1x256xf32>, i32 -> vector<1x256xf32>
    %c1_555 = arith.constant 1 : index
    %c0_556 = arith.constant 0 : index
    %c0_557 = arith.constant 0 : index
    %773 = vector.load %arg6[%c1_555, %c0_556, %c0_557] : memref<9x1x256xf32, #tpu.memory_space<vmem>>, vector<1x1x256xf32>
    %774 = vector.shape_cast %773 : vector<1x1x256xf32> to vector<1x256xf32>
    %775 = arith.mulf %772, %774 : vector<1x256xf32>
    %c15_i32_558 = arith.constant 15 : i32
    %776 = tpu.dynamic_rotate %767 by %c15_i32_558 dim 1 : vector<1x256xf32>, i32 -> vector<1x256xf32>
    %c2_559 = arith.constant 2 : index
    %c0_560 = arith.constant 0 : index
    %c0_561 = arith.constant 0 : index
    %777 = vector.load %arg6[%c2_559, %c0_560, %c0_561] : memref<9x1x256xf32, #tpu.memory_space<vmem>>, vector<1x1x256xf32>
    %778 = vector.shape_cast %777 : vector<1x1x256xf32> to vector<1x256xf32>
    %779 = arith.mulf %776, %778 : vector<1x256xf32>
    %c1_i32_562 = arith.constant 1 : i32
    %780 = tpu.dynamic_rotate %767 by %c1_i32_562 dim 1 : vector<1x256xf32>, i32 -> vector<1x256xf32>
    %c3_563 = arith.constant 3 : index
    %c0_564 = arith.constant 0 : index
    %c0_565 = arith.constant 0 : index
    %781 = vector.load %arg6[%c3_563, %c0_564, %c0_565] : memref<9x1x256xf32, #tpu.memory_space<vmem>>, vector<1x1x256xf32>
    %782 = vector.shape_cast %781 : vector<1x1x256xf32> to vector<1x256xf32>
    %783 = arith.mulf %780, %782 : vector<1x256xf32>
    %c255_i32_566 = arith.constant 255 : i32
    %784 = tpu.dynamic_rotate %767 by %c255_i32_566 dim 1 : vector<1x256xf32>, i32 -> vector<1x256xf32>
    %c5_567 = arith.constant 5 : index
    %c0_568 = arith.constant 0 : index
    %c0_569 = arith.constant 0 : index
    %785 = vector.load %arg6[%c5_567, %c0_568, %c0_569] : memref<9x1x256xf32, #tpu.memory_space<vmem>>, vector<1x1x256xf32>
    %786 = vector.shape_cast %785 : vector<1x1x256xf32> to vector<1x256xf32>
    %787 = arith.mulf %784, %786 : vector<1x256xf32>
    %c241_i32_570 = arith.constant 241 : i32
    %788 = tpu.dynamic_rotate %767 by %c241_i32_570 dim 1 : vector<1x256xf32>, i32 -> vector<1x256xf32>
    %c6_571 = arith.constant 6 : index
    %c0_572 = arith.constant 0 : index
    %c0_573 = arith.constant 0 : index
    %789 = vector.load %arg6[%c6_571, %c0_572, %c0_573] : memref<9x1x256xf32, #tpu.memory_space<vmem>>, vector<1x1x256xf32>
    %790 = vector.shape_cast %789 : vector<1x1x256xf32> to vector<1x256xf32>
    %791 = arith.mulf %788, %790 : vector<1x256xf32>
    %c240_i32_574 = arith.constant 240 : i32
    %792 = tpu.dynamic_rotate %767 by %c240_i32_574 dim 1 : vector<1x256xf32>, i32 -> vector<1x256xf32>
    %c7_575 = arith.constant 7 : index
    %c0_576 = arith.constant 0 : index
    %c0_577 = arith.constant 0 : index
    %793 = vector.load %arg6[%c7_575, %c0_576, %c0_577] : memref<9x1x256xf32, #tpu.memory_space<vmem>>, vector<1x1x256xf32>
    %794 = vector.shape_cast %793 : vector<1x1x256xf32> to vector<1x256xf32>
    %795 = arith.mulf %792, %794 : vector<1x256xf32>
    %c239_i32_578 = arith.constant 239 : i32
    %796 = tpu.dynamic_rotate %767 by %c239_i32_578 dim 1 : vector<1x256xf32>, i32 -> vector<1x256xf32>
    %c8_579 = arith.constant 8 : index
    %c0_580 = arith.constant 0 : index
    %c0_581 = arith.constant 0 : index
    %797 = vector.load %arg6[%c8_579, %c0_580, %c0_581] : memref<9x1x256xf32, #tpu.memory_space<vmem>>, vector<1x1x256xf32>
    %798 = vector.shape_cast %797 : vector<1x1x256xf32> to vector<1x256xf32>
    %799 = arith.mulf %796, %798 : vector<1x256xf32>
    %800 = tpu.concatenate %771, %775, %779, %783, %767, %787, %791, %795, %799 in 0 : vector<1x256xf32>, vector<1x256xf32>, vector<1x256xf32>, vector<1x256xf32>, vector<1x256xf32>, vector<1x256xf32>, vector<1x256xf32>, vector<1x256xf32>, vector<1x256xf32> -> vector<9x256xf32>
    %801 = arith.truncf %800 : vector<9x256xf32> to vector<9x256xbf16>
    %c0_582 = arith.constant 0 : index
    %c0_583 = arith.constant 0 : index
    %802 = vector.load %arg3[%c0_582, %c0_583] : memref<16x9xbf16, #tpu.memory_space<vmem>>, vector<16x9xbf16>
    %cst_584 = arith.constant dense<0.000000e+00> : vector<16x256xf32>
    %803 = tpu.matmul %802, %801, %cst_584 {dimension_numbers = #tpu.dot_dimension_numbers<[1], [0], [0], [1], [0, 0, 1, 1], [], []>} : vector<16x9xbf16>, vector<9x256xbf16>, vector<16x256xf32> -> vector<16x256xf32>
    %804 = arith.addf %803, %37 : vector<16x256xf32>
    %c7_585 = arith.constant 7 : index
    %c0_586 = arith.constant 0 : index
    %c0_587 = arith.constant 0 : index
    %805 = vector.load %arg2[%c7_585, %c0_586, %c0_587] : memref<8x16x1xf32, #tpu.memory_space<vmem>>, vector<1x16x1xf32>
    %806 = vector.shape_cast %805 : vector<1x16x1xf32> to vector<16x1xf32>
    %807 = vector.broadcast %806 : vector<16x1xf32> to vector<16x256xf32>
    %808 = arith.addf %804, %807 : vector<16x256xf32>
    %cst_588 = arith.constant 0.000000e+00 : f32
    %809 = vector.broadcast %cst_588 : f32 to vector<16x256xf32>
    %810 = arith.maximumf %808, %809 : vector<16x256xf32>
    %c0_589 = arith.constant 0 : index
    %c0_590 = arith.constant 0 : index
    %811 = vector.load %arg5[%c0_589, %c0_590] : memref<9x16xf32, #tpu.memory_space<vmem>>, vector<9x16xf32>
    %cst_591 = arith.constant dense<0.000000e+00> : vector<9x256xf32>
    %812 = tpu.matmul %811, %810, %cst_591 {dimension_numbers = #tpu.dot_dimension_numbers<[1], [0], [0], [1], [0, 0, 1, 1], [], []>} : vector<9x16xf32>, vector<16x256xf32>, vector<9x256xf32> -> vector<9x256xf32>
    %813 = vector.extract_strided_slice %812 {offsets = [0, 0], sizes = [1, 256], strides = [1, 1]} : vector<9x256xf32> to vector<1x256xf32>
    %c17_i32_592 = arith.constant 17 : i32
    %814 = tpu.dynamic_rotate %813 by %c17_i32_592 dim 1 : vector<1x256xf32>, i32 -> vector<1x256xf32>
    %c0_593 = arith.constant 0 : index
    %c0_594 = arith.constant 0 : index
    %c0_595 = arith.constant 0 : index
    %815 = vector.load %arg6[%c0_593, %c0_594, %c0_595] : memref<9x1x256xf32, #tpu.memory_space<vmem>>, vector<1x1x256xf32>
    %816 = vector.shape_cast %815 : vector<1x1x256xf32> to vector<1x256xf32>
    %817 = arith.mulf %814, %816 : vector<1x256xf32>
    %818 = vector.extract_strided_slice %812 {offsets = [1, 0], sizes = [1, 256], strides = [1, 1]} : vector<9x256xf32> to vector<1x256xf32>
    %c16_i32_596 = arith.constant 16 : i32
    %819 = tpu.dynamic_rotate %818 by %c16_i32_596 dim 1 : vector<1x256xf32>, i32 -> vector<1x256xf32>
    %c1_597 = arith.constant 1 : index
    %c0_598 = arith.constant 0 : index
    %c0_599 = arith.constant 0 : index
    %820 = vector.load %arg6[%c1_597, %c0_598, %c0_599] : memref<9x1x256xf32, #tpu.memory_space<vmem>>, vector<1x1x256xf32>
    %821 = vector.shape_cast %820 : vector<1x1x256xf32> to vector<1x256xf32>
    %822 = arith.mulf %819, %821 : vector<1x256xf32>
    %823 = arith.addf %817, %822 : vector<1x256xf32>
    %824 = vector.extract_strided_slice %812 {offsets = [2, 0], sizes = [1, 256], strides = [1, 1]} : vector<9x256xf32> to vector<1x256xf32>
    %c15_i32_600 = arith.constant 15 : i32
    %825 = tpu.dynamic_rotate %824 by %c15_i32_600 dim 1 : vector<1x256xf32>, i32 -> vector<1x256xf32>
    %c2_601 = arith.constant 2 : index
    %c0_602 = arith.constant 0 : index
    %c0_603 = arith.constant 0 : index
    %826 = vector.load %arg6[%c2_601, %c0_602, %c0_603] : memref<9x1x256xf32, #tpu.memory_space<vmem>>, vector<1x1x256xf32>
    %827 = vector.shape_cast %826 : vector<1x1x256xf32> to vector<1x256xf32>
    %828 = arith.mulf %825, %827 : vector<1x256xf32>
    %829 = arith.addf %823, %828 : vector<1x256xf32>
    %830 = vector.extract_strided_slice %812 {offsets = [3, 0], sizes = [1, 256], strides = [1, 1]} : vector<9x256xf32> to vector<1x256xf32>
    %c1_i32_604 = arith.constant 1 : i32
    %831 = tpu.dynamic_rotate %830 by %c1_i32_604 dim 1 : vector<1x256xf32>, i32 -> vector<1x256xf32>
    %c3_605 = arith.constant 3 : index
    %c0_606 = arith.constant 0 : index
    %c0_607 = arith.constant 0 : index
    %832 = vector.load %arg6[%c3_605, %c0_606, %c0_607] : memref<9x1x256xf32, #tpu.memory_space<vmem>>, vector<1x1x256xf32>
    %833 = vector.shape_cast %832 : vector<1x1x256xf32> to vector<1x256xf32>
    %834 = arith.mulf %831, %833 : vector<1x256xf32>
    %835 = arith.addf %829, %834 : vector<1x256xf32>
    %836 = vector.extract_strided_slice %812 {offsets = [4, 0], sizes = [1, 256], strides = [1, 1]} : vector<9x256xf32> to vector<1x256xf32>
    %837 = arith.addf %835, %836 : vector<1x256xf32>
    %838 = vector.extract_strided_slice %812 {offsets = [5, 0], sizes = [1, 256], strides = [1, 1]} : vector<9x256xf32> to vector<1x256xf32>
    %c255_i32_608 = arith.constant 255 : i32
    %839 = tpu.dynamic_rotate %838 by %c255_i32_608 dim 1 : vector<1x256xf32>, i32 -> vector<1x256xf32>
    %c5_609 = arith.constant 5 : index
    %c0_610 = arith.constant 0 : index
    %c0_611 = arith.constant 0 : index
    %840 = vector.load %arg6[%c5_609, %c0_610, %c0_611] : memref<9x1x256xf32, #tpu.memory_space<vmem>>, vector<1x1x256xf32>
    %841 = vector.shape_cast %840 : vector<1x1x256xf32> to vector<1x256xf32>
    %842 = arith.mulf %839, %841 : vector<1x256xf32>
    %843 = arith.addf %837, %842 : vector<1x256xf32>
    %844 = vector.extract_strided_slice %812 {offsets = [6, 0], sizes = [1, 256], strides = [1, 1]} : vector<9x256xf32> to vector<1x256xf32>
    %c241_i32_612 = arith.constant 241 : i32
    %845 = tpu.dynamic_rotate %844 by %c241_i32_612 dim 1 : vector<1x256xf32>, i32 -> vector<1x256xf32>
    %c6_613 = arith.constant 6 : index
    %c0_614 = arith.constant 0 : index
    %c0_615 = arith.constant 0 : index
    %846 = vector.load %arg6[%c6_613, %c0_614, %c0_615] : memref<9x1x256xf32, #tpu.memory_space<vmem>>, vector<1x1x256xf32>
    %847 = vector.shape_cast %846 : vector<1x1x256xf32> to vector<1x256xf32>
    %848 = arith.mulf %845, %847 : vector<1x256xf32>
    %849 = arith.addf %843, %848 : vector<1x256xf32>
    %850 = vector.extract_strided_slice %812 {offsets = [7, 0], sizes = [1, 256], strides = [1, 1]} : vector<9x256xf32> to vector<1x256xf32>
    %c240_i32_616 = arith.constant 240 : i32
    %851 = tpu.dynamic_rotate %850 by %c240_i32_616 dim 1 : vector<1x256xf32>, i32 -> vector<1x256xf32>
    %c7_617 = arith.constant 7 : index
    %c0_618 = arith.constant 0 : index
    %c0_619 = arith.constant 0 : index
    %852 = vector.load %arg6[%c7_617, %c0_618, %c0_619] : memref<9x1x256xf32, #tpu.memory_space<vmem>>, vector<1x1x256xf32>
    %853 = vector.shape_cast %852 : vector<1x1x256xf32> to vector<1x256xf32>
    %854 = arith.mulf %851, %853 : vector<1x256xf32>
    %855 = arith.addf %849, %854 : vector<1x256xf32>
    %856 = vector.extract_strided_slice %812 {offsets = [8, 0], sizes = [1, 256], strides = [1, 1]} : vector<9x256xf32> to vector<1x256xf32>
    %c239_i32_620 = arith.constant 239 : i32
    %857 = tpu.dynamic_rotate %856 by %c239_i32_620 dim 1 : vector<1x256xf32>, i32 -> vector<1x256xf32>
    %c8_621 = arith.constant 8 : index
    %c0_622 = arith.constant 0 : index
    %c0_623 = arith.constant 0 : index
    %858 = vector.load %arg6[%c8_621, %c0_622, %c0_623] : memref<9x1x256xf32, #tpu.memory_space<vmem>>, vector<1x1x256xf32>
    %859 = vector.shape_cast %858 : vector<1x1x256xf32> to vector<1x256xf32>
    %860 = arith.mulf %857, %859 : vector<1x256xf32>
    %861 = arith.addf %855, %860 : vector<1x256xf32>
    %c21 = arith.constant 21 : index
    %862 = memref.load %arg1[%c21] : memref<24xf32, #tpu.memory_space<smem>>
    %c22 = arith.constant 22 : index
    %863 = memref.load %arg1[%c22] : memref<24xf32, #tpu.memory_space<smem>>
    %c23 = arith.constant 23 : index
    %864 = memref.load %arg1[%c23] : memref<24xf32, #tpu.memory_space<smem>>
    %865 = vector.broadcast %862 : f32 to vector<1x256xf32>
    %866 = arith.mulf %865, %767 : vector<1x256xf32>
    %867 = vector.broadcast %863 : f32 to vector<1x256xf32>
    %868 = arith.mulf %867, %861 : vector<1x256xf32>
    %869 = arith.addf %866, %868 : vector<1x256xf32>
    %870 = vector.broadcast %864 : f32 to vector<1x256xf32>
    %871 = arith.addf %869, %870 : vector<1x256xf32>
    %c0_624 = arith.constant 0 : index
    %c0_625 = arith.constant 0 : index
    %c0_626 = arith.constant 0 : index
    %872 = vector.load %arg9[%c0_624, %c0_625, %c0_626] : memref<1x1x256xf32, #tpu.memory_space<vmem>>, vector<1x1x256xf32>
    %873 = vector.shape_cast %872 : vector<1x1x256xf32> to vector<1x256xf32>
    %874 = vector.shape_cast %871 : vector<1x256xf32> to vector<1x1x256xf32>
    tpu.vector_store %arg9[%c0_624, %c0_625, %c0_626], %874 {strides = array<i32>} : memref<1x1x256xf32, #tpu.memory_space<vmem>>, vector<1x1x256xf32>,
    return
  }
  func.func @transform_0(%arg0: i32) -> i32 {
    %c0_i32 = arith.constant 0 : i32
    %c0_i32_0 = arith.constant 0 : i32
    return %c0_i32 : i32
  }
  func.func @transform_1(%arg0: i32) -> (i32, i32, i32) {
    %c0_i32 = arith.constant 0 : i32
    %c0_i32_0 = arith.constant 0 : i32
    %c0_i32_1 = arith.constant 0 : i32
    %c0_i32_2 = arith.constant 0 : i32
    return %c0_i32, %c0_i32_0, %c0_i32_1 : i32, i32, i32
  }
  func.func @transform_2(%arg0: i32) -> (i32, i32) {
    %c0_i32 = arith.constant 0 : i32
    %c0_i32_0 = arith.constant 0 : i32
    %c0_i32_1 = arith.constant 0 : i32
    return %c0_i32, %c0_i32_0 : i32, i32
  }
  func.func @transform_3(%arg0: i32) -> (i32, i32) {
    %c0_i32 = arith.constant 0 : i32
    %c0_i32_0 = arith.constant 0 : i32
    %c0_i32_1 = arith.constant 0 : i32
    return %c0_i32, %c0_i32_0 : i32, i32
  }
  func.func @transform_4(%arg0: i32) -> (i32, i32) {
    %c0_i32 = arith.constant 0 : i32
    %c0_i32_0 = arith.constant 0 : i32
    %c0_i32_1 = arith.constant 0 : i32
    return %c0_i32, %c0_i32_0 : i32, i32
  }
  func.func @transform_5(%arg0: i32) -> (i32, i32, i32) {
    %c0_i32 = arith.constant 0 : i32
    %c0_i32_0 = arith.constant 0 : i32
    %c0_i32_1 = arith.constant 0 : i32
    %c0_i32_2 = arith.constant 0 : i32
    return %c0_i32, %c0_i32_0, %c0_i32_1 : i32, i32, i32
  }
  func.func @transform_6(%arg0: i32) -> (i32, i32, i32) {
    %c0_i32 = arith.constant 0 : i32
    %c0_i32_0 = arith.constant 0 : i32
    %c0_i32_1 = arith.constant 0 : i32
    return %arg0, %c0_i32, %c0_i32_0 : i32, i32, i32
  }
  func.func @transform_7(%arg0: i32) -> (i32, i32, i32) {
    %c0_i32 = arith.constant 0 : i32
    %c0_i32_0 = arith.constant 0 : i32
    %c0_i32_1 = arith.constant 0 : i32
    return %arg0, %c0_i32, %c0_i32_0 : i32, i32, i32
  }
  func.func @transform_8(%arg0: i32) -> (i32, i32, i32) {
    %c0_i32 = arith.constant 0 : i32
    %c0_i32_0 = arith.constant 0 : i32
    %c0_i32_1 = arith.constant 0 : i32
    return %arg0, %c0_i32, %c0_i32_0 : i32, i32, i32
  }
}

</mosaic_0001>

<llo_original>
// kernel: _ddim_sample_jit.1
$region0: #{_ddim_sample_jit.1}
  #allocation0 [shape = 'u32[]', space=smem, size = 0x4, offset = 0x4, fixed_abs, tag = 'smem constant byte address 0x4 - core index']
  #allocation1 [shape = 'u32[144,128]{1,0:T(1,128)}', space=vmem, size = 0x12000, scoped, tag = 'internal scratch']
  %s0 = inlined_call_operand.vmem [shape: f32[24], index: 0, kind: input, shape index: {}]
  %s1 = inlined_call_operand.vmem [shape: f32[8,16,1], index: 1, kind: input, shape index: {}]
  %s2 = inlined_call_operand.vmem [shape: bf16[16,9], index: 2, kind: input, shape index: {}]
  %s3 = inlined_call_operand.vmem [shape: bf16[16,9], index: 3, kind: input, shape index: {}]
  %s4 = inlined_call_operand.vmem [shape: f32[9,16], index: 4, kind: input, shape index: {}]
  %s5 = inlined_call_operand.vmem [shape: f32[9,1,256], index: 5, kind: input, shape index: {}]
  %s6 = inlined_call_operand.vmem [shape: f32[2,1,256], index: 6, kind: input, shape index: {}]
  %s7 = inlined_call_operand.vmem [shape: f32[2,1,256], index: 7, kind: input, shape index: {}]
  %s8 = inlined_call_operand.vmem [shape: f32[2,1,256], index: 8, kind: output, shape index: {}]
  %s9 = sld [smem:[#allocation0]]
  $region69: #{_ddim_sample_jit.1} parent=0
    _
  %s11 = ssub.s32 1, %s9
  %s12 = scalar_select 0, %s11, %s9
  $region1: #{_ddim_sample_jit.1} parent=0
    #allocation2 [shape = 'u8[512]{0}', space=smem, size = 0x200, scoped, tag = 'input window, operand 0, single buffered']
    #allocation3 [shape = 's32[2]{0}', space=sflag, size = 0x8, scoped, tag = 'scoped memory for _ddim_sample_jit.1']
    %13 = vsyncpa [#allocation3], 0
    loop: start=0, step=1, limit=4
    $region2: #{_ddim_sample_jit.1} parent=1 // loop_pre_header
      _
    $region3: #{_ddim_sample_jit.1} parent=1 // loop_header
      %s15 = sphi 0, %s19
      %p16 = scmp.ge.s32.totalorder %s15, 4
      %s23 = sphi 0, %s23
      %s25 = sphi 0, %s23
      %s26 = sphi 0, %s25
      %s40 = sphi 0, %s26
      %s44 = sphi 0, %s44
      %s46 = sphi 0, %s44
      %s47 = sphi 0, %s46
      %s61 = sphi 0, %s47
      %s65 = sphi 0, %s65
      %s67 = sphi 0, %s65
      %s68 = sphi 0, %s67
      %s82 = sphi 0, %s68
      %s86 = sphi 0, %s86
      %s88 = sphi 0, %s86
      %s89 = sphi 0, %s88
      %s103 = sphi 0, %s89
      %s107 = sphi 0, %s107
      %s109 = sphi 0, %s107
      %s110 = sphi 0, %s109
      %s124 = sphi 0, %s110
      %s128 = sphi 0, %s128
      %s130 = sphi 0, %s128
      %s131 = sphi 0, %s130
      %s145 = sphi 0, %s131
      %s151 = sphi 0, %s153
      %s154 = sphi 0, %s151
      %s155 = sphi 0, %s154
      %s171 = sphi 0, %s155
      %s177 = sphi 0, %s179
      %s180 = sphi 0, %s177
      %s181 = sphi 0, %s180
      %s197 = sphi 0, %s181
      %s203 = sphi 0, %s205
      %s206 = sphi 0, %s203
      %s207 = sphi 0, %s206
      %s223 = sphi 0, %s207
    $region4: #{_ddim_sample_jit.1} parent=1 // loop_header_branch
      %18 = sbr.rel (%p16) target = $region8
    $region5: #{_ddim_sample_jit.1} parent=1 // loop_body
      %s20 = ssub.s32 %s15, 1
      %s21 = ssub.s32 %s15, 2
      %s22 = sadd.s32 %s15, 1
      %s24 = sadd.s32 %s23, 1
      %p27 = scmp.eq.s32.totalorder %s15, 1
      %p28 = scmp.ne.s32.totalorder %s23, %s25
      %p29 = scmp.eq.s32.totalorder %s15, 0
      %p30 = por %p28, %p29
      %p31 = scmp.ne.s32.totalorder %s23, %s25
      %p32 = scmp.eq.s32.totalorder %s20, 1
      %p33 = por %p31, %p32
      %p34 = scmp.ne.s32.totalorder %s25, %s26
      %p35 = scmp.eq.s32.totalorder %s20, 0
      %p36 = por %p34, %p35
      %p37 = scmp.ne.s32.totalorder %s25, %s26
      %p38 = scmp.eq.s32.totalorder %s21, 1
      %p39 = por %p37, %p38
      %p41 = scmp.ne.s32.totalorder %s26, %s40
      %p42 = scmp.eq.s32.totalorder %s21, 0
      %p43 = por %p41, %p42
      %s45 = sadd.s32 %s44, 1
      %p48 = scmp.eq.s32.totalorder %s15, 1
      %p49 = scmp.ne.s32.totalorder %s44, %s46
      %p50 = scmp.eq.s32.totalorder %s15, 0
      %p51 = por %p49, %p50
      %p52 = scmp.ne.s32.totalorder %s44, %s46
      %p53 = scmp.eq.s32.totalorder %s20, 1
      %p54 = por %p52, %p53
      %p55 = scmp.ne.s32.totalorder %s46, %s47
      %p56 = scmp.eq.s32.totalorder %s20, 0
      %p57 = por %p55, %p56
      %p58 = scmp.ne.s32.totalorder %s46, %s47
      %p59 = scmp.eq.s32.totalorder %s21, 1
      %p60 = por %p58, %p59
      %p62 = scmp.ne.s32.totalorder %s47, %s61
      %p63 = scmp.eq.s32.totalorder %s21, 0
      %p64 = por %p62, %p63
      %s66 = sadd.s32 %s65, 1
      %p69 = scmp.eq.s32.totalorder %s15, 1
      %p70 = scmp.ne.s32.totalorder %s65, %s67
      %p71 = scmp.eq.s32.totalorder %s15, 0
      %p72 = por %p70, %p71
      %p73 = scmp.ne.s32.totalorder %s65, %s67
      %p74 = scmp.eq.s32.totalorder %s20, 1
      %p75 = por %p73, %p74
      %p76 = scmp.ne.s32.totalorder %s67, %s68
      %p77 = scmp.eq.s32.totalorder %s20, 0
      %p78 = por %p76, %p77
      %p79 = scmp.ne.s32.totalorder %s67, %s68
      %p80 = scmp.eq.s32.totalorder %s21, 1
      %p81 = por %p79, %p80
      %p83 = scmp.ne.s32.totalorder %s68, %s82
      %p84 = scmp.eq.s32.totalorder %s21, 0
      %p85 = por %p83, %p84
      %s87 = sadd.s32 %s86, 1
      %p90 = scmp.eq.s32.totalorder %s15, 1
      %p91 = scmp.ne.s32.totalorder %s86, %s88
      %p92 = scmp.eq.s32.totalorder %s15, 0
      %p93 = por %p91, %p92
      %p94 = scmp.ne.s32.totalorder %s86, %s88
      %p95 = scmp.eq.s32.totalorder %s20, 1
      %p96 = por %p94, %p95
      %p97 = scmp.ne.s32.totalorder %s88, %s89
      %p98 = scmp.eq.s32.totalorder %s20, 0
      %p99 = por %p97, %p98
      %p100 = scmp.ne.s32.totalorder %s88, %s89
      %p101 = scmp.eq.s32.totalorder %s21, 1
      %p102 = por %p100, %p101
      %p104 = scmp.ne.s32.totalorder %s89, %s103
      %p105 = scmp.eq.s32.totalorder %s21, 0
      %p106 = por %p104, %p105
      %s108 = sadd.s32 %s107, 1
      %p111 = scmp.eq.s32.totalorder %s15, 1
      %p112 = scmp.ne.s32.totalorder %s107, %s109
      %p113 = scmp.eq.s32.totalorder %s15, 0
      %p114 = por %p112, %p113
      %p115 = scmp.ne.s32.totalorder %s107, %s109
      %p116 = scmp.eq.s32.totalorder %s20, 1
      %p117 = por %p115, %p116
      %p118 = scmp.ne.s32.totalorder %s109, %s110
      %p119 = scmp.eq.s32.totalorder %s20, 0
      %p120 = por %p118, %p119
      %p121 = scmp.ne.s32.totalorder %s109, %s110
      %p122 = scmp.eq.s32.totalorder %s21, 1
      %p123 = por %p121, %p122
      %p125 = scmp.ne.s32.totalorder %s110, %s124
      %p126 = scmp.eq.s32.totalorder %s21, 0
      %p127 = por %p125, %p126
      %s129 = sadd.s32 %s128, 1
      %p132 = scmp.eq.s32.totalorder %s15, 1
      %p133 = scmp.ne.s32.totalorder %s128, %s130
      %p134 = scmp.eq.s32.totalorder %s15, 0
      %p135 = por %p133, %p134
      %p136 = scmp.ne.s32.totalorder %s128, %s130
      %p137 = scmp.eq.s32.totalorder %s20, 1
      %p138 = por %p136, %p137
      %p139 = scmp.ne.s32.totalorder %s130, %s131
      %p140 = scmp.eq.s32.totalorder %s20, 0
      %p141 = por %p139, %p140
      %p142 = scmp.ne.s32.totalorder %s130, %s131
      %p143 = scmp.eq.s32.totalorder %s21, 1
      %p144 = por %p142, %p143
      %p146 = scmp.ne.s32.totalorder %s131, %s145
      %p147 = scmp.eq.s32.totalorder %s21, 0
      %p148 = por %p146, %p147
      %s149 = ssub.s32 %s15, %s22
      %p150 = scmp.eq.s32.totalorder %s149, 0
      %s152 = sadd.s32 %s151, 1
      %s153 = scalar_select %p150, %s151, %s152
      %p156 = pneg %p150
      %p157 = scmp.eq.s32.totalorder %s15, 1
      %p158 = por %p156, %p157
      %p159 = scmp.ne.s32.totalorder %s151, %s154
      %p160 = scmp.eq.s32.totalorder %s15, 0
      %p161 = por %p159, %p160
      %p162 = scmp.ne.s32.totalorder %s151, %s154
      %p163 = scmp.eq.s32.totalorder %s20, 1
      %p164 = por %p162, %p163
      %p165 = scmp.ne.s32.totalorder %s154, %s155
      %p166 = scmp.eq.s32.totalorder %s20, 0
      %p167 = por %p165, %p166
      %p168 = scmp.ne.s32.totalorder %s154, %s155
      %p169 = scmp.eq.s32.totalorder %s21, 1
      %p170 = por %p168, %p169
      %p172 = scmp.ne.s32.totalorder %s155, %s171
      %p173 = scmp.eq.s32.totalorder %s21, 0
      %p174 = por %p172, %p173
      %s175 = ssub.s32 %s15, %s22
      %p176 = scmp.eq.s32.totalorder %s175, 0
      %s178 = sadd.s32 %s177, 1
      %s179 = scalar_select %p176, %s177, %s178
      %p182 = pneg %p176
      %p183 = scmp.eq.s32.totalorder %s15, 1
      %p184 = por %p182, %p183
      %p185 = scmp.ne.s32.totalorder %s177, %s180
      %p186 = scmp.eq.s32.totalorder %s15, 0
      %p187 = por %p185, %p186
      %p188 = scmp.ne.s32.totalorder %s177, %s180
      %p189 = scmp.eq.s32.totalorder %s20, 1
      %p190 = por %p188, %p189
      %p191 = scmp.ne.s32.totalorder %s180, %s181
      %p192 = scmp.eq.s32.totalorder %s20, 0
      %p193 = por %p191, %p192
      %p194 = scmp.ne.s32.totalorder %s180, %s181
      %p195 = scmp.eq.s32.totalorder %s21, 1
      %p196 = por %p194, %p195
      %p198 = scmp.ne.s32.totalorder %s181, %s197
      %p199 = scmp.eq.s32.totalorder %s21, 0
      %p200 = por %p198, %p199
      %s201 = ssub.s32 %s15, %s22
      %p202 = scmp.eq.s32.totalorder %s201, 0
      %s204 = sadd.s32 %s203, 1
      %s205 = scalar_select %p202, %s203, %s204
      %p208 = pneg %p202
      %p209 = scmp.eq.s32.totalorder %s15, 1
      %p210 = por %p208, %p209
      %p211 = scmp.ne.s32.totalorder %s203, %s206
      %p212 = scmp.eq.s32.totalorder %s15, 0
      %p213 = por %p211, %p212
      %p214 = scmp.ne.s32.totalorder %s203, %s206
      %p215 = scmp.eq.s32.totalorder %s20, 1
      %p216 = por %p214, %p215
      %p217 = scmp.ne.s32.totalorder %s206, %s207
      %p218 = scmp.eq.s32.totalorder %s20, 0
      %p219 = por %p217, %p218
      %p220 = scmp.ne.s32.totalorder %s206, %s207
      %p221 = scmp.eq.s32.totalorder %s21, 1
      %p222 = por %p220, %p221
      %p224 = scmp.ne.s32.totalorder %s207, %s223
      %p225 = scmp.eq.s32.totalorder %s21, 0
      %p226 = por %p224, %p225
      %p227 = scmp.le.s32.totalorder 1, %s15
      %p228 = scmp.lt.s32.totalorder %s15, 3
      %p229 = pnand %p227, %p228
      %p230 = pneg %p229
      // Predicated region
      $region9: #{_ddim_sample_jit.1} parent=5 // pred_check
        _
      $region10: #{_ddim_sample_jit.1} parent=5 // pred_check_branch
        %232 = sbr.rel (%p229) target = $region12
      $region11: #{_ddim_sample_jit.1} parent=5 // pred_region
        %s233 = ssub.s32 %s15, 1
        // Predicated region
        $region13: #{_ddim_sample_jit.1} parent=11 // pred_check
          %p234 = pneg %p36
        $region14: #{_ddim_sample_jit.1} parent=11 // pred_check_branch
          %236 = sbr.rel (%p234) target = $region16
        $region15: #{_ddim_sample_jit.1} parent=11 // pred_region
          %s238 = ssub.s32 16, 16
          %239 = vsyncadd [#allocation3], %s238
          %s241 = sshll.u32 %s0, 4
          %s242 = int_to_ptr.vmem [resolvable:$true] %s241
          %244 = dma.vmem_to_smem %s242, 16, [#allocation2], [#allocation3]
        $region16: #{_ddim_sample_jit.1} parent=11 // pred_fallthru
          _
        // Predicated region
        $region17: #{_ddim_sample_jit.1} parent=11 // pred_check
          %p245 = pneg %p57
        $region18: #{_ddim_sample_jit.1} parent=11 // pred_check_branch
          %247 = sbr.rel (%p245) target = $region20
        $region19: #{_ddim_sample_jit.1} parent=11 // pred_region
          _
        $region20: #{_ddim_sample_jit.1} parent=11 // pred_fallthru
          _
        // Predicated region
        $region21: #{_ddim_sample_jit.1} parent=11 // pred_check
          %p248 = pneg %p78
        $region22: #{_ddim_sample_jit.1} parent=11 // pred_check_branch
          %250 = sbr.rel (%p248) target = $region24
        $region23: #{_ddim_sample_jit.1} parent=11 // pred_region
          _
        $region24: #{_ddim_sample_jit.1} parent=11 // pred_fallthru
          _
        // Predicated region
        $region25: #{_ddim_sample_jit.1} parent=11 // pred_check
          %p251 = pneg %p99
        $region26: #{_ddim_sample_jit.1} parent=11 // pred_check_branch
          %253 = sbr.rel (%p251) target = $region28
        $region27: #{_ddim_sample_jit.1} parent=11 // pred_region
          _
        $region28: #{_ddim_sample_jit.1} parent=11 // pred_fallthru
          _
        // Predicated region
        $region29: #{_ddim_sample_jit.1} parent=11 // pred_check
          %p254 = pneg %p120
        $region30: #{_ddim_sample_jit.1} parent=11 // pred_check_branch
          %256 = sbr.rel (%p254) target = $region32
        $region31: #{_ddim_sample_jit.1} parent=11 // pred_region
          _
        $region32: #{_ddim_sample_jit.1} parent=11 // pred_fallthru
          _
        // Predicated region
        $region33: #{_ddim_sample_jit.1} parent=11 // pred_check
          %p257 = pneg %p141
        $region34: #{_ddim_sample_jit.1} parent=11 // pred_check_branch
          %259 = sbr.rel (%p257) target = $region36
        $region35: #{_ddim_sample_jit.1} parent=11 // pred_region
          _
        $region36: #{_ddim_sample_jit.1} parent=11 // pred_fallthru
          _
      $region12: #{_ddim_sample_jit.1} parent=5 // pred_fallthru
        _
      %p260 = scmp.lt.s32.totalorder %s15, 2
      // Predicated region
      $region37: #{_ddim_sample_jit.1} parent=5 // pred_check
        %p261 = pneg %p260
      $region38: #{_ddim_sample_jit.1} parent=5 // pred_check_branch
        %263 = sbr.rel (%p261) target = $region40
      $region39: #{_ddim_sample_jit.1} parent=5 // pred_region
        // Predicated region
        $region41: #{_ddim_sample_jit.1} parent=39 // pred_check
          %p264 = pneg %p161
        $region42: #{_ddim_sample_jit.1} parent=39 // pred_check_branch
          %266 = sbr.rel (%p264) target = $region44
        $region43: #{_ddim_sample_jit.1} parent=39 // pred_region
          %p267 = scmp.lt.s32.totalorder %s15, 1
          %s268 = scalar_select %p267, %s15, 1
          %s269 = smul.addr %s268, 2
          %s270 = scalar_lea.vmem %s6, %s269
        $region44: #{_ddim_sample_jit.1} parent=39 // pred_fallthru
          _
        // Predicated region
        $region45: #{_ddim_sample_jit.1} parent=39 // pred_check
          %p271 = pneg %p187
        $region46: #{_ddim_sample_jit.1} parent=39 // pred_check_branch
          %273 = sbr.rel (%p271) target = $region48
        $region47: #{_ddim_sample_jit.1} parent=39 // pred_region
          %p274 = scmp.lt.s32.totalorder %s15, 1
          %s275 = scalar_select %p274, %s15, 1
          %s276 = smul.addr %s275, 2
          %s277 = scalar_lea.vmem %s7, %s276
        $region48: #{_ddim_sample_jit.1} parent=39 // pred_fallthru
          _
      $region40: #{_ddim_sample_jit.1} parent=5 // pred_fallthru
        _
      %p278 = scmp.le.s32.totalorder 1, %s15
      %p279 = scmp.lt.s32.totalorder %s15, 3
      %p280 = pnand %p278, %p279
      %p281 = pneg %p280
      // Predicated region
      $region49: #{_ddim_sample_jit.1} parent=5 // pred_check
        _
      $region50: #{_ddim_sample_jit.1} parent=5 // pred_check_branch
        %283 = sbr.rel (%p280) target = $region52
      $region51: #{_ddim_sample_jit.1} parent=5 // pred_region
        %s284 = ssub.s32 %s15, 1
        // Predicated region
        $region53: #{_ddim_sample_jit.1} parent=51 // pred_check
          %p285 = pneg %p36
        $region54: #{_ddim_sample_jit.1} parent=51 // pred_check_branch
          %287 = sbr.rel (%p285) target = $region56
        $region55: #{_ddim_sample_jit.1} parent=51 // pred_region
          %288 = dma.done [#allocation3], 16
        $region56: #{_ddim_sample_jit.1} parent=51 // pred_fallthru
          _
        %289 = sfence
        %p290 = pneg %p36
        %p291 = pneg %p33
        %p292 = pneg %p57
        %p293 = pneg %p54
        %p294 = pneg %p78
        %p295 = pneg %p75
        %p296 = pneg %p99
        %p297 = pneg %p96
        %p298 = pneg %p120
        %p299 = pneg %p117
        %p300 = pneg %p141
        %p301 = pneg %p138
        %p302 = scmp.lt.s32.totalorder %s20, 1
        %s303 = scalar_select %p302, %s20, 1
        %s304 = smul.addr %s303, 2
        %s305 = scalar_lea.vmem %s6, %s304
        %p306 = pneg %p167
        %p307 = pneg %p164
        %p308 = scmp.lt.s32.totalorder %s20, 1
        %s309 = scalar_select %p308, %s20, 1
        %s310 = smul.addr %s309, 2
        %s311 = scalar_lea.vmem %s7, %s310
        %p312 = pneg %p193
        %p313 = pneg %p190
        %p314 = pneg %p219
        %p315 = pneg %p216
        %p316 = scmp.lt.s32.totalorder %s20, 1
        %s317 = scalar_select %p316, %s20, 1
        %s318 = smul.addr %s317, 2
        %s319 = scalar_lea.vmem %s8, %s318
        %p320 = scmp.lt.s32.totalorder %s20, 1
        %s321 = scalar_select %p320, %s20, 1
        %s322 = smul.addr %s321, 2
        %s323 = scalar_lea.vmem %s6, %s322
        %p324 = scmp.lt.s32.totalorder %s20, 1
        %s325 = scalar_select %p324, %s20, 1
        %s326 = smul.addr %s325, 2
        %s327 = scalar_lea.vmem %s7, %s326
        %p328 = scmp.lt.s32.totalorder %s20, 1
        %s329 = scalar_select %p328, %s20, 1
        %s330 = smul.addr %s329, 2
        %s331 = scalar_lea.vmem %s8, %s330
        %v333 = vld [vmem:[%s323] sm:$0x3]
        %v334 = vld [vmem:[%s3] sm:$0xf]
        %v335 = vld [vmem:[%s3 + $0x4] sm:$0xf]
        %v337 = vlaneseq
        %v338 = vshrl.u32 %v337, 7
        %v339 = vsub.s32 0, %v338
        %v340 = vrot.slane %v333, %v339
        %v341 = vlaneseq
        %v342 = vshrl.u32 %v341, 7
        %v343 = vsub.s32 1, %v342
        %v344 = vrot.slane %v333, %v343
        %347 = vrot.lane.b32.xlu0 %v340, 17
        %v348 = vpop.permute.xlu0 %347
        %349 = vrot.lane.b32.xlu0 %v344, 17
        %v350 = vpop.permute.xlu0 %349
        %v351 = vlaneseq
        %v352 = vand.u32 %v351, 127
        %vm353 = vcmp.lt.s32.totalorder %v352, 17
        %v354 = vsel %vm353, %v348, %v350
        %v355 = vsel %vm353, %v350, %v348
        %v356 = vld [vmem:[%s5] sm:$0x3]
        %v358 = vlaneseq
        %v359 = vshrl.u32 %v358, 7
        %v360 = vsub.s32 0, %v359
        %v361 = vrot.slane %v356, %v360
        %v362 = vlaneseq
        %v363 = vshrl.u32 %v362, 7
        %v364 = vsub.s32 1, %v363
        %v365 = vrot.slane %v356, %v364
        %v368 = vmul.f32 %v355, %v361
        %v369 = vmul.f32 %v354, %v365
        %370 = vrot.lane.b32.xlu0 %v340, 16
        %v371 = vpop.permute.xlu0 %370
        %372 = vrot.lane.b32.xlu0 %v344, 16
        %v373 = vpop.permute.xlu0 %372
        %vm374 = vcmp.lt.s32.totalorder %v352, 16
        %v375 = vsel %vm374, %v371, %v373
        %v376 = vsel %vm374, %v373, %v371
        %s377 = scalar_lea.vmem %s5, 2
        %v378 = vld [vmem:[%s377] sm:$0x3]
        %v380 = vlaneseq
        %v381 = vshrl.u32 %v380, 7
        %v382 = vsub.s32 0, %v381
        %v383 = vrot.slane %v378, %v382
        %v384 = vlaneseq
        %v385 = vshrl.u32 %v384, 7
        %v386 = vsub.s32 1, %v385
        %v387 = vrot.slane %v378, %v386
        %v390 = vmul.f32 %v376, %v383
        %v391 = vmul.f32 %v375, %v387
        %392 = vrot.lane.b32.xlu0 %v340, 15
        %v393 = vpop.permute.xlu0 %392
        %394 = vrot.lane.b32.xlu0 %v344, 15
        %v395 = vpop.permute.xlu0 %394
        %vm396 = vcmp.lt.s32.totalorder %v352, 15
        %v397 = vsel %vm396, %v393, %v395
        %v398 = vsel %vm396, %v395, %v393
        %s399 = scalar_lea.vmem %s5, 4
        %v400 = vld [vmem:[%s399] sm:$0x3]
        %v402 = vlaneseq
        %v403 = vshrl.u32 %v402, 7
        %v404 = vsub.s32 0, %v403
        %v405 = vrot.slane %v400, %v404
        %v406 = vlaneseq
        %v407 = vshrl.u32 %v406, 7
        %v408 = vsub.s32 1, %v407
        %v409 = vrot.slane %v400, %v408
        %v412 = vmul.f32 %v398, %v405
        %v413 = vmul.f32 %v397, %v409
        %414 = vrot.lane.b32.xlu0 %v340, 1
        %v415 = vpop.permute.xlu0 %414
        %416 = vrot.lane.b32.xlu0 %v344, 1
        %v417 = vpop.permute.xlu0 %416
        %vm418 = vcmp.lt.s32.totalorder %v352, 1
        %v419 = vsel %vm418, %v415, %v417
        %v420 = vsel %vm418, %v417, %v415
        %s421 = scalar_lea.vmem %s5, 6
        %v422 = vld [vmem:[%s421] sm:$0x3]
        %v424 = vlaneseq
        %v425 = vshrl.u32 %v424, 7
        %v426 = vsub.s32 0, %v425
        %v427 = vrot.slane %v422, %v426
        %v428 = vlaneseq
        %v429 = vshrl.u32 %v428, 7
        %v430 = vsub.s32 1, %v429
        %v431 = vrot.slane %v422, %v430
        %v434 = vmul.f32 %v420, %v427
        %v435 = vmul.f32 %v419, %v431
        %436 = vrot.lane.b32.xlu0 %v340, 127
        %v437 = vpop.permute.xlu0 %436
        %438 = vrot.lane.b32.xlu0 %v344, 127
        %v439 = vpop.permute.xlu0 %438
        %vm440 = vcmp.lt.s32.totalorder %v352, 127
        %v441 = vsel %vm440, %v437, %v439
        %v442 = vsel %vm440, %v439, %v437
        %s443 = scalar_lea.vmem %s5, 10
        %v444 = vld [vmem:[%s443] sm:$0x3]
        %v446 = vlaneseq
        %v447 = vshrl.u32 %v446, 7
        %v448 = vsub.s32 0, %v447
        %v449 = vrot.slane %v444, %v448
        %v450 = vlaneseq
        %v451 = vshrl.u32 %v450, 7
        %v452 = vsub.s32 1, %v451
        %v453 = vrot.slane %v444, %v452
        %v456 = vmul.f32 %v441, %v449
        %v457 = vmul.f32 %v442, %v453
        %458 = vrot.lane.b32.xlu0 %v340, 113
        %v459 = vpop.permute.xlu0 %458
        %460 = vrot.lane.b32.xlu0 %v344, 113
        %v461 = vpop.permute.xlu0 %460
        %vm462 = vcmp.lt.s32.totalorder %v352, 113
        %v463 = vsel %vm462, %v459, %v461
        %v464 = vsel %vm462, %v461, %v459
        %s465 = scalar_lea.vmem %s5, 12
        %v466 = vld [vmem:[%s465] sm:$0x3]
        %v468 = vlaneseq
        %v469 = vshrl.u32 %v468, 7
        %v470 = vsub.s32 0, %v469
        %v471 = vrot.slane %v466, %v470
        %v472 = vlaneseq
        %v473 = vshrl.u32 %v472, 7
        %v474 = vsub.s32 1, %v473
        %v475 = vrot.slane %v466, %v474
        %v478 = vmul.f32 %v463, %v471
        %v479 = vmul.f32 %v464, %v475
        %480 = vrot.lane.b32.xlu0 %v340, 112
        %v481 = vpop.permute.xlu0 %480
        %482 = vrot.lane.b32.xlu0 %v344, 112
        %v483 = vpop.permute.xlu0 %482
        %vm484 = vcmp.lt.s32.totalorder %v352, 112
        %v485 = vsel %vm484, %v481, %v483
        %v486 = vsel %vm484, %v483, %v481
        %s487 = scalar_lea.vmem %s5, 14
        %v488 = vld [vmem:[%s487] sm:$0x3]
        %v490 = vlaneseq
        %v491 = vshrl.u32 %v490, 7
        %v492 = vsub.s32 0, %v491
        %v493 = vrot.slane %v488, %v492
        %v494 = vlaneseq
        %v495 = vshrl.u32 %v494, 7
        %v496 = vsub.s32 1, %v495
        %v497 = vrot.slane %v488, %v496
        %v500 = vmul.f32 %v485, %v493
        %v501 = vmul.f32 %v486, %v497
        %502 = vrot.lane.b32.xlu0 %v340, 111
        %v503 = vpop.permute.xlu0 %502
        %504 = vrot.lane.b32.xlu0 %v344, 111
        %v505 = vpop.permute.xlu0 %504
        %vm506 = vcmp.lt.s32.totalorder %v352, 111
        %v507 = vsel %vm506, %v503, %v505
        %v508 = vsel %vm506, %v505, %v503
        %s509 = scalar_lea.vmem %s5, 16
        %v510 = vld [vmem:[%s509] sm:$0x3]
        %v512 = vlaneseq
        %v513 = vshrl.u32 %v512, 7
        %v514 = vsub.s32 0, %v513
        %v515 = vrot.slane %v510, %v514
        %v516 = vlaneseq
        %v517 = vshrl.u32 %v516, 7
        %v518 = vsub.s32 1, %v517
        %v519 = vrot.slane %v510, %v518
        %v522 = vmul.f32 %v507, %v515
        %v523 = vmul.f32 %v508, %v519
        %v526 = vrot.slane %v390, 7
        %v527 = vrot.slane %v391, 7
        %v532 = vrot.slane %v412, 6
        %v533 = vrot.slane %v413, 6
        %v538 = vrot.slane %v434, 5
        %v539 = vrot.slane %v435, 5
        %v544 = vrot.slane %v456, 3
        %v545 = vrot.slane %v457, 3
        %v550 = vrot.slane %v478, 2
        %v551 = vrot.slane %v479, 2
        %v556 = vrot.slane %v500, 1
        %v557 = vrot.slane %v501, 1
        %vm560 = vcmask 1040384
        %v561 = vsel %vm560, %v368, %v526
        %v562 = vsel %vm560, %v369, %v527
        %vm563 = vcmask 1041408
        %v564 = vsel %vm563, %v561, %v532
        %v565 = vsel %vm563, %v562, %v533
        %vm566 = vcmask 1042432
        %v567 = vsel %vm566, %v564, %v538
        %v568 = vsel %vm566, %v565, %v539
        %vm569 = vcmask 1043456
        %v570 = vsel %vm569, %v567, %v340
        %v571 = vsel %vm569, %v568, %v344
        %vm572 = vcmask 1044480
        %v573 = vsel %vm572, %v570, %v544
        %v574 = vsel %vm572, %v571, %v545
        %vm575 = vcmask 1045504
        %v576 = vsel %vm575, %v573, %v550
        %v577 = vsel %vm575, %v574, %v551
        %vm578 = vcmask 1046528
        %v579 = vsel %vm578, %v576, %v556
        %v580 = vsel %vm578, %v577, %v557
        %v581 = vpack.c.bf16 %v522, %v579
        %v582 = vpack.c.bf16 %v523, %v580
        %v585 = vunpack.c.l.b16 %v334
        %v586 = vunpack.c.l.b16 %v335
        %v587 = vpack.c.b16 %v586, %v585
        %vm588 = vcmask 72704
        %v590 = vsel %vm588, %v587, 0
        %v592 = vsel %vm569, 4294967295, 65535
        %v593 = vsel %vm572, %v592, 0
        %v595 = vand.u32 %v581, %v593
        %v598 = vand.u32 %v582, %v593
        %600 = vmatprep.subr.bf16.mxu0 %v598
        %601 = vmatpush1.bf16.msra.mxu0 %v595
        %602 = vmatprep.subr.bf16.mxu0 0
        %603 = vmatpush1.bf16.msra.mxu0 0
        %604 = vmatprep.subr.bf16.mxu0 0
        %605 = vmatpush1.bf16.msra.mxu0 0
        %606 = vmatprep.subr.bf16.mxu0 0
        %607 = vmatpush1.bf16.msra.mxu0 0
        %608 = vmatprep.subr.bf16.mxu0 0
        %609 = vmatpush1.bf16.msra.mxu0 0
        %610 = vmatprep.subr.bf16.mxu0 0
        %611 = vmatpush1.bf16.msra.mxu0 0
        %612 = vmatprep.subr.bf16.mxu0 0
        %613 = vmatpush1.bf16.msra.mxu0 0
        %614 = vmatprep.subr.bf16.mxu0 0
        %615 = vmatpush1.bf16.msra.mxu0 0
        %616 = vmatprep.subr.bf16.mxu0 0
        %617 = vmatpush1.bf16.msra.mxu0 0
        %618 = vmatprep.subr.bf16.mxu0 0
        %619 = vmatpush1.bf16.msra.mxu0 0
        %620 = vmatprep.subr.bf16.mxu0 0
        %621 = vmatpush1.bf16.msra.mxu0 0
        %622 = vmatprep.subr.bf16.mxu0 0
        %623 = vmatpush1.bf16.msra.mxu0 0
        %624 = vmatprep.subr.bf16.mxu0 0
        %625 = vmatpush1.bf16.msra.mxu0 0
        %626 = vmatprep.subr.bf16.mxu0 0
        %627 = vmatpush1.bf16.msra.mxu0 0
        %628 = vmatprep.subr.bf16.mxu0 0
        %629 = vmatpush1.bf16.msra.mxu0 0
        %630 = vmatprep.subr.bf16.mxu0 0
        %631 = vmatpush1.bf16.msra.mxu0 0
        %632 = vmatprep.mubr.bf16.mxu0 0
        %633 = vmatmul.mubr.bf16.gmra.mrb[0].mxu0 %v590
        %v634 = vpop.f32.mrb[0].mxu0
        %v635 = vadd.f32 0.0, %v634
        %v636 = vpop.f32.mrb[0].mxu0
        %v637 = vadd.f32 0.0, %v636
        %v638 = vpop.f32.mrb[0].mxu0
        %v639 = vadd.f32 0.0, %v638
        %v640 = vpop.f32.mrb[0].mxu0
        %v641 = vadd.f32 0.0, %v640
        %642 = vdwg.mxu0
        %v643 = vld [vmem:[%s327] sm:$0x3]
        %v645 = vlaneseq
        %v646 = vshrl.u32 %v645, 7
        %v647 = vsub.s32 0, %v646
        %v648 = vrot.slane %v643, %v647
        %v649 = vlaneseq
        %v650 = vshrl.u32 %v649, 7
        %v651 = vsub.s32 1, %v650
        %v652 = vrot.slane %v643, %v651
        %655 = vrot.lane.b32.xlu0 %v648, 17
        %v656 = vpop.permute.xlu0 %655
        %657 = vrot.lane.b32.xlu0 %v652, 17
        %v658 = vpop.permute.xlu0 %657
        %v659 = vsel %vm353, %v656, %v658
        %v660 = vsel %vm353, %v658, %v656
        %v661 = vmul.f32 %v660, %v361
        %v662 = vmul.f32 %v659, %v365
        %663 = vrot.lane.b32.xlu0 %v648, 16
        %v664 = vpop.permute.xlu0 %663
        %665 = vrot.lane.b32.xlu0 %v652, 16
        %v666 = vpop.permute.xlu0 %665
        %v667 = vsel %vm374, %v664, %v666
        %v668 = vsel %vm374, %v666, %v664
        %v669 = vmul.f32 %v668, %v383
        %v670 = vmul.f32 %v667, %v387
        %671 = vrot.lane.b32.xlu0 %v648, 15
        %v672 = vpop.permute.xlu0 %671
        %673 = vrot.lane.b32.xlu0 %v652, 15
        %v674 = vpop.permute.xlu0 %673
        %v675 = vsel %vm396, %v672, %v674
        %v676 = vsel %vm396, %v674, %v672
        %v677 = vmul.f32 %v676, %v405
        %v678 = vmul.f32 %v675, %v409
        %679 = vrot.lane.b32.xlu0 %v648, 1
        %v680 = vpop.permute.xlu0 %679
        %681 = vrot.lane.b32.xlu0 %v652, 1
        %v682 = vpop.permute.xlu0 %681
        %v683 = vsel %vm418, %v680, %v682
        %v684 = vsel %vm418, %v682, %v680
        %v685 = vmul.f32 %v684, %v427
        %v686 = vmul.f32 %v683, %v431
        %687 = vrot.lane.b32.xlu0 %v648, 127
        %v688 = vpop.permute.xlu0 %687
        %689 = vrot.lane.b32.xlu0 %v652, 127
        %v690 = vpop.permute.xlu0 %689
        %v691 = vsel %vm440, %v688, %v690
        %v692 = vsel %vm440, %v690, %v688
        %v693 = vmul.f32 %v691, %v449
        %v694 = vmul.f32 %v692, %v453
        %695 = vrot.lane.b32.xlu0 %v648, 113
        %v696 = vpop.permute.xlu0 %695
        %697 = vrot.lane.b32.xlu0 %v652, 113
        %v698 = vpop.permute.xlu0 %697
        %v699 = vsel %vm462, %v696, %v698
        %v700 = vsel %vm462, %v698, %v696
        %v701 = vmul.f32 %v699, %v471
        %v702 = vmul.f32 %v700, %v475
        %703 = vrot.lane.b32.xlu0 %v648, 112
        %v704 = vpop.permute.xlu0 %703
        %705 = vrot.lane.b32.xlu0 %v652, 112
        %v706 = vpop.permute.xlu0 %705
        %v707 = vsel %vm484, %v704, %v706
        %v708 = vsel %vm484, %v706, %v704
        %v709 = vmul.f32 %v707, %v493
        %v710 = vmul.f32 %v708, %v497
        %711 = vrot.lane.b32.xlu0 %v648, 111
        %v712 = vpop.permute.xlu0 %711
        %713 = vrot.lane.b32.xlu0 %v652, 111
        %v714 = vpop.permute.xlu0 %713
        %v715 = vsel %vm506, %v712, %v714
        %v716 = vsel %vm506, %v714, %v712
        %v717 = vmul.f32 %v715, %v515
        %v718 = vmul.f32 %v716, %v519
        %v721 = vrot.slane %v669, 7
        %v722 = vrot.slane %v670, 7
        %v727 = vrot.slane %v677, 6
        %v728 = vrot.slane %v678, 6
        %v733 = vrot.slane %v685, 5
        %v734 = vrot.slane %v686, 5
        %v739 = vrot.slane %v693, 3
        %v740 = vrot.slane %v694, 3
        %v745 = vrot.slane %v701, 2
        %v746 = vrot.slane %v702, 2
        %v751 = vrot.slane %v709, 1
        %v752 = vrot.slane %v710, 1
        %v755 = vsel %vm560, %v661, %v721
        %v756 = vsel %vm560, %v662, %v722
        %v757 = vsel %vm563, %v755, %v727
        %v758 = vsel %vm563, %v756, %v728
        %v759 = vsel %vm566, %v757, %v733
        %v760 = vsel %vm566, %v758, %v734
        %v761 = vsel %vm569, %v759, %v648
        %v762 = vsel %vm569, %v760, %v652
        %v763 = vsel %vm572, %v761, %v739
        %v764 = vsel %vm572, %v762, %v740
        %v765 = vsel %vm575, %v763, %v745
        %v766 = vsel %vm575, %v764, %v746
        %v767 = vsel %vm578, %v765, %v751
        %v768 = vsel %vm578, %v766, %v752
        %v769 = vpack.c.bf16 %v717, %v767
        %v770 = vpack.c.bf16 %v718, %v768
        %v771 = vld [vmem:[%s2] sm:$0xf]
        %v772 = vld [vmem:[%s2 + $0x4] sm:$0xf]
        %v775 = vunpack.c.l.b16 %v771
        %v776 = vunpack.c.l.b16 %v772
        %v777 = vpack.c.b16 %v776, %v775
        %v779 = vsel %vm588, %v777, 0
        %v782 = vand.u32 %v769, %v593
        %v785 = vand.u32 %v770, %v593
        %787 = vmatprep.subr.bf16.mxu0 %v785
        %788 = vmatpush1.bf16.msra.mxu0 %v782
        %789 = vmatprep.subr.bf16.mxu0 0
        %790 = vmatpush1.bf16.msra.mxu0 0
        %791 = vmatprep.subr.bf16.mxu0 0
        %792 = vmatpush1.bf16.msra.mxu0 0
        %793 = vmatprep.subr.bf16.mxu0 0
        %794 = vmatpush1.bf16.msra.mxu0 0
        %795 = vmatprep.subr.bf16.mxu0 0
        %796 = vmatpush1.bf16.msra.mxu0 0
        %797 = vmatprep.subr.bf16.mxu0 0
        %798 = vmatpush1.bf16.msra.mxu0 0
        %799 = vmatprep.subr.bf16.mxu0 0
        %800 = vmatpush1.bf16.msra.mxu0 0
        %801 = vmatprep.subr.bf16.mxu0 0
        %802 = vmatpush1.bf16.msra.mxu0 0
        %803 = vmatprep.subr.bf16.mxu0 0
        %804 = vmatpush1.bf16.msra.mxu0 0
        %805 = vmatprep.subr.bf16.mxu0 0
        %806 = vmatpush1.bf16.msra.mxu0 0
        %807 = vmatprep.subr.bf16.mxu0 0
        %808 = vmatpush1.bf16.msra.mxu0 0
        %809 = vmatprep.subr.bf16.mxu0 0
        %810 = vmatpush1.bf16.msra.mxu0 0
        %811 = vmatprep.subr.bf16.mxu0 0
        %812 = vmatpush1.bf16.msra.mxu0 0
        %813 = vmatprep.subr.bf16.mxu0 0
        %814 = vmatpush1.bf16.msra.mxu0 0
        %815 = vmatprep.subr.bf16.mxu0 0
        %816 = vmatpush1.bf16.msra.mxu0 0
        %817 = vmatprep.subr.bf16.mxu0 0
        %818 = vmatpush1.bf16.msra.mxu0 0
        %819 = vmatprep.mubr.bf16.mxu0 0
        %820 = vmatmul.mubr.bf16.gmra.mrb[0].mxu0 %v779
        %v821 = vpop.f32.mrb[0].mxu0
        %v822 = vadd.f32 %v635, %v821
        %v823 = vpop.f32.mrb[0].mxu0
        %v824 = vadd.f32 %v637, %v823
        %v825 = vpop.f32.mrb[0].mxu0
        %v826 = vadd.f32 %v639, %v825
        %v827 = vpop.f32.mrb[0].mxu0
        %v828 = vadd.f32 %v641, %v827
        %829 = vdwg.mxu0
        %v830 = vld [vmem:[%s1] sm:$0xff]
        %v831 = vld [vmem:[%s1 + $0x8] sm:$0xff]
        %833 = vset.pattern.permute.xlu0 0
        %834 = vperm.xlu0 %833, %v830
        %v835 = vpop.permute.xlu0 %834
        %838 = vset.pattern.permute.xlu0 0
        %839 = vperm.xlu0 %838, %v831
        %v840 = vpop.permute.xlu0 %839
        %v842 = vadd.f32 %v822, %v835
        %v843 = vadd.f32 %v824, %v835
        %v844 = vadd.f32 %v826, %v840
        %v845 = vadd.f32 %v828, %v840
        %v846 = vmax.f32 %v842, 0.0
        %v847 = vmax.f32 %v843, 0.0
        %v848 = vmax.f32 %v844, 0.0
        %v849 = vmax.f32 %v845, 0.0
        %v850 = vld [vmem:[%s4] sm:$0xff]
        %v851 = vld [vmem:[%s4 + $0x8] sm:$0x1]
        %vm852 = vcmask 130048
        %v854 = vsel %vm852, %v850, 0
        %v857 = vsel %vm852, %v851, 0
        %859 = vmatprep.subr.mxu0 %v847
        %860 = vmatpush1.msra.mxu0 %v846
        %861 = vmatprep.subr.mxu0 %v849
        %862 = vmatpush1.msra.mxu0 %v848
        %863 = vmatprep.subr.mxu0 0.0
        %864 = vmatpush1.msra.mxu0 0.0
        %865 = vmatprep.subr.mxu0 0.0
        %866 = vmatpush1.msra.mxu0 0.0
        %867 = vmatprep.subr.mxu0 0.0
        %868 = vmatpush1.msra.mxu0 0.0
        %869 = vmatprep.subr.mxu0 0.0
        %870 = vmatpush1.msra.mxu0 0.0
        %871 = vmatprep.subr.mxu0 0.0
        %872 = vmatpush1.msra.mxu0 0.0
        %873 = vmatprep.subr.mxu0 0.0
        %874 = vmatpush1.msra.mxu0 0.0
        %875 = vmatprep.subr.mxu0 0.0
        %876 = vmatpush1.msra.mxu0 0.0
        %877 = vmatprep.subr.mxu0 0.0
        %878 = vmatpush1.msra.mxu0 0.0
        %879 = vmatprep.subr.mxu0 0.0
        %880 = vmatpush1.msra.mxu0 0.0
        %881 = vmatprep.subr.mxu0 0.0
        %882 = vmatpush1.msra.mxu0 0.0
        %883 = vmatprep.subr.mxu0 0.0
        %884 = vmatpush1.msra.mxu0 0.0
        %885 = vmatprep.subr.mxu0 0.0
        %886 = vmatpush1.msra.mxu0 0.0
        %887 = vmatprep.subr.mxu0 0.0
        %888 = vmatpush1.msra.mxu0 0.0
        %889 = vmatprep.subr.mxu0 0.0
        %890 = vmatpush1.msra.mxu0 0.0
        %891 = vmatprep.subr.mxu0 0.0
        %892 = vmatpush1.msra.mxu0 0.0
        %893 = vmatprep.subr.mxu0 0.0
        %894 = vmatpush1.msra.mxu0 0.0
        %895 = vmatprep.subr.mxu0 0.0
        %896 = vmatpush1.msra.mxu0 0.0
        %897 = vmatprep.subr.mxu0 0.0
        %898 = vmatpush1.msra.mxu0 0.0
        %899 = vmatprep.subr.mxu0 0.0
        %900 = vmatpush1.msra.mxu0 0.0
        %901 = vmatprep.subr.mxu0 0.0
        %902 = vmatpush1.msra.mxu0 0.0
        %903 = vmatprep.subr.mxu0 0.0
        %904 = vmatpush1.msra.mxu0 0.0
        %905 = vmatprep.subr.mxu0 0.0
        %906 = vmatpush1.msra.mxu0 0.0
        %907 = vmatprep.subr.mxu0 0.0
        %908 = vmatpush1.msra.mxu0 0.0
        %909 = vmatprep.subr.mxu0 0.0
        %910 = vmatpush1.msra.mxu0 0.0
        %911 = vmatprep.subr.mxu0 0.0
        %912 = vmatpush1.msra.mxu0 0.0
        %913 = vmatprep.subr.mxu0 0.0
        %914 = vmatpush1.msra.mxu0 0.0
        %915 = vmatprep.subr.mxu0 0.0
        %916 = vmatpush1.msra.mxu0 0.0
        %917 = vmatprep.subr.mxu0 0.0
        %918 = vmatpush1.msra.mxu0 0.0
        %919 = vmatprep.subr.mxu0 0.0
        %920 = vmatpush1.msra.mxu0 0.0
        %921 = vmatprep.subr.mxu0 0.0
        %922 = vmatpush1.msra.mxu0 0.0
        %923 = vmatprep.mubr.f32.mxu0 0.0
        %924 = vmatmul.mubr.f32.gmra.mrb[0].mxu0 %v854
        %v925 = vpop.f32.mrb[0].mxu0
        %v926 = vadd.f32 0.0, %v925
        %v927 = vpop.f32.mrb[0].mxu0
        %v928 = vadd.f32 0.0, %v927
        %929 = vmatprep.mubr.f32.mxu0 0.0
        %930 = vmatmul.mubr.f32.gmra.mrb[0].mxu0 %v857
        %v931 = vpop.f32.mrb[0].mxu0
        %v932 = vadd.f32 0.0, %v931
        %v933 = vpop.f32.mrb[0].mxu0
        %v934 = vadd.f32 0.0, %v933
        %935 = vdwg.mxu0
        %936 = vrot.lane.b32.xlu0 %v926, 17
        %v937 = vpop.permute.xlu0 %936
        %938 = vrot.lane.b32.xlu0 %v928, 17
        %v939 = vpop.permute.xlu0 %938
        %v940 = vsel %vm353, %v937, %v939
        %v941 = vsel %vm353, %v939, %v937
        %v942 = vmul.f32 %v941, %v361
        %v943 = vmul.f32 %v940, %v365
        %v946 = vrot.slane %v926, 1
        %v947 = vrot.slane %v928, 1
        %950 = vrot.lane.b32.xlu0 %v946, 16
        %v951 = vpop.permute.xlu0 %950
        %952 = vrot.lane.b32.xlu0 %v947, 16
        %v953 = vpop.permute.xlu0 %952
        %v954 = vsel %vm374, %v951, %v953
        %v955 = vsel %vm374, %v953, %v951
        %v956 = vmul.f32 %v955, %v383
        %v957 = vmul.f32 %v954, %v387
        %v958 = vadd.f32 %v942, %v956
        %v959 = vadd.f32 %v943, %v957
        %v960 = vrot.slane %v926, 2
        %v961 = vrot.slane %v928, 2
        %964 = vrot.lane.b32.xlu0 %v960, 15
        %v965 = vpop.permute.xlu0 %964
        %966 = vrot.lane.b32.xlu0 %v961, 15
        %v967 = vpop.permute.xlu0 %966
        %v968 = vsel %vm396, %v965, %v967
        %v969 = vsel %vm396, %v967, %v965
        %v970 = vmul.f32 %v969, %v405
        %v971 = vmul.f32 %v968, %v409
        %v972 = vadd.f32 %v958, %v970
        %v973 = vadd.f32 %v959, %v971
        %v974 = vrot.slane %v926, 3
        %v975 = vrot.slane %v928, 3
        %978 = vrot.lane.b32.xlu0 %v974, 1
        %v979 = vpop.permute.xlu0 %978
        %980 = vrot.lane.b32.xlu0 %v975, 1
        %v981 = vpop.permute.xlu0 %980
        %v982 = vsel %vm418, %v979, %v981
        %v983 = vsel %vm418, %v981, %v979
        %v984 = vmul.f32 %v983, %v427
        %v985 = vmul.f32 %v982, %v431
        %v986 = vadd.f32 %v972, %v984
        %v987 = vadd.f32 %v973, %v985
        %v988 = vrot.slane %v926, 4
        %v989 = vrot.slane %v928, 4
        %v992 = vadd.f32 %v986, %v988
        %v993 = vadd.f32 %v987, %v989
        %v994 = vrot.slane %v926, 5
        %v995 = vrot.slane %v928, 5
        %998 = vrot.lane.b32.xlu0 %v994, 127
        %v999 = vpop.permute.xlu0 %998
        %1000 = vrot.lane.b32.xlu0 %v995, 127
        %v1001 = vpop.permute.xlu0 %1000
        %v1002 = vsel %vm440, %v999, %v1001
        %v1003 = vsel %vm440, %v1001, %v999
        %v1004 = vmul.f32 %v1002, %v449
        %v1005 = vmul.f32 %v1003, %v453
        %v1006 = vadd.f32 %v992, %v1004
        %v1007 = vadd.f32 %v993, %v1005
        %v1008 = vrot.slane %v926, 6
        %v1009 = vrot.slane %v928, 6
        %1012 = vrot.lane.b32.xlu0 %v1008, 113
        %v1013 = vpop.permute.xlu0 %1012
        %1014 = vrot.lane.b32.xlu0 %v1009, 113
        %v1015 = vpop.permute.xlu0 %1014
        %v1016 = vsel %vm462, %v1013, %v1015
        %v1017 = vsel %vm462, %v1015, %v1013
        %v1018 = vmul.f32 %v1016, %v471
        %v1019 = vmul.f32 %v1017, %v475
        %v1020 = vadd.f32 %v1006, %v1018
        %v1021 = vadd.f32 %v1007, %v1019
        %v1022 = vrot.slane %v926, 7
        %v1023 = vrot.slane %v928, 7
        %1026 = vrot.lane.b32.xlu0 %v1022, 112
        %v1027 = vpop.permute.xlu0 %1026
        %1028 = vrot.lane.b32.xlu0 %v1023, 112
        %v1029 = vpop.permute.xlu0 %1028
        %v1030 = vsel %vm484, %v1027, %v1029
        %v1031 = vsel %vm484, %v1029, %v1027
        %v1032 = vmul.f32 %v1030, %v493
        %v1033 = vmul.f32 %v1031, %v497
        %v1034 = vadd.f32 %v1020, %v1032
        %v1035 = vadd.f32 %v1021, %v1033
        %1036 = vrot.lane.b32.xlu0 %v932, 111
        %v1037 = vpop.permute.xlu0 %1036
        %1038 = vrot.lane.b32.xlu0 %v934, 111
        %v1039 = vpop.permute.xlu0 %1038
        %v1040 = vsel %vm506, %v1037, %v1039
        %v1041 = vsel %vm506, %v1039, %v1037
        %v1042 = vmul.f32 %v1040, %v515
        %v1043 = vmul.f32 %v1041, %v519
        %v1044 = vadd.f32 %v1034, %v1042
        %v1045 = vadd.f32 %v1035, %v1043
        %s1046 = sld [smem:[#allocation2]]
        %s1047 = sld [smem:[#allocation2 + $0x1]]
        %s1048 = sld [smem:[#allocation2 + $0x2]]
        %v1049 = vstv %s1046
        %v1050 = vmul.f32 %v1049, %v643
        %v1051 = vstv %s1047
        %v1052 = vmul.f32 %v1051, %v1044
        %v1053 = vmul.f32 %v1051, %v1045
        %v1056 = vcombine.low %v1052, %v1053
        %v1058 = vunpack.c.l.s4 1966171168
        %v1059 = vunpack.c.0.s8 %v1058
        %v1060 = vlaneseq
        %v1061 = vshrl.u32 %v1060, 7
        %v1062 = vsub.s32 %v1059, %v1061
        %v1063 = vrot.slane %v1056, %v1062
        %v1065 = vunpack.c.l.s4 1966171168
        %v1066 = vunpack.c.0.s8 %v1065
        %v1067 = vlaneseq
        %v1068 = vshrl.u32 %v1067, 7
        %v1069 = vsub.s32 %v1066, %v1068
        %v1070 = vrot.slane %v1063, %v1069
        %v1072 = vadd.f32 %v1050, %v1070
        %v1073 = vstv %s1048
        %v1074 = vadd.f32 %v1072, %v1073
        %v1076 = vlaneseq
        %v1077 = vshrl.u32 %v1076, 7
        %v1078 = vsub.s32 0, %v1077
        %v1079 = vrot.slane %v1074, %v1078
        %v1080 = vlaneseq
        %v1081 = vshrl.u32 %v1080, 7
        %v1082 = vsub.s32 1, %v1081
        %v1083 = vrot.slane %v1074, %v1082
        %1086 = vrot.lane.b32.xlu0 %v1079, 17
        %v1087 = vpop.permute.xlu0 %1086
        %1088 = vrot.lane.b32.xlu0 %v1083, 17
        %v1089 = vpop.permute.xlu0 %1088
        %v1090 = vsel %vm353, %v1087, %v1089
        %v1091 = vsel %vm353, %v1089, %v1087
        %v1092 = vmul.f32 %v1091, %v361
        %v1093 = vmul.f32 %v1090, %v365
        %1094 = vrot.lane.b32.xlu0 %v1079, 16
        %v1095 = vpop.permute.xlu0 %1094
        %1096 = vrot.lane.b32.xlu0 %v1083, 16
        %v1097 = vpop.permute.xlu0 %1096
        %v1098 = vsel %vm374, %v1095, %v1097
        %v1099 = vsel %vm374, %v1097, %v1095
        %v1100 = vmul.f32 %v1099, %v383
        %v1101 = vmul.f32 %v1098, %v387
        %1102 = vrot.lane.b32.xlu0 %v1079, 15
        %v1103 = vpop.permute.xlu0 %1102
        %1104 = vrot.lane.b32.xlu0 %v1083, 15
        %v1105 = vpop.permute.xlu0 %1104
        %v1106 = vsel %vm396, %v1103, %v1105
        %v1107 = vsel %vm396, %v1105, %v1103
        %v1108 = vmul.f32 %v1107, %v405
        %v1109 = vmul.f32 %v1106, %v409
        %1110 = vrot.lane.b32.xlu0 %v1079, 1
        %v1111 = vpop.permute.xlu0 %1110
        %1112 = vrot.lane.b32.xlu0 %v1083, 1
        %v1113 = vpop.permute.xlu0 %1112
        %v1114 = vsel %vm418, %v1111, %v1113
        %v1115 = vsel %vm418, %v1113, %v1111
        %v1116 = vmul.f32 %v1115, %v427
        %v1117 = vmul.f32 %v1114, %v431
        %1118 = vrot.lane.b32.xlu0 %v1079, 127
        %v1119 = vpop.permute.xlu0 %1118
        %1120 = vrot.lane.b32.xlu0 %v1083, 127
        %v1121 = vpop.permute.xlu0 %1120
        %v1122 = vsel %vm440, %v1119, %v1121
        %v1123 = vsel %vm440, %v1121, %v1119
        %v1124 = vmul.f32 %v1122, %v449
        %v1125 = vmul.f32 %v1123, %v453
        %1126 = vrot.lane.b32.xlu0 %v1079, 113
        %v1127 = vpop.permute.xlu0 %1126
        %1128 = vrot.lane.b32.xlu0 %v1083, 113
        %v1129 = vpop.permute.xlu0 %1128
        %v1130 = vsel %vm462, %v1127, %v1129
        %v1131 = vsel %vm462, %v1129, %v1127
        %v1132 = vmul.f32 %v1130, %v471
        %v1133 = vmul.f32 %v1131, %v475
        %1134 = vrot.lane.b32.xlu0 %v1079, 112
        %v1135 = vpop.permute.xlu0 %1134
        %1136 = vrot.lane.b32.xlu0 %v1083, 112
        %v1137 = vpop.permute.xlu0 %1136
        %v1138 = vsel %vm484, %v1135, %v1137
        %v1139 = vsel %vm484, %v1137, %v1135
        %v1140 = vmul.f32 %v1138, %v493
        %v1141 = vmul.f32 %v1139, %v497
        %1142 = vrot.lane.b32.xlu0 %v1079, 111
        %v1143 = vpop.permute.xlu0 %1142
        %1144 = vrot.lane.b32.xlu0 %v1083, 111
        %v1145 = vpop.permute.xlu0 %1144
        %v1146 = vsel %vm506, %v1143, %v1145
        %v1147 = vsel %vm506, %v1145, %v1143
        %v1148 = vmul.f32 %v1146, %v515
        %v1149 = vmul.f32 %v1147, %v519
        %v1152 = vrot.slane %v1100, 7
        %v1153 = vrot.slane %v1101, 7
        %v1158 = vrot.slane %v1108, 6
        %v1159 = vrot.slane %v1109, 6
        %v1164 = vrot.slane %v1116, 5
        %v1165 = vrot.slane %v1117, 5
        %v1170 = vrot.slane %v1124, 3
        %v1171 = vrot.slane %v1125, 3
        %v1176 = vrot.slane %v1132, 2
        %v1177 = vrot.slane %v1133, 2
        %v1182 = vrot.slane %v1140, 1
        %v1183 = vrot.slane %v1141, 1
        %v1186 = vsel %vm560, %v1092, %v1152
        %v1187 = vsel %vm560, %v1093, %v1153
        %v1188 = vsel %vm563, %v1186, %v1158
        %v1189 = vsel %vm563, %v1187, %v1159
        %v1190 = vsel %vm566, %v1188, %v1164
        %v1191 = vsel %vm566, %v1189, %v1165
        %v1192 = vsel %vm569, %v1190, %v1079
        %v1193 = vsel %vm569, %v1191, %v1083
        %v1194 = vsel %vm572, %v1192, %v1170
        %v1195 = vsel %vm572, %v1193, %v1171
        %v1196 = vsel %vm575, %v1194, %v1176
        %v1197 = vsel %vm575, %v1195, %v1177
        %v1198 = vsel %vm578, %v1196, %v1182
        %v1199 = vsel %vm578, %v1197, %v1183
        %v1200 = vpack.c.bf16 %v1148, %v1198
        %v1201 = vpack.c.bf16 %v1149, %v1199
        %v1203 = vand.u32 %v1200, %v593
        %v1206 = vand.u32 %v1201, %v593
        %1208 = vmatprep.subr.bf16.mxu0 %v1206
        %1209 = vmatpush1.bf16.msra.mxu0 %v1203
        %1210 = vmatprep.subr.bf16.mxu0 0
        %1211 = vmatpush1.bf16.msra.mxu0 0
        %1212 = vmatprep.subr.bf16.mxu0 0
        %1213 = vmatpush1.bf16.msra.mxu0 0
        %1214 = vmatprep.subr.bf16.mxu0 0
        %1215 = vmatpush1.bf16.msra.mxu0 0
        %1216 = vmatprep.subr.bf16.mxu0 0
        %1217 = vmatpush1.bf16.msra.mxu0 0
        %1218 = vmatprep.subr.bf16.mxu0 0
        %1219 = vmatpush1.bf16.msra.mxu0 0
        %1220 = vmatprep.subr.bf16.mxu0 0
        %1221 = vmatpush1.bf16.msra.mxu0 0
        %1222 = vmatprep.subr.bf16.mxu0 0
        %1223 = vmatpush1.bf16.msra.mxu0 0
        %1224 = vmatprep.subr.bf16.mxu0 0
        %1225 = vmatpush1.bf16.msra.mxu0 0
        %1226 = vmatprep.subr.bf16.mxu0 0
        %1227 = vmatpush1.bf16.msra.mxu0 0
        %1228 = vmatprep.subr.bf16.mxu0 0
        %1229 = vmatpush1.bf16.msra.mxu0 0
        %1230 = vmatprep.subr.bf16.mxu0 0
        %1231 = vmatpush1.bf16.msra.mxu0 0
        %1232 = vmatprep.subr.bf16.mxu0 0
        %1233 = vmatpush1.bf16.msra.mxu0 0
        %1234 = vmatprep.subr.bf16.mxu0 0
        %1235 = vmatpush1.bf16.msra.mxu0 0
        %1236 = vmatprep.subr.bf16.mxu0 0
        %1237 = vmatpush1.bf16.msra.mxu0 0
        %1238 = vmatprep.subr.bf16.mxu0 0
        %1239 = vmatpush1.bf16.msra.mxu0 0
        %1240 = vmatprep.mubr.bf16.mxu0 0
        %1241 = vmatmul.mubr.bf16.gmra.mrb[0].mxu0 %v779
        %v1242 = vpop.f32.mrb[0].mxu0
        %v1243 = vadd.f32 %v635, %v1242
        %v1244 = vpop.f32.mrb[0].mxu0
        %v1245 = vadd.f32 %v637, %v1244
        %v1246 = vpop.f32.mrb[0].mxu0
        %v1247 = vadd.f32 %v639, %v1246
        %v1248 = vpop.f32.mrb[0].mxu0
        %v1249 = vadd.f32 %v641, %v1248
        %1250 = vdwg.mxu0
        %s1251 = scalar_lea.vmem %s1, 16
        %v1252 = vld [vmem:[%s1251] sm:$0xff]
        %v1253 = vld [vmem:[%s1251 + $0x8] sm:$0xff]
        %1255 = vset.pattern.permute.xlu0 0
        %1256 = vperm.xlu0 %1255, %v1252
        %v1257 = vpop.permute.xlu0 %1256
        %1260 = vset.pattern.permute.xlu0 0
        %1261 = vperm.xlu0 %1260, %v1253
        %v1262 = vpop.permute.xlu0 %1261
        %v1264 = vadd.f32 %v1243, %v1257
        %v1265 = vadd.f32 %v1245, %v1257
        %v1266 = vadd.f32 %v1247, %v1262
        %v1267 = vadd.f32 %v1249, %v1262
        %v1268 = vmax.f32 %v1264, 0.0
        %v1269 = vmax.f32 %v1265, 0.0
        %v1270 = vmax.f32 %v1266, 0.0
        %v1271 = vmax.f32 %v1267, 0.0
        %1272 = vmatprep.subr.mxu0 %v1269
        %1273 = vmatpush1.msra.mxu0 %v1268
        %1274 = vmatprep.subr.mxu0 %v1271
        %1275 = vmatpush1.msra.mxu0 %v1270
        %1276 = vmatprep.subr.mxu0 0.0
        %1277 = vmatpush1.msra.mxu0 0.0
        %1278 = vmatprep.subr.mxu0 0.0
        %1279 = vmatpush1.msra.mxu0 0.0
        %1280 = vmatprep.subr.mxu0 0.0
        %1281 = vmatpush1.msra.mxu0 0.0
        %1282 = vmatprep.subr.mxu0 0.0
        %1283 = vmatpush1.msra.mxu0 0.0
        %1284 = vmatprep.subr.mxu0 0.0
        %1285 = vmatpush1.msra.mxu0 0.0
        %1286 = vmatprep.subr.mxu0 0.0
        %1287 = vmatpush1.msra.mxu0 0.0
        %1288 = vmatprep.subr.mxu0 0.0
        %1289 = vmatpush1.msra.mxu0 0.0
        %1290 = vmatprep.subr.mxu0 0.0
        %1291 = vmatpush1.msra.mxu0 0.0
        %1292 = vmatprep.subr.mxu0 0.0
        %1293 = vmatpush1.msra.mxu0 0.0
        %1294 = vmatprep.subr.mxu0 0.0
        %1295 = vmatpush1.msra.mxu0 0.0
        %1296 = vmatprep.subr.mxu0 0.0
        %1297 = vmatpush1.msra.mxu0 0.0
        %1298 = vmatprep.subr.mxu0 0.0
        %1299 = vmatpush1.msra.mxu0 0.0
        %1300 = vmatprep.subr.mxu0 0.0
        %1301 = vmatpush1.msra.mxu0 0.0
        %1302 = vmatprep.subr.mxu0 0.0
        %1303 = vmatpush1.msra.mxu0 0.0
        %1304 = vmatprep.subr.mxu0 0.0
        %1305 = vmatpush1.msra.mxu0 0.0
        %1306 = vmatprep.subr.mxu0 0.0
        %1307 = vmatpush1.msra.mxu0 0.0
        %1308 = vmatprep.subr.mxu0 0.0
        %1309 = vmatpush1.msra.mxu0 0.0
        %1310 = vmatprep.subr.mxu0 0.0
        %1311 = vmatpush1.msra.mxu0 0.0
        %1312 = vmatprep.subr.mxu0 0.0
        %1313 = vmatpush1.msra.mxu0 0.0
        %1314 = vmatprep.subr.mxu0 0.0
        %1315 = vmatpush1.msra.mxu0 0.0
        %1316 = vmatprep.subr.mxu0 0.0
        %1317 = vmatpush1.msra.mxu0 0.0
        %1318 = vmatprep.subr.mxu0 0.0
        %1319 = vmatpush1.msra.mxu0 0.0
        %1320 = vmatprep.subr.mxu0 0.0
        %1321 = vmatpush1.msra.mxu0 0.0
        %1322 = vmatprep.subr.mxu0 0.0
        %1323 = vmatpush1.msra.mxu0 0.0
        %1324 = vmatprep.subr.mxu0 0.0
        %1325 = vmatpush1.msra.mxu0 0.0
        %1326 = vmatprep.subr.mxu0 0.0
        %1327 = vmatpush1.msra.mxu0 0.0
        %1328 = vmatprep.subr.mxu0 0.0
        %1329 = vmatpush1.msra.mxu0 0.0
        %1330 = vmatprep.subr.mxu0 0.0
        %1331 = vmatpush1.msra.mxu0 0.0
        %1332 = vmatprep.subr.mxu0 0.0
        %1333 = vmatpush1.msra.mxu0 0.0
        %1334 = vmatprep.subr.mxu0 0.0
        %1335 = vmatpush1.msra.mxu0 0.0
        %1336 = vmatprep.mubr.f32.mxu0 0.0
        %1337 = vmatmul.mubr.f32.gmra.mrb[0].mxu0 %v854
        %v1338 = vpop.f32.mrb[0].mxu0
        %v1339 = vadd.f32 0.0, %v1338
        %v1340 = vpop.f32.mrb[0].mxu0
        %v1341 = vadd.f32 0.0, %v1340
        %1342 = vmatprep.mubr.f32.mxu0 0.0
        %1343 = vmatmul.mubr.f32.gmra.mrb[0].mxu0 %v857
        %v1344 = vpop.f32.mrb[0].mxu0
        %v1345 = vadd.f32 0.0, %v1344
        %v1346 = vpop.f32.mrb[0].mxu0
        %v1347 = vadd.f32 0.0, %v1346
        %1348 = vdwg.mxu0
        %1349 = vrot.lane.b32.xlu0 %v1339, 17
        %v1350 = vpop.permute.xlu0 %1349
        %1351 = vrot.lane.b32.xlu0 %v1341, 17
        %v1352 = vpop.permute.xlu0 %1351
        %v1353 = vsel %vm353, %v1350, %v1352
        %v1354 = vsel %vm353, %v1352, %v1350
        %v1355 = vmul.f32 %v1354, %v361
        %v1356 = vmul.f32 %v1353, %v365
        %v1359 = vrot.slane %v1339, 1
        %v1360 = vrot.slane %v1341, 1
        %1363 = vrot.lane.b32.xlu0 %v1359, 16
        %v1364 = vpop.permute.xlu0 %1363
        %1365 = vrot.lane.b32.xlu0 %v1360, 16
        %v1366 = vpop.permute.xlu0 %1365
        %v1367 = vsel %vm374, %v1364, %v1366
        %v1368 = vsel %vm374, %v1366, %v1364
        %v1369 = vmul.f32 %v1368, %v383
        %v1370 = vmul.f32 %v1367, %v387
        %v1371 = vadd.f32 %v1355, %v1369
        %v1372 = vadd.f32 %v1356, %v1370
        %v1373 = vrot.slane %v1339, 2
        %v1374 = vrot.slane %v1341, 2
        %1377 = vrot.lane.b32.xlu0 %v1373, 15
        %v1378 = vpop.permute.xlu0 %1377
        %1379 = vrot.lane.b32.xlu0 %v1374, 15
        %v1380 = vpop.permute.xlu0 %1379
        %v1381 = vsel %vm396, %v1378, %v1380
        %v1382 = vsel %vm396, %v1380, %v1378
        %v1383 = vmul.f32 %v1382, %v405
        %v1384 = vmul.f32 %v1381, %v409
        %v1385 = vadd.f32 %v1371, %v1383
        %v1386 = vadd.f32 %v1372, %v1384
        %v1387 = vrot.slane %v1339, 3
        %v1388 = vrot.slane %v1341, 3
        %1391 = vrot.lane.b32.xlu0 %v1387, 1
        %v1392 = vpop.permute.xlu0 %1391
        %1393 = vrot.lane.b32.xlu0 %v1388, 1
        %v1394 = vpop.permute.xlu0 %1393
        %v1395 = vsel %vm418, %v1392, %v1394
        %v1396 = vsel %vm418, %v1394, %v1392
        %v1397 = vmul.f32 %v1396, %v427
        %v1398 = vmul.f32 %v1395, %v431
        %v1399 = vadd.f32 %v1385, %v1397
        %v1400 = vadd.f32 %v1386, %v1398
        %v1401 = vrot.slane %v1339, 4
        %v1402 = vrot.slane %v1341, 4
        %v1405 = vadd.f32 %v1399, %v1401
        %v1406 = vadd.f32 %v1400, %v1402
        %v1407 = vrot.slane %v1339, 5
        %v1408 = vrot.slane %v1341, 5
        %1411 = vrot.lane.b32.xlu0 %v1407, 127
        %v1412 = vpop.permute.xlu0 %1411
        %1413 = vrot.lane.b32.xlu0 %v1408, 127
        %v1414 = vpop.permute.xlu0 %1413
        %v1415 = vsel %vm440, %v1412, %v1414
        %v1416 = vsel %vm440, %v1414, %v1412
        %v1417 = vmul.f32 %v1415, %v449
        %v1418 = vmul.f32 %v1416, %v453
        %v1419 = vadd.f32 %v1405, %v1417
        %v1420 = vadd.f32 %v1406, %v1418
        %v1421 = vrot.slane %v1339, 6
        %v1422 = vrot.slane %v1341, 6
        %1425 = vrot.lane.b32.xlu0 %v1421, 113
        %v1426 = vpop.permute.xlu0 %1425
        %1427 = vrot.lane.b32.xlu0 %v1422, 113
        %v1428 = vpop.permute.xlu0 %1427
        %v1429 = vsel %vm462, %v1426, %v1428
        %v1430 = vsel %vm462, %v1428, %v1426
        %v1431 = vmul.f32 %v1429, %v471
        %v1432 = vmul.f32 %v1430, %v475
        %v1433 = vadd.f32 %v1419, %v1431
        %v1434 = vadd.f32 %v1420, %v1432
        %v1435 = vrot.slane %v1339, 7
        %v1436 = vrot.slane %v1341, 7
        %1439 = vrot.lane.b32.xlu0 %v1435, 112
        %v1440 = vpop.permute.xlu0 %1439
        %1441 = vrot.lane.b32.xlu0 %v1436, 112
        %v1442 = vpop.permute.xlu0 %1441
        %v1443 = vsel %vm484, %v1440, %v1442
        %v1444 = vsel %vm484, %v1442, %v1440
        %v1445 = vmul.f32 %v1443, %v493
        %v1446 = vmul.f32 %v1444, %v497
        %v1447 = vadd.f32 %v1433, %v1445
        %v1448 = vadd.f32 %v1434, %v1446
        %1449 = vrot.lane.b32.xlu0 %v1345, 111
        %v1450 = vpop.permute.xlu0 %1449
        %1451 = vrot.lane.b32.xlu0 %v1347, 111
        %v1452 = vpop.permute.xlu0 %1451
        %v1453 = vsel %vm506, %v1450, %v1452
        %v1454 = vsel %vm506, %v1452, %v1450
        %v1455 = vmul.f32 %v1453, %v515
        %v1456 = vmul.f32 %v1454, %v519
        %v1457 = vadd.f32 %v1447, %v1455
        %v1458 = vadd.f32 %v1448, %v1456
        %s1459 = sld [smem:[#allocation2 + $0x3]]
        %s1460 = sld [smem:[#allocation2 + $0x4]]
        %s1461 = sld [smem:[#allocation2 + $0x5]]
        %v1462 = vstv %s1459
        %v1463 = vmul.f32 %v1462, %v1074
        %v1464 = vstv %s1460
        %v1465 = vmul.f32 %v1464, %v1457
        %v1466 = vmul.f32 %v1464, %v1458
        %v1469 = vcombine.low %v1465, %v1466
        %v1471 = vunpack.c.l.s4 1966171168
        %v1472 = vunpack.c.0.s8 %v1471
        %v1473 = vlaneseq
        %v1474 = vshrl.u32 %v1473, 7
        %v1475 = vsub.s32 %v1472, %v1474
        %v1476 = vrot.slane %v1469, %v1475
        %v1478 = vunpack.c.l.s4 1966171168
        %v1479 = vunpack.c.0.s8 %v1478
        %v1480 = vlaneseq
        %v1481 = vshrl.u32 %v1480, 7
        %v1482 = vsub.s32 %v1479, %v1481
        %v1483 = vrot.slane %v1476, %v1482
        %v1485 = vadd.f32 %v1463, %v1483
        %v1486 = vstv %s1461
        %v1487 = vadd.f32 %v1485, %v1486
        %v1489 = vlaneseq
        %v1490 = vshrl.u32 %v1489, 7
        %v1491 = vsub.s32 0, %v1490
        %v1492 = vrot.slane %v1487, %v1491
        %v1493 = vlaneseq
        %v1494 = vshrl.u32 %v1493, 7
        %v1495 = vsub.s32 1, %v1494
        %v1496 = vrot.slane %v1487, %v1495
        %1499 = vrot.lane.b32.xlu0 %v1492, 17
        %v1500 = vpop.permute.xlu0 %1499
        %1501 = vrot.lane.b32.xlu0 %v1496, 17
        %v1502 = vpop.permute.xlu0 %1501
        %v1503 = vsel %vm353, %v1500, %v1502
        %v1504 = vsel %vm353, %v1502, %v1500
        %v1505 = vmul.f32 %v1504, %v361
        %v1506 = vmul.f32 %v1503, %v365
        %1507 = vrot.lane.b32.xlu0 %v1492, 16
        %v1508 = vpop.permute.xlu0 %1507
        %1509 = vrot.lane.b32.xlu0 %v1496, 16
        %v1510 = vpop.permute.xlu0 %1509
        %v1511 = vsel %vm374, %v1508, %v1510
        %v1512 = vsel %vm374, %v1510, %v1508
        %v1513 = vmul.f32 %v1512, %v383
        %v1514 = vmul.f32 %v1511, %v387
        %1515 = vrot.lane.b32.xlu0 %v1492, 15
        %v1516 = vpop.permute.xlu0 %1515
        %1517 = vrot.lane.b32.xlu0 %v1496, 15
        %v1518 = vpop.permute.xlu0 %1517
        %v1519 = vsel %vm396, %v1516, %v1518
        %v1520 = vsel %vm396, %v1518, %v1516
        %v1521 = vmul.f32 %v1520, %v405
        %v1522 = vmul.f32 %v1519, %v409
        %1523 = vrot.lane.b32.xlu0 %v1492, 1
        %v1524 = vpop.permute.xlu0 %1523
        %1525 = vrot.lane.b32.xlu0 %v1496, 1
        %v1526 = vpop.permute.xlu0 %1525
        %v1527 = vsel %vm418, %v1524, %v1526
        %v1528 = vsel %vm418, %v1526, %v1524
        %v1529 = vmul.f32 %v1528, %v427
        %v1530 = vmul.f32 %v1527, %v431
        %1531 = vrot.lane.b32.xlu0 %v1492, 127
        %v1532 = vpop.permute.xlu0 %1531
        %1533 = vrot.lane.b32.xlu0 %v1496, 127
        %v1534 = vpop.permute.xlu0 %1533
        %v1535 = vsel %vm440, %v1532, %v1534
        %v1536 = vsel %vm440, %v1534, %v1532
        %v1537 = vmul.f32 %v1535, %v449
        %v1538 = vmul.f32 %v1536, %v453
        %1539 = vrot.lane.b32.xlu0 %v1492, 113
        %v1540 = vpop.permute.xlu0 %1539
        %1541 = vrot.lane.b32.xlu0 %v1496, 113
        %v1542 = vpop.permute.xlu0 %1541
        %v1543 = vsel %vm462, %v1540, %v1542
        %v1544 = vsel %vm462, %v1542, %v1540
        %v1545 = vmul.f32 %v1543, %v471
        %v1546 = vmul.f32 %v1544, %v475
        %1547 = vrot.lane.b32.xlu0 %v1492, 112
        %v1548 = vpop.permute.xlu0 %1547
        %1549 = vrot.lane.b32.xlu0 %v1496, 112
        %v1550 = vpop.permute.xlu0 %1549
        %v1551 = vsel %vm484, %v1548, %v1550
        %v1552 = vsel %vm484, %v1550, %v1548
        %v1553 = vmul.f32 %v1551, %v493
        %v1554 = vmul.f32 %v1552, %v497
        %1555 = vrot.lane.b32.xlu0 %v1492, 111
        %v1556 = vpop.permute.xlu0 %1555
        %1557 = vrot.lane.b32.xlu0 %v1496, 111
        %v1558 = vpop.permute.xlu0 %1557
        %v1559 = vsel %vm506, %v1556, %v1558
        %v1560 = vsel %vm506, %v1558, %v1556
        %v1561 = vmul.f32 %v1559, %v515
        %v1562 = vmul.f32 %v1560, %v519
        %v1565 = vrot.slane %v1513, 7
        %v1566 = vrot.slane %v1514, 7
        %v1571 = vrot.slane %v1521, 6
        %v1572 = vrot.slane %v1522, 6
        %v1577 = vrot.slane %v1529, 5
        %v1578 = vrot.slane %v1530, 5
        %v1583 = vrot.slane %v1537, 3
        %v1584 = vrot.slane %v1538, 3
        %v1589 = vrot.slane %v1545, 2
        %v1590 = vrot.slane %v1546, 2
        %v1595 = vrot.slane %v1553, 1
        %v1596 = vrot.slane %v1554, 1
        %v1599 = vsel %vm560, %v1505, %v1565
        %v1600 = vsel %vm560, %v1506, %v1566
        %v1601 = vsel %vm563, %v1599, %v1571
        %v1602 = vsel %vm563, %v1600, %v1572
        %v1603 = vsel %vm566, %v1601, %v1577
        %v1604 = vsel %vm566, %v1602, %v1578
        %v1605 = vsel %vm569, %v1603, %v1492
        %v1606 = vsel %vm569, %v1604, %v1496
        %v1607 = vsel %vm572, %v1605, %v1583
        %v1608 = vsel %vm572, %v1606, %v1584
        %v1609 = vsel %vm575, %v1607, %v1589
        %v1610 = vsel %vm575, %v1608, %v1590
        %v1611 = vsel %vm578, %v1609, %v1595
        %v1612 = vsel %vm578, %v1610, %v1596
        %v1613 = vpack.c.bf16 %v1561, %v1611
        %v1614 = vpack.c.bf16 %v1562, %v1612
        %v1616 = vand.u32 %v1613, %v593
        %v1619 = vand.u32 %v1614, %v593
        %1621 = vmatprep.subr.bf16.mxu0 %v1619
        %1622 = vmatpush1.bf16.msra.mxu0 %v1616
        %1623 = vmatprep.subr.bf16.mxu0 0
        %1624 = vmatpush1.bf16.msra.mxu0 0
        %1625 = vmatprep.subr.bf16.mxu0 0
        %1626 = vmatpush1.bf16.msra.mxu0 0
        %1627 = vmatprep.subr.bf16.mxu0 0
        %1628 = vmatpush1.bf16.msra.mxu0 0
        %1629 = vmatprep.subr.bf16.mxu0 0
        %1630 = vmatpush1.bf16.msra.mxu0 0
        %1631 = vmatprep.subr.bf16.mxu0 0
        %1632 = vmatpush1.bf16.msra.mxu0 0
        %1633 = vmatprep.subr.bf16.mxu0 0
        %1634 = vmatpush1.bf16.msra.mxu0 0
        %1635 = vmatprep.subr.bf16.mxu0 0
        %1636 = vmatpush1.bf16.msra.mxu0 0
        %1637 = vmatprep.subr.bf16.mxu0 0
        %1638 = vmatpush1.bf16.msra.mxu0 0
        %1639 = vmatprep.subr.bf16.mxu0 0
        %1640 = vmatpush1.bf16.msra.mxu0 0
        %1641 = vmatprep.subr.bf16.mxu0 0
        %1642 = vmatpush1.bf16.msra.mxu0 0
        %1643 = vmatprep.subr.bf16.mxu0 0
        %1644 = vmatpush1.bf16.msra.mxu0 0
        %1645 = vmatprep.subr.bf16.mxu0 0
        %1646 = vmatpush1.bf16.msra.mxu0 0
        %1647 = vmatprep.subr.bf16.mxu0 0
        %1648 = vmatpush1.bf16.msra.mxu0 0
        %1649 = vmatprep.subr.bf16.mxu0 0
        %1650 = vmatpush1.bf16.msra.mxu0 0
        %1651 = vmatprep.subr.bf16.mxu0 0
        %1652 = vmatpush1.bf16.msra.mxu0 0
        %1653 = vmatprep.mubr.bf16.mxu0 0
        %1654 = vmatmul.mubr.bf16.gmra.mrb[0].mxu0 %v779
        %v1655 = vpop.f32.mrb[0].mxu0
        %v1656 = vadd.f32 %v635, %v1655
        %v1657 = vpop.f32.mrb[0].mxu0
        %v1658 = vadd.f32 %v637, %v1657
        %v1659 = vpop.f32.mrb[0].mxu0
        %v1660 = vadd.f32 %v639, %v1659
        %v1661 = vpop.f32.mrb[0].mxu0
        %v1662 = vadd.f32 %v641, %v1661
        %1663 = vdwg.mxu0
        %s1664 = scalar_lea.vmem %s1, 32
        %v1665 = vld [vmem:[%s1664] sm:$0xff]
        %v1666 = vld [vmem:[%s1664 + $0x8] sm:$0xff]
        %1668 = vset.pattern.permute.xlu0 0
        %1669 = vperm.xlu0 %1668, %v1665
        %v1670 = vpop.permute.xlu0 %1669
        %1673 = vset.pattern.permute.xlu0 0
        %1674 = vperm.xlu0 %1673, %v1666
        %v1675 = vpop.permute.xlu0 %1674
        %v1677 = vadd.f32 %v1656, %v1670
        %v1678 = vadd.f32 %v1658, %v1670
        %v1679 = vadd.f32 %v1660, %v1675
        %v1680 = vadd.f32 %v1662, %v1675
        %v1681 = vmax.f32 %v1677, 0.0
        %v1682 = vmax.f32 %v1678, 0.0
        %v1683 = vmax.f32 %v1679, 0.0
        %v1684 = vmax.f32 %v1680, 0.0
        %1685 = vmatprep.subr.mxu0 %v1682
        %1686 = vmatpush1.msra.mxu0 %v1681
        %1687 = vmatprep.subr.mxu0 %v1684
        %1688 = vmatpush1.msra.mxu0 %v1683
        %1689 = vmatprep.subr.mxu0 0.0
        %1690 = vmatpush1.msra.mxu0 0.0
        %1691 = vmatprep.subr.mxu0 0.0
        %1692 = vmatpush1.msra.mxu0 0.0
        %1693 = vmatprep.subr.mxu0 0.0
        %1694 = vmatpush1.msra.mxu0 0.0
        %1695 = vmatprep.subr.mxu0 0.0
        %1696 = vmatpush1.msra.mxu0 0.0
        %1697 = vmatprep.subr.mxu0 0.0
        %1698 = vmatpush1.msra.mxu0 0.0
        %1699 = vmatprep.subr.mxu0 0.0
        %1700 = vmatpush1.msra.mxu0 0.0
        %1701 = vmatprep.subr.mxu0 0.0
        %1702 = vmatpush1.msra.mxu0 0.0
        %1703 = vmatprep.subr.mxu0 0.0
        %1704 = vmatpush1.msra.mxu0 0.0
        %1705 = vmatprep.subr.mxu0 0.0
        %1706 = vmatpush1.msra.mxu0 0.0
        %1707 = vmatprep.subr.mxu0 0.0
        %1708 = vmatpush1.msra.mxu0 0.0
        %1709 = vmatprep.subr.mxu0 0.0
        %1710 = vmatpush1.msra.mxu0 0.0
        %1711 = vmatprep.subr.mxu0 0.0
        %1712 = vmatpush1.msra.mxu0 0.0
        %1713 = vmatprep.subr.mxu0 0.0
        %1714 = vmatpush1.msra.mxu0 0.0
        %1715 = vmatprep.subr.mxu0 0.0
        %1716 = vmatpush1.msra.mxu0 0.0
        %1717 = vmatprep.subr.mxu0 0.0
        %1718 = vmatpush1.msra.mxu0 0.0
        %1719 = vmatprep.subr.mxu0 0.0
        %1720 = vmatpush1.msra.mxu0 0.0
        %1721 = vmatprep.subr.mxu0 0.0
        %1722 = vmatpush1.msra.mxu0 0.0
        %1723 = vmatprep.subr.mxu0 0.0
        %1724 = vmatpush1.msra.mxu0 0.0
        %1725 = vmatprep.subr.mxu0 0.0
        %1726 = vmatpush1.msra.mxu0 0.0
        %1727 = vmatprep.subr.mxu0 0.0
        %1728 = vmatpush1.msra.mxu0 0.0
        %1729 = vmatprep.subr.mxu0 0.0
        %1730 = vmatpush1.msra.mxu0 0.0
        %1731 = vmatprep.subr.mxu0 0.0
        %1732 = vmatpush1.msra.mxu0 0.0
        %1733 = vmatprep.subr.mxu0 0.0
        %1734 = vmatpush1.msra.mxu0 0.0
        %1735 = vmatprep.subr.mxu0 0.0
        %1736 = vmatpush1.msra.mxu0 0.0
        %1737 = vmatprep.subr.mxu0 0.0
        %1738 = vmatpush1.msra.mxu0 0.0
        %1739 = vmatprep.subr.mxu0 0.0
        %1740 = vmatpush1.msra.mxu0 0.0
        %1741 = vmatprep.subr.mxu0 0.0
        %1742 = vmatpush1.msra.mxu0 0.0
        %1743 = vmatprep.subr.mxu0 0.0
        %1744 = vmatpush1.msra.mxu0 0.0
        %1745 = vmatprep.subr.mxu0 0.0
        %1746 = vmatpush1.msra.mxu0 0.0
        %1747 = vmatprep.subr.mxu0 0.0
        %1748 = vmatpush1.msra.mxu0 0.0
        %1749 = vmatprep.mubr.f32.mxu0 0.0
        %1750 = vmatmul.mubr.f32.gmra.mrb[0].mxu0 %v854
        %v1751 = vpop.f32.mrb[0].mxu0
        %v1752 = vadd.f32 0.0, %v1751
        %v1753 = vpop.f32.mrb[0].mxu0
        %v1754 = vadd.f32 0.0, %v1753
        %1755 = vmatprep.mubr.f32.mxu0 0.0
        %1756 = vmatmul.mubr.f32.gmra.mrb[0].mxu0 %v857
        %v1757 = vpop.f32.mrb[0].mxu0
        %v1758 = vadd.f32 0.0, %v1757
        %v1759 = vpop.f32.mrb[0].mxu0
        %v1760 = vadd.f32 0.0, %v1759
        %1761 = vdwg.mxu0
        %1762 = vrot.lane.b32.xlu0 %v1752, 17
        %v1763 = vpop.permute.xlu0 %1762
        %1764 = vrot.lane.b32.xlu0 %v1754, 17
        %v1765 = vpop.permute.xlu0 %1764
        %v1766 = vsel %vm353, %v1763, %v1765
        %v1767 = vsel %vm353, %v1765, %v1763
        %v1768 = vmul.f32 %v1767, %v361
        %v1769 = vmul.f32 %v1766, %v365
        %v1772 = vrot.slane %v1752, 1
        %v1773 = vrot.slane %v1754, 1
        %1776 = vrot.lane.b32.xlu0 %v1772, 16
        %v1777 = vpop.permute.xlu0 %1776
        %1778 = vrot.lane.b32.xlu0 %v1773, 16
        %v1779 = vpop.permute.xlu0 %1778
        %v1780 = vsel %vm374, %v1777, %v1779
        %v1781 = vsel %vm374, %v1779, %v1777
        %v1782 = vmul.f32 %v1781, %v383
        %v1783 = vmul.f32 %v1780, %v387
        %v1784 = vadd.f32 %v1768, %v1782
        %v1785 = vadd.f32 %v1769, %v1783
        %v1786 = vrot.slane %v1752, 2
        %v1787 = vrot.slane %v1754, 2
        %1790 = vrot.lane.b32.xlu0 %v1786, 15
        %v1791 = vpop.permute.xlu0 %1790
        %1792 = vrot.lane.b32.xlu0 %v1787, 15
        %v1793 = vpop.permute.xlu0 %1792
        %v1794 = vsel %vm396, %v1791, %v1793
        %v1795 = vsel %vm396, %v1793, %v1791
        %v1796 = vmul.f32 %v1795, %v405
        %v1797 = vmul.f32 %v1794, %v409
        %v1798 = vadd.f32 %v1784, %v1796
        %v1799 = vadd.f32 %v1785, %v1797
        %v1800 = vrot.slane %v1752, 3
        %v1801 = vrot.slane %v1754, 3
        %1804 = vrot.lane.b32.xlu0 %v1800, 1
        %v1805 = vpop.permute.xlu0 %1804
        %1806 = vrot.lane.b32.xlu0 %v1801, 1
        %v1807 = vpop.permute.xlu0 %1806
        %v1808 = vsel %vm418, %v1805, %v1807
        %v1809 = vsel %vm418, %v1807, %v1805
        %v1810 = vmul.f32 %v1809, %v427
        %v1811 = vmul.f32 %v1808, %v431
        %v1812 = vadd.f32 %v1798, %v1810
        %v1813 = vadd.f32 %v1799, %v1811
        %v1814 = vrot.slane %v1752, 4
        %v1815 = vrot.slane %v1754, 4
        %v1818 = vadd.f32 %v1812, %v1814
        %v1819 = vadd.f32 %v1813, %v1815
        %v1820 = vrot.slane %v1752, 5
        %v1821 = vrot.slane %v1754, 5
        %1824 = vrot.lane.b32.xlu0 %v1820, 127
        %v1825 = vpop.permute.xlu0 %1824
        %1826 = vrot.lane.b32.xlu0 %v1821, 127
        %v1827 = vpop.permute.xlu0 %1826
        %v1828 = vsel %vm440, %v1825, %v1827
        %v1829 = vsel %vm440, %v1827, %v1825
        %v1830 = vmul.f32 %v1828, %v449
        %v1831 = vmul.f32 %v1829, %v453
        %v1832 = vadd.f32 %v1818, %v1830
        %v1833 = vadd.f32 %v1819, %v1831
        %v1834 = vrot.slane %v1752, 6
        %v1835 = vrot.slane %v1754, 6
        %1838 = vrot.lane.b32.xlu0 %v1834, 113
        %v1839 = vpop.permute.xlu0 %1838
        %1840 = vrot.lane.b32.xlu0 %v1835, 113
        %v1841 = vpop.permute.xlu0 %1840
        %v1842 = vsel %vm462, %v1839, %v1841
        %v1843 = vsel %vm462, %v1841, %v1839
        %v1844 = vmul.f32 %v1842, %v471
        %v1845 = vmul.f32 %v1843, %v475
        %v1846 = vadd.f32 %v1832, %v1844
        %v1847 = vadd.f32 %v1833, %v1845
        %v1848 = vrot.slane %v1752, 7
        %v1849 = vrot.slane %v1754, 7
        %1852 = vrot.lane.b32.xlu0 %v1848, 112
        %v1853 = vpop.permute.xlu0 %1852
        %1854 = vrot.lane.b32.xlu0 %v1849, 112
        %v1855 = vpop.permute.xlu0 %1854
        %v1856 = vsel %vm484, %v1853, %v1855
        %v1857 = vsel %vm484, %v1855, %v1853
        %v1858 = vmul.f32 %v1856, %v493
        %v1859 = vmul.f32 %v1857, %v497
        %v1860 = vadd.f32 %v1846, %v1858
        %v1861 = vadd.f32 %v1847, %v1859
        %1862 = vrot.lane.b32.xlu0 %v1758, 111
        %v1863 = vpop.permute.xlu0 %1862
        %1864 = vrot.lane.b32.xlu0 %v1760, 111
        %v1865 = vpop.permute.xlu0 %1864
        %v1866 = vsel %vm506, %v1863, %v1865
        %v1867 = vsel %vm506, %v1865, %v1863
        %v1868 = vmul.f32 %v1866, %v515
        %v1869 = vmul.f32 %v1867, %v519
        %v1870 = vadd.f32 %v1860, %v1868
        %v1871 = vadd.f32 %v1861, %v1869
        %s1872 = sld [smem:[#allocation2 + $0x6]]
        %s1873 = sld [smem:[#allocation2 + $0x7]]
        %s1874 = sld [smem:[#allocation2 + $0x8]]
        %v1875 = vstv %s1872
        %v1876 = vmul.f32 %v1875, %v1487
        %v1877 = vstv %s1873
        %v1878 = vmul.f32 %v1877, %v1870
        %v1879 = vmul.f32 %v1877, %v1871
        %v1882 = vcombine.low %v1878, %v1879
        %v1884 = vunpack.c.l.s4 1966171168
        %v1885 = vunpack.c.0.s8 %v1884
        %v1886 = vlaneseq
        %v1887 = vshrl.u32 %v1886, 7
        %v1888 = vsub.s32 %v1885, %v1887
        %v1889 = vrot.slane %v1882, %v1888
        %v1891 = vunpack.c.l.s4 1966171168
        %v1892 = vunpack.c.0.s8 %v1891
        %v1893 = vlaneseq
        %v1894 = vshrl.u32 %v1893, 7
        %v1895 = vsub.s32 %v1892, %v1894
        %v1896 = vrot.slane %v1889, %v1895
        %v1898 = vadd.f32 %v1876, %v1896
        %v1899 = vstv %s1874
        %v1900 = vadd.f32 %v1898, %v1899
        %v1902 = vlaneseq
        %v1903 = vshrl.u32 %v1902, 7
        %v1904 = vsub.s32 0, %v1903
        %v1905 = vrot.slane %v1900, %v1904
        %v1906 = vlaneseq
        %v1907 = vshrl.u32 %v1906, 7
        %v1908 = vsub.s32 1, %v1907
        %v1909 = vrot.slane %v1900, %v1908
        %1912 = vrot.lane.b32.xlu0 %v1905, 17
        %v1913 = vpop.permute.xlu0 %1912
        %1914 = vrot.lane.b32.xlu0 %v1909, 17
        %v1915 = vpop.permute.xlu0 %1914
        %v1916 = vsel %vm353, %v1913, %v1915
        %v1917 = vsel %vm353, %v1915, %v1913
        %v1918 = vmul.f32 %v1917, %v361
        %v1919 = vmul.f32 %v1916, %v365
        %1920 = vrot.lane.b32.xlu0 %v1905, 16
        %v1921 = vpop.permute.xlu0 %1920
        %1922 = vrot.lane.b32.xlu0 %v1909, 16
        %v1923 = vpop.permute.xlu0 %1922
        %v1924 = vsel %vm374, %v1921, %v1923
        %v1925 = vsel %vm374, %v1923, %v1921
        %v1926 = vmul.f32 %v1925, %v383
        %v1927 = vmul.f32 %v1924, %v387
        %1928 = vrot.lane.b32.xlu0 %v1905, 15
        %v1929 = vpop.permute.xlu0 %1928
        %1930 = vrot.lane.b32.xlu0 %v1909, 15
        %v1931 = vpop.permute.xlu0 %1930
        %v1932 = vsel %vm396, %v1929, %v1931
        %v1933 = vsel %vm396, %v1931, %v1929
        %v1934 = vmul.f32 %v1933, %v405
        %v1935 = vmul.f32 %v1932, %v409
        %1936 = vrot.lane.b32.xlu0 %v1905, 1
        %v1937 = vpop.permute.xlu0 %1936
        %1938 = vrot.lane.b32.xlu0 %v1909, 1
        %v1939 = vpop.permute.xlu0 %1938
        %v1940 = vsel %vm418, %v1937, %v1939
        %v1941 = vsel %vm418, %v1939, %v1937
        %v1942 = vmul.f32 %v1941, %v427
        %v1943 = vmul.f32 %v1940, %v431
        %1944 = vrot.lane.b32.xlu0 %v1905, 127
        %v1945 = vpop.permute.xlu0 %1944
        %1946 = vrot.lane.b32.xlu0 %v1909, 127
        %v1947 = vpop.permute.xlu0 %1946
        %v1948 = vsel %vm440, %v1945, %v1947
        %v1949 = vsel %vm440, %v1947, %v1945
        %v1950 = vmul.f32 %v1948, %v449
        %v1951 = vmul.f32 %v1949, %v453
        %1952 = vrot.lane.b32.xlu0 %v1905, 113
        %v1953 = vpop.permute.xlu0 %1952
        %1954 = vrot.lane.b32.xlu0 %v1909, 113
        %v1955 = vpop.permute.xlu0 %1954
        %v1956 = vsel %vm462, %v1953, %v1955
        %v1957 = vsel %vm462, %v1955, %v1953
        %v1958 = vmul.f32 %v1956, %v471
        %v1959 = vmul.f32 %v1957, %v475
        %1960 = vrot.lane.b32.xlu0 %v1905, 112
        %v1961 = vpop.permute.xlu0 %1960
        %1962 = vrot.lane.b32.xlu0 %v1909, 112
        %v1963 = vpop.permute.xlu0 %1962
        %v1964 = vsel %vm484, %v1961, %v1963
        %v1965 = vsel %vm484, %v1963, %v1961
        %v1966 = vmul.f32 %v1964, %v493
        %v1967 = vmul.f32 %v1965, %v497
        %1968 = vrot.lane.b32.xlu0 %v1905, 111
        %v1969 = vpop.permute.xlu0 %1968
        %1970 = vrot.lane.b32.xlu0 %v1909, 111
        %v1971 = vpop.permute.xlu0 %1970
        %v1972 = vsel %vm506, %v1969, %v1971
        %v1973 = vsel %vm506, %v1971, %v1969
        %v1974 = vmul.f32 %v1972, %v515
        %v1975 = vmul.f32 %v1973, %v519
        %v1978 = vrot.slane %v1926, 7
        %v1979 = vrot.slane %v1927, 7
        %v1984 = vrot.slane %v1934, 6
        %v1985 = vrot.slane %v1935, 6
        %v1990 = vrot.slane %v1942, 5
        %v1991 = vrot.slane %v1943, 5
        %v1996 = vrot.slane %v1950, 3
        %v1997 = vrot.slane %v1951, 3
        %v2002 = vrot.slane %v1958, 2
        %v2003 = vrot.slane %v1959, 2
        %v2008 = vrot.slane %v1966, 1
        %v2009 = vrot.slane %v1967, 1
        %v2012 = vsel %vm560, %v1918, %v1978
        %v2013 = vsel %vm560, %v1919, %v1979
        %v2014 = vsel %vm563, %v2012, %v1984
        %v2015 = vsel %vm563, %v2013, %v1985
        %v2016 = vsel %vm566, %v2014, %v1990
        %v2017 = vsel %vm566, %v2015, %v1991
        %v2018 = vsel %vm569, %v2016, %v1905
        %v2019 = vsel %vm569, %v2017, %v1909
        %v2020 = vsel %vm572, %v2018, %v1996
        %v2021 = vsel %vm572, %v2019, %v1997
        %v2022 = vsel %vm575, %v2020, %v2002
        %v2023 = vsel %vm575, %v2021, %v2003
        %v2024 = vsel %vm578, %v2022, %v2008
        %v2025 = vsel %vm578, %v2023, %v2009
        %v2026 = vpack.c.bf16 %v1974, %v2024
        %v2027 = vpack.c.bf16 %v1975, %v2025
        %v2029 = vand.u32 %v2026, %v593
        %v2032 = vand.u32 %v2027, %v593
        %2034 = vmatprep.subr.bf16.mxu0 %v2032
        %2035 = vmatpush1.bf16.msra.mxu0 %v2029
        %2036 = vmatprep.subr.bf16.mxu0 0
        %2037 = vmatpush1.bf16.msra.mxu0 0
        %2038 = vmatprep.subr.bf16.mxu0 0
        %2039 = vmatpush1.bf16.msra.mxu0 0
        %2040 = vmatprep.subr.bf16.mxu0 0
        %2041 = vmatpush1.bf16.msra.mxu0 0
        %2042 = vmatprep.subr.bf16.mxu0 0
        %2043 = vmatpush1.bf16.msra.mxu0 0
        %2044 = vmatprep.subr.bf16.mxu0 0
        %2045 = vmatpush1.bf16.msra.mxu0 0
        %2046 = vmatprep.subr.bf16.mxu0 0
        %2047 = vmatpush1.bf16.msra.mxu0 0
        %2048 = vmatprep.subr.bf16.mxu0 0
        %2049 = vmatpush1.bf16.msra.mxu0 0
        %2050 = vmatprep.subr.bf16.mxu0 0
        %2051 = vmatpush1.bf16.msra.mxu0 0
        %2052 = vmatprep.subr.bf16.mxu0 0
        %2053 = vmatpush1.bf16.msra.mxu0 0
        %2054 = vmatprep.subr.bf16.mxu0 0
        %2055 = vmatpush1.bf16.msra.mxu0 0
        %2056 = vmatprep.subr.bf16.mxu0 0
        %2057 = vmatpush1.bf16.msra.mxu0 0
        %2058 = vmatprep.subr.bf16.mxu0 0
        %2059 = vmatpush1.bf16.msra.mxu0 0
        %2060 = vmatprep.subr.bf16.mxu0 0
        %2061 = vmatpush1.bf16.msra.mxu0 0
        %2062 = vmatprep.subr.bf16.mxu0 0
        %2063 = vmatpush1.bf16.msra.mxu0 0
        %2064 = vmatprep.subr.bf16.mxu0 0
        %2065 = vmatpush1.bf16.msra.mxu0 0
        %2066 = vmatprep.mubr.bf16.mxu0 0
        %2067 = vmatmul.mubr.bf16.gmra.mrb[0].mxu0 %v779
        %v2068 = vpop.f32.mrb[0].mxu0
        %v2069 = vadd.f32 %v635, %v2068
        %v2070 = vpop.f32.mrb[0].mxu0
        %v2071 = vadd.f32 %v637, %v2070
        %v2072 = vpop.f32.mrb[0].mxu0
        %v2073 = vadd.f32 %v639, %v2072
        %v2074 = vpop.f32.mrb[0].mxu0
        %v2075 = vadd.f32 %v641, %v2074
        %2076 = vdwg.mxu0
        %s2077 = scalar_lea.vmem %s1, 48
        %v2078 = vld [vmem:[%s2077] sm:$0xff]
        %v2079 = vld [vmem:[%s2077 + $0x8] sm:$0xff]
        %2081 = vset.pattern.permute.xlu0 0
        %2082 = vperm.xlu0 %2081, %v2078
        %v2083 = vpop.permute.xlu0 %2082
        %2086 = vset.pattern.permute.xlu0 0
        %2087 = vperm.xlu0 %2086, %v2079
        %v2088 = vpop.permute.xlu0 %2087
        %v2090 = vadd.f32 %v2069, %v2083
        %v2091 = vadd.f32 %v2071, %v2083
        %v2092 = vadd.f32 %v2073, %v2088
        %v2093 = vadd.f32 %v2075, %v2088
        %v2094 = vmax.f32 %v2090, 0.0
        %v2095 = vmax.f32 %v2091, 0.0
        %v2096 = vmax.f32 %v2092, 0.0
        %v2097 = vmax.f32 %v2093, 0.0
        %2098 = vmatprep.subr.mxu0 %v2095
        %2099 = vmatpush1.msra.mxu0 %v2094
        %2100 = vmatprep.subr.mxu0 %v2097
        %2101 = vmatpush1.msra.mxu0 %v2096
        %2102 = vmatprep.subr.mxu0 0.0
        %2103 = vmatpush1.msra.mxu0 0.0
        %2104 = vmatprep.subr.mxu0 0.0
        %2105 = vmatpush1.msra.mxu0 0.0
        %2106 = vmatprep.subr.mxu0 0.0
        %2107 = vmatpush1.msra.mxu0 0.0
        %2108 = vmatprep.subr.mxu0 0.0
        %2109 = vmatpush1.msra.mxu0 0.0
        %2110 = vmatprep.subr.mxu0 0.0
        %2111 = vmatpush1.msra.mxu0 0.0
        %2112 = vmatprep.subr.mxu0 0.0
        %2113 = vmatpush1.msra.mxu0 0.0
        %2114 = vmatprep.subr.mxu0 0.0
        %2115 = vmatpush1.msra.mxu0 0.0
        %2116 = vmatprep.subr.mxu0 0.0
        %2117 = vmatpush1.msra.mxu0 0.0
        %2118 = vmatprep.subr.mxu0 0.0
        %2119 = vmatpush1.msra.mxu0 0.0
        %2120 = vmatprep.subr.mxu0 0.0
        %2121 = vmatpush1.msra.mxu0 0.0
        %2122 = vmatprep.subr.mxu0 0.0
        %2123 = vmatpush1.msra.mxu0 0.0
        %2124 = vmatprep.subr.mxu0 0.0
        %2125 = vmatpush1.msra.mxu0 0.0
        %2126 = vmatprep.subr.mxu0 0.0
        %2127 = vmatpush1.msra.mxu0 0.0
        %2128 = vmatprep.subr.mxu0 0.0
        %2129 = vmatpush1.msra.mxu0 0.0
        %2130 = vmatprep.subr.mxu0 0.0
        %2131 = vmatpush1.msra.mxu0 0.0
        %2132 = vmatprep.subr.mxu0 0.0
        %2133 = vmatpush1.msra.mxu0 0.0
        %2134 = vmatprep.subr.mxu0 0.0
        %2135 = vmatpush1.msra.mxu0 0.0
        %2136 = vmatprep.subr.mxu0 0.0
        %2137 = vmatpush1.msra.mxu0 0.0
        %2138 = vmatprep.subr.mxu0 0.0
        %2139 = vmatpush1.msra.mxu0 0.0
        %2140 = vmatprep.subr.mxu0 0.0
        %2141 = vmatpush1.msra.mxu0 0.0
        %2142 = vmatprep.subr.mxu0 0.0
        %2143 = vmatpush1.msra.mxu0 0.0
        %2144 = vmatprep.subr.mxu0 0.0
        %2145 = vmatpush1.msra.mxu0 0.0
        %2146 = vmatprep.subr.mxu0 0.0
        %2147 = vmatpush1.msra.mxu0 0.0
        %2148 = vmatprep.subr.mxu0 0.0
        %2149 = vmatpush1.msra.mxu0 0.0
        %2150 = vmatprep.subr.mxu0 0.0
        %2151 = vmatpush1.msra.mxu0 0.0
        %2152 = vmatprep.subr.mxu0 0.0
        %2153 = vmatpush1.msra.mxu0 0.0
        %2154 = vmatprep.subr.mxu0 0.0
        %2155 = vmatpush1.msra.mxu0 0.0
        %2156 = vmatprep.subr.mxu0 0.0
        %2157 = vmatpush1.msra.mxu0 0.0
        %2158 = vmatprep.subr.mxu0 0.0
        %2159 = vmatpush1.msra.mxu0 0.0
        %2160 = vmatprep.subr.mxu0 0.0
        %2161 = vmatpush1.msra.mxu0 0.0
        %2162 = vmatprep.mubr.f32.mxu0 0.0
        %2163 = vmatmul.mubr.f32.gmra.mrb[0].mxu0 %v854
        %v2164 = vpop.f32.mrb[0].mxu0
        %v2165 = vadd.f32 0.0, %v2164
        %v2166 = vpop.f32.mrb[0].mxu0
        %v2167 = vadd.f32 0.0, %v2166
        %2168 = vmatprep.mubr.f32.mxu0 0.0
        %2169 = vmatmul.mubr.f32.gmra.mrb[0].mxu0 %v857
        %v2170 = vpop.f32.mrb[0].mxu0
        %v2171 = vadd.f32 0.0, %v2170
        %v2172 = vpop.f32.mrb[0].mxu0
        %v2173 = vadd.f32 0.0, %v2172
        %2174 = vdwg.mxu0
        %2175 = vrot.lane.b32.xlu0 %v2165, 17
        %v2176 = vpop.permute.xlu0 %2175
        %2177 = vrot.lane.b32.xlu0 %v2167, 17
        %v2178 = vpop.permute.xlu0 %2177
        %v2179 = vsel %vm353, %v2176, %v2178
        %v2180 = vsel %vm353, %v2178, %v2176
        %v2181 = vmul.f32 %v2180, %v361
        %v2182 = vmul.f32 %v2179, %v365
        %v2185 = vrot.slane %v2165, 1
        %v2186 = vrot.slane %v2167, 1
        %2189 = vrot.lane.b32.xlu0 %v2185, 16
        %v2190 = vpop.permute.xlu0 %2189
        %2191 = vrot.lane.b32.xlu0 %v2186, 16
        %v2192 = vpop.permute.xlu0 %2191
        %v2193 = vsel %vm374, %v2190, %v2192
        %v2194 = vsel %vm374, %v2192, %v2190
        %v2195 = vmul.f32 %v2194, %v383
        %v2196 = vmul.f32 %v2193, %v387
        %v2197 = vadd.f32 %v2181, %v2195
        %v2198 = vadd.f32 %v2182, %v2196
        %v2199 = vrot.slane %v2165, 2
        %v2200 = vrot.slane %v2167, 2
        %2203 = vrot.lane.b32.xlu0 %v2199, 15
        %v2204 = vpop.permute.xlu0 %2203
        %2205 = vrot.lane.b32.xlu0 %v2200, 15
        %v2206 = vpop.permute.xlu0 %2205
        %v2207 = vsel %vm396, %v2204, %v2206
        %v2208 = vsel %vm396, %v2206, %v2204
        %v2209 = vmul.f32 %v2208, %v405
        %v2210 = vmul.f32 %v2207, %v409
        %v2211 = vadd.f32 %v2197, %v2209
        %v2212 = vadd.f32 %v2198, %v2210
        %v2213 = vrot.slane %v2165, 3
        %v2214 = vrot.slane %v2167, 3
        %2217 = vrot.lane.b32.xlu0 %v2213, 1
        %v2218 = vpop.permute.xlu0 %2217
        %2219 = vrot.lane.b32.xlu0 %v2214, 1
        %v2220 = vpop.permute.xlu0 %2219
        %v2221 = vsel %vm418, %v2218, %v2220
        %v2222 = vsel %vm418, %v2220, %v2218
        %v2223 = vmul.f32 %v2222, %v427
        %v2224 = vmul.f32 %v2221, %v431
        %v2225 = vadd.f32 %v2211, %v2223
        %v2226 = vadd.f32 %v2212, %v2224
        %v2227 = vrot.slane %v2165, 4
        %v2228 = vrot.slane %v2167, 4
        %v2231 = vadd.f32 %v2225, %v2227
        %v2232 = vadd.f32 %v2226, %v2228
        %v2233 = vrot.slane %v2165, 5
        %v2234 = vrot.slane %v2167, 5
        %2237 = vrot.lane.b32.xlu0 %v2233, 127
        %v2238 = vpop.permute.xlu0 %2237
        %2239 = vrot.lane.b32.xlu0 %v2234, 127
        %v2240 = vpop.permute.xlu0 %2239
        %v2241 = vsel %vm440, %v2238, %v2240
        %v2242 = vsel %vm440, %v2240, %v2238
        %v2243 = vmul.f32 %v2241, %v449
        %v2244 = vmul.f32 %v2242, %v453
        %v2245 = vadd.f32 %v2231, %v2243
        %v2246 = vadd.f32 %v2232, %v2244
        %v2247 = vrot.slane %v2165, 6
        %v2248 = vrot.slane %v2167, 6
        %2251 = vrot.lane.b32.xlu0 %v2247, 113
        %v2252 = vpop.permute.xlu0 %2251
        %2253 = vrot.lane.b32.xlu0 %v2248, 113
        %v2254 = vpop.permute.xlu0 %2253
        %v2255 = vsel %vm462, %v2252, %v2254
        %v2256 = vsel %vm462, %v2254, %v2252
        %v2257 = vmul.f32 %v2255, %v471
        %v2258 = vmul.f32 %v2256, %v475
        %v2259 = vadd.f32 %v2245, %v2257
        %v2260 = vadd.f32 %v2246, %v2258
        %v2261 = vrot.slane %v2165, 7
        %v2262 = vrot.slane %v2167, 7
        %2265 = vrot.lane.b32.xlu0 %v2261, 112
        %v2266 = vpop.permute.xlu0 %2265
        %2267 = vrot.lane.b32.xlu0 %v2262, 112
        %v2268 = vpop.permute.xlu0 %2267
        %v2269 = vsel %vm484, %v2266, %v2268
        %v2270 = vsel %vm484, %v2268, %v2266
        %v2271 = vmul.f32 %v2269, %v493
        %v2272 = vmul.f32 %v2270, %v497
        %v2273 = vadd.f32 %v2259, %v2271
        %v2274 = vadd.f32 %v2260, %v2272
        %2275 = vrot.lane.b32.xlu0 %v2171, 111
        %v2276 = vpop.permute.xlu0 %2275
        %2277 = vrot.lane.b32.xlu0 %v2173, 111
        %v2278 = vpop.permute.xlu0 %2277
        %v2279 = vsel %vm506, %v2276, %v2278
        %v2280 = vsel %vm506, %v2278, %v2276
        %v2281 = vmul.f32 %v2279, %v515
        %v2282 = vmul.f32 %v2280, %v519
        %v2283 = vadd.f32 %v2273, %v2281
        %v2284 = vadd.f32 %v2274, %v2282
        %s2285 = sld [smem:[#allocation2 + $0x9]]
        %s2286 = sld [smem:[#allocation2 + $0xa]]
        %s2287 = sld [smem:[#allocation2 + $0xb]]
        %v2288 = vstv %s2285
        %v2289 = vmul.f32 %v2288, %v1900
        %v2290 = vstv %s2286
        %v2291 = vmul.f32 %v2290, %v2283
        %v2292 = vmul.f32 %v2290, %v2284
        %v2295 = vcombine.low %v2291, %v2292
        %v2297 = vunpack.c.l.s4 1966171168
        %v2298 = vunpack.c.0.s8 %v2297
        %v2299 = vlaneseq
        %v2300 = vshrl.u32 %v2299, 7
        %v2301 = vsub.s32 %v2298, %v2300
        %v2302 = vrot.slane %v2295, %v2301
        %v2304 = vunpack.c.l.s4 1966171168
        %v2305 = vunpack.c.0.s8 %v2304
        %v2306 = vlaneseq
        %v2307 = vshrl.u32 %v2306, 7
        %v2308 = vsub.s32 %v2305, %v2307
        %v2309 = vrot.slane %v2302, %v2308
        %v2311 = vadd.f32 %v2289, %v2309
        %v2312 = vstv %s2287
        %v2313 = vadd.f32 %v2311, %v2312
        %v2315 = vlaneseq
        %v2316 = vshrl.u32 %v2315, 7
        %v2317 = vsub.s32 0, %v2316
        %v2318 = vrot.slane %v2313, %v2317
        %v2319 = vlaneseq
        %v2320 = vshrl.u32 %v2319, 7
        %v2321 = vsub.s32 1, %v2320
        %v2322 = vrot.slane %v2313, %v2321
        %2325 = vrot.lane.b32.xlu0 %v2318, 17
        %v2326 = vpop.permute.xlu0 %2325
        %2327 = vrot.lane.b32.xlu0 %v2322, 17
        %v2328 = vpop.permute.xlu0 %2327
        %v2329 = vsel %vm353, %v2326, %v2328
        %v2330 = vsel %vm353, %v2328, %v2326
        %v2331 = vmul.f32 %v2330, %v361
        %v2332 = vmul.f32 %v2329, %v365
        %2333 = vrot.lane.b32.xlu0 %v2318, 16
        %v2334 = vpop.permute.xlu0 %2333
        %2335 = vrot.lane.b32.xlu0 %v2322, 16
        %v2336 = vpop.permute.xlu0 %2335
        %v2337 = vsel %vm374, %v2334, %v2336
        %v2338 = vsel %vm374, %v2336, %v2334
        %v2339 = vmul.f32 %v2338, %v383
        %v2340 = vmul.f32 %v2337, %v387
        %2341 = vrot.lane.b32.xlu0 %v2318, 15
        %v2342 = vpop.permute.xlu0 %2341
        %2343 = vrot.lane.b32.xlu0 %v2322, 15
        %v2344 = vpop.permute.xlu0 %2343
        %v2345 = vsel %vm396, %v2342, %v2344
        %v2346 = vsel %vm396, %v2344, %v2342
        %v2347 = vmul.f32 %v2346, %v405
        %v2348 = vmul.f32 %v2345, %v409
        %2349 = vrot.lane.b32.xlu0 %v2318, 1
        %v2350 = vpop.permute.xlu0 %2349
        %2351 = vrot.lane.b32.xlu0 %v2322, 1
        %v2352 = vpop.permute.xlu0 %2351
        %v2353 = vsel %vm418, %v2350, %v2352
        %v2354 = vsel %vm418, %v2352, %v2350
        %v2355 = vmul.f32 %v2354, %v427
        %v2356 = vmul.f32 %v2353, %v431
        %2357 = vrot.lane.b32.xlu0 %v2318, 127
        %v2358 = vpop.permute.xlu0 %2357
        %2359 = vrot.lane.b32.xlu0 %v2322, 127
        %v2360 = vpop.permute.xlu0 %2359
        %v2361 = vsel %vm440, %v2358, %v2360
        %v2362 = vsel %vm440, %v2360, %v2358
        %v2363 = vmul.f32 %v2361, %v449
        %v2364 = vmul.f32 %v2362, %v453
        %2365 = vrot.lane.b32.xlu0 %v2318, 113
        %v2366 = vpop.permute.xlu0 %2365
        %2367 = vrot.lane.b32.xlu0 %v2322, 113
        %v2368 = vpop.permute.xlu0 %2367
        %v2369 = vsel %vm462, %v2366, %v2368
        %v2370 = vsel %vm462, %v2368, %v2366
        %v2371 = vmul.f32 %v2369, %v471
        %v2372 = vmul.f32 %v2370, %v475
        %2373 = vrot.lane.b32.xlu0 %v2318, 112
        %v2374 = vpop.permute.xlu0 %2373
        %2375 = vrot.lane.b32.xlu0 %v2322, 112
        %v2376 = vpop.permute.xlu0 %2375
        %v2377 = vsel %vm484, %v2374, %v2376
        %v2378 = vsel %vm484, %v2376, %v2374
        %v2379 = vmul.f32 %v2377, %v493
        %v2380 = vmul.f32 %v2378, %v497
        %2381 = vrot.lane.b32.xlu0 %v2318, 111
        %v2382 = vpop.permute.xlu0 %2381
        %2383 = vrot.lane.b32.xlu0 %v2322, 111
        %v2384 = vpop.permute.xlu0 %2383
        %v2385 = vsel %vm506, %v2382, %v2384
        %v2386 = vsel %vm506, %v2384, %v2382
        %v2387 = vmul.f32 %v2385, %v515
        %v2388 = vmul.f32 %v2386, %v519
        %v2391 = vrot.slane %v2339, 7
        %v2392 = vrot.slane %v2340, 7
        %v2397 = vrot.slane %v2347, 6
        %v2398 = vrot.slane %v2348, 6
        %v2403 = vrot.slane %v2355, 5
        %v2404 = vrot.slane %v2356, 5
        %v2409 = vrot.slane %v2363, 3
        %v2410 = vrot.slane %v2364, 3
        %v2415 = vrot.slane %v2371, 2
        %v2416 = vrot.slane %v2372, 2
        %v2421 = vrot.slane %v2379, 1
        %v2422 = vrot.slane %v2380, 1
        %v2425 = vsel %vm560, %v2331, %v2391
        %v2426 = vsel %vm560, %v2332, %v2392
        %v2427 = vsel %vm563, %v2425, %v2397
        %v2428 = vsel %vm563, %v2426, %v2398
        %v2429 = vsel %vm566, %v2427, %v2403
        %v2430 = vsel %vm566, %v2428, %v2404
        %v2431 = vsel %vm569, %v2429, %v2318
        %v2432 = vsel %vm569, %v2430, %v2322
        %v2433 = vsel %vm572, %v2431, %v2409
        %v2434 = vsel %vm572, %v2432, %v2410
        %v2435 = vsel %vm575, %v2433, %v2415
        %v2436 = vsel %vm575, %v2434, %v2416
        %v2437 = vsel %vm578, %v2435, %v2421
        %v2438 = vsel %vm578, %v2436, %v2422
        %v2439 = vpack.c.bf16 %v2387, %v2437
        %v2440 = vpack.c.bf16 %v2388, %v2438
        %v2442 = vand.u32 %v2439, %v593
        %v2445 = vand.u32 %v2440, %v593
        %2447 = vmatprep.subr.bf16.mxu0 %v2445
        %2448 = vmatpush1.bf16.msra.mxu0 %v2442
        %2449 = vmatprep.subr.bf16.mxu0 0
        %2450 = vmatpush1.bf16.msra.mxu0 0
        %2451 = vmatprep.subr.bf16.mxu0 0
        %2452 = vmatpush1.bf16.msra.mxu0 0
        %2453 = vmatprep.subr.bf16.mxu0 0
        %2454 = vmatpush1.bf16.msra.mxu0 0
        %2455 = vmatprep.subr.bf16.mxu0 0
        %2456 = vmatpush1.bf16.msra.mxu0 0
        %2457 = vmatprep.subr.bf16.mxu0 0
        %2458 = vmatpush1.bf16.msra.mxu0 0
        %2459 = vmatprep.subr.bf16.mxu0 0
        %2460 = vmatpush1.bf16.msra.mxu0 0
        %2461 = vmatprep.subr.bf16.mxu0 0
        %2462 = vmatpush1.bf16.msra.mxu0 0
        %2463 = vmatprep.subr.bf16.mxu0 0
        %2464 = vmatpush1.bf16.msra.mxu0 0
        %2465 = vmatprep.subr.bf16.mxu0 0
        %2466 = vmatpush1.bf16.msra.mxu0 0
        %2467 = vmatprep.subr.bf16.mxu0 0
        %2468 = vmatpush1.bf16.msra.mxu0 0
        %2469 = vmatprep.subr.bf16.mxu0 0
        %2470 = vmatpush1.bf16.msra.mxu0 0
        %2471 = vmatprep.subr.bf16.mxu0 0
        %2472 = vmatpush1.bf16.msra.mxu0 0
        %2473 = vmatprep.subr.bf16.mxu0 0
        %2474 = vmatpush1.bf16.msra.mxu0 0
        %2475 = vmatprep.subr.bf16.mxu0 0
        %2476 = vmatpush1.bf16.msra.mxu0 0
        %2477 = vmatprep.subr.bf16.mxu0 0
        %2478 = vmatpush1.bf16.msra.mxu0 0
        %2479 = vmatprep.mubr.bf16.mxu0 0
        %2480 = vmatmul.mubr.bf16.gmra.mrb[0].mxu0 %v779
        %v2481 = vpop.f32.mrb[0].mxu0
        %v2482 = vadd.f32 %v635, %v2481
        %v2483 = vpop.f32.mrb[0].mxu0
        %v2484 = vadd.f32 %v637, %v2483
        %v2485 = vpop.f32.mrb[0].mxu0
        %v2486 = vadd.f32 %v639, %v2485
        %v2487 = vpop.f32.mrb[0].mxu0
        %v2488 = vadd.f32 %v641, %v2487
        %2489 = vdwg.mxu0
        %s2490 = scalar_lea.vmem %s1, 64
        %v2491 = vld [vmem:[%s2490] sm:$0xff]
        %v2492 = vld [vmem:[%s2490 + $0x8] sm:$0xff]
        %2494 = vset.pattern.permute.xlu0 0
        %2495 = vperm.xlu0 %2494, %v2491
        %v2496 = vpop.permute.xlu0 %2495
        %2499 = vset.pattern.permute.xlu0 0
        %2500 = vperm.xlu0 %2499, %v2492
        %v2501 = vpop.permute.xlu0 %2500
        %v2503 = vadd.f32 %v2482, %v2496
        %v2504 = vadd.f32 %v2484, %v2496
        %v2505 = vadd.f32 %v2486, %v2501
        %v2506 = vadd.f32 %v2488, %v2501
        %v2507 = vmax.f32 %v2503, 0.0
        %v2508 = vmax.f32 %v2504, 0.0
        %v2509 = vmax.f32 %v2505, 0.0
        %v2510 = vmax.f32 %v2506, 0.0
        %2511 = vmatprep.subr.mxu0 %v2508
        %2512 = vmatpush1.msra.mxu0 %v2507
        %2513 = vmatprep.subr.mxu0 %v2510
        %2514 = vmatpush1.msra.mxu0 %v2509
        %2515 = vmatprep.subr.mxu0 0.0
        %2516 = vmatpush1.msra.mxu0 0.0
        %2517 = vmatprep.subr.mxu0 0.0
        %2518 = vmatpush1.msra.mxu0 0.0
        %2519 = vmatprep.subr.mxu0 0.0
        %2520 = vmatpush1.msra.mxu0 0.0
        %2521 = vmatprep.subr.mxu0 0.0
        %2522 = vmatpush1.msra.mxu0 0.0
        %2523 = vmatprep.subr.mxu0 0.0
        %2524 = vmatpush1.msra.mxu0 0.0
        %2525 = vmatprep.subr.mxu0 0.0
        %2526 = vmatpush1.msra.mxu0 0.0
        %2527 = vmatprep.subr.mxu0 0.0
        %2528 = vmatpush1.msra.mxu0 0.0
        %2529 = vmatprep.subr.mxu0 0.0
        %2530 = vmatpush1.msra.mxu0 0.0
        %2531 = vmatprep.subr.mxu0 0.0
        %2532 = vmatpush1.msra.mxu0 0.0
        %2533 = vmatprep.subr.mxu0 0.0
        %2534 = vmatpush1.msra.mxu0 0.0
        %2535 = vmatprep.subr.mxu0 0.0
        %2536 = vmatpush1.msra.mxu0 0.0
        %2537 = vmatprep.subr.mxu0 0.0
        %2538 = vmatpush1.msra.mxu0 0.0
        %2539 = vmatprep.subr.mxu0 0.0
        %2540 = vmatpush1.msra.mxu0 0.0
        %2541 = vmatprep.subr.mxu0 0.0
        %2542 = vmatpush1.msra.mxu0 0.0
        %2543 = vmatprep.subr.mxu0 0.0
        %2544 = vmatpush1.msra.mxu0 0.0
        %2545 = vmatprep.subr.mxu0 0.0
        %2546 = vmatpush1.msra.mxu0 0.0
        %2547 = vmatprep.subr.mxu0 0.0
        %2548 = vmatpush1.msra.mxu0 0.0
        %2549 = vmatprep.subr.mxu0 0.0
        %2550 = vmatpush1.msra.mxu0 0.0
        %2551 = vmatprep.subr.mxu0 0.0
        %2552 = vmatpush1.msra.mxu0 0.0
        %2553 = vmatprep.subr.mxu0 0.0
        %2554 = vmatpush1.msra.mxu0 0.0
        %2555 = vmatprep.subr.mxu0 0.0
        %2556 = vmatpush1.msra.mxu0 0.0
        %2557 = vmatprep.subr.mxu0 0.0
        %2558 = vmatpush1.msra.mxu0 0.0
        %2559 = vmatprep.subr.mxu0 0.0
        %2560 = vmatpush1.msra.mxu0 0.0
        %2561 = vmatprep.subr.mxu0 0.0
        %2562 = vmatpush1.msra.mxu0 0.0
        %2563 = vmatprep.subr.mxu0 0.0
        %2564 = vmatpush1.msra.mxu0 0.0
        %2565 = vmatprep.subr.mxu0 0.0
        %2566 = vmatpush1.msra.mxu0 0.0
        %2567 = vmatprep.subr.mxu0 0.0
        %2568 = vmatpush1.msra.mxu0 0.0
        %2569 = vmatprep.subr.mxu0 0.0
        %2570 = vmatpush1.msra.mxu0 0.0
        %2571 = vmatprep.subr.mxu0 0.0
        %2572 = vmatpush1.msra.mxu0 0.0
        %2573 = vmatprep.subr.mxu0 0.0
        %2574 = vmatpush1.msra.mxu0 0.0
        %2575 = vmatprep.mubr.f32.mxu0 0.0
        %2576 = vmatmul.mubr.f32.gmra.mrb[0].mxu0 %v854
        %v2577 = vpop.f32.mrb[0].mxu0
        %v2578 = vadd.f32 0.0, %v2577
        %v2579 = vpop.f32.mrb[0].mxu0
        %v2580 = vadd.f32 0.0, %v2579
        %2581 = vmatprep.mubr.f32.mxu0 0.0
        %2582 = vmatmul.mubr.f32.gmra.mrb[0].mxu0 %v857
        %v2583 = vpop.f32.mrb[0].mxu0
        %v2584 = vadd.f32 0.0, %v2583
        %v2585 = vpop.f32.mrb[0].mxu0
        %v2586 = vadd.f32 0.0, %v2585
        %2587 = vdwg.mxu0
        %2588 = vrot.lane.b32.xlu0 %v2578, 17
        %v2589 = vpop.permute.xlu0 %2588
        %2590 = vrot.lane.b32.xlu0 %v2580, 17
        %v2591 = vpop.permute.xlu0 %2590
        %v2592 = vsel %vm353, %v2589, %v2591
        %v2593 = vsel %vm353, %v2591, %v2589
        %v2594 = vmul.f32 %v2593, %v361
        %v2595 = vmul.f32 %v2592, %v365
        %v2598 = vrot.slane %v2578, 1
        %v2599 = vrot.slane %v2580, 1
        %2602 = vrot.lane.b32.xlu0 %v2598, 16
        %v2603 = vpop.permute.xlu0 %2602
        %2604 = vrot.lane.b32.xlu0 %v2599, 16
        %v2605 = vpop.permute.xlu0 %2604
        %v2606 = vsel %vm374, %v2603, %v2605
        %v2607 = vsel %vm374, %v2605, %v2603
        %v2608 = vmul.f32 %v2607, %v383
        %v2609 = vmul.f32 %v2606, %v387
        %v2610 = vadd.f32 %v2594, %v2608
        %v2611 = vadd.f32 %v2595, %v2609
        %v2612 = vrot.slane %v2578, 2
        %v2613 = vrot.slane %v2580, 2
        %2616 = vrot.lane.b32.xlu0 %v2612, 15
        %v2617 = vpop.permute.xlu0 %2616
        %2618 = vrot.lane.b32.xlu0 %v2613, 15
        %v2619 = vpop.permute.xlu0 %2618
        %v2620 = vsel %vm396, %v2617, %v2619
        %v2621 = vsel %vm396, %v2619, %v2617
        %v2622 = vmul.f32 %v2621, %v405
        %v2623 = vmul.f32 %v2620, %v409
        %v2624 = vadd.f32 %v2610, %v2622
        %v2625 = vadd.f32 %v2611, %v2623
        %v2626 = vrot.slane %v2578, 3
        %v2627 = vrot.slane %v2580, 3
        %2630 = vrot.lane.b32.xlu0 %v2626, 1
        %v2631 = vpop.permute.xlu0 %2630
        %2632 = vrot.lane.b32.xlu0 %v2627, 1
        %v2633 = vpop.permute.xlu0 %2632
        %v2634 = vsel %vm418, %v2631, %v2633
        %v2635 = vsel %vm418, %v2633, %v2631
        %v2636 = vmul.f32 %v2635, %v427
        %v2637 = vmul.f32 %v2634, %v431
        %v2638 = vadd.f32 %v2624, %v2636
        %v2639 = vadd.f32 %v2625, %v2637
        %v2640 = vrot.slane %v2578, 4
        %v2641 = vrot.slane %v2580, 4
        %v2644 = vadd.f32 %v2638, %v2640
        %v2645 = vadd.f32 %v2639, %v2641
        %v2646 = vrot.slane %v2578, 5
        %v2647 = vrot.slane %v2580, 5
        %2650 = vrot.lane.b32.xlu0 %v2646, 127
        %v2651 = vpop.permute.xlu0 %2650
        %2652 = vrot.lane.b32.xlu0 %v2647, 127
        %v2653 = vpop.permute.xlu0 %2652
        %v2654 = vsel %vm440, %v2651, %v2653
        %v2655 = vsel %vm440, %v2653, %v2651
        %v2656 = vmul.f32 %v2654, %v449
        %v2657 = vmul.f32 %v2655, %v453
        %v2658 = vadd.f32 %v2644, %v2656
        %v2659 = vadd.f32 %v2645, %v2657
        %v2660 = vrot.slane %v2578, 6
        %v2661 = vrot.slane %v2580, 6
        %2664 = vrot.lane.b32.xlu0 %v2660, 113
        %v2665 = vpop.permute.xlu0 %2664
        %2666 = vrot.lane.b32.xlu0 %v2661, 113
        %v2667 = vpop.permute.xlu0 %2666
        %v2668 = vsel %vm462, %v2665, %v2667
        %v2669 = vsel %vm462, %v2667, %v2665
        %v2670 = vmul.f32 %v2668, %v471
        %v2671 = vmul.f32 %v2669, %v475
        %v2672 = vadd.f32 %v2658, %v2670
        %v2673 = vadd.f32 %v2659, %v2671
        %v2674 = vrot.slane %v2578, 7
        %v2675 = vrot.slane %v2580, 7
        %2678 = vrot.lane.b32.xlu0 %v2674, 112
        %v2679 = vpop.permute.xlu0 %2678
        %2680 = vrot.lane.b32.xlu0 %v2675, 112
        %v2681 = vpop.permute.xlu0 %2680
        %v2682 = vsel %vm484, %v2679, %v2681
        %v2683 = vsel %vm484, %v2681, %v2679
        %v2684 = vmul.f32 %v2682, %v493
        %v2685 = vmul.f32 %v2683, %v497
        %v2686 = vadd.f32 %v2672, %v2684
        %v2687 = vadd.f32 %v2673, %v2685
        %2688 = vrot.lane.b32.xlu0 %v2584, 111
        %v2689 = vpop.permute.xlu0 %2688
        %2690 = vrot.lane.b32.xlu0 %v2586, 111
        %v2691 = vpop.permute.xlu0 %2690
        %v2692 = vsel %vm506, %v2689, %v2691
        %v2693 = vsel %vm506, %v2691, %v2689
        %v2694 = vmul.f32 %v2692, %v515
        %v2695 = vmul.f32 %v2693, %v519
        %v2696 = vadd.f32 %v2686, %v2694
        %v2697 = vadd.f32 %v2687, %v2695
        %s2698 = sld [smem:[#allocation2 + $0xc]]
        %s2699 = sld [smem:[#allocation2 + $0xd]]
        %s2700 = sld [smem:[#allocation2 + $0xe]]
        %v2701 = vstv %s2698
        %v2702 = vmul.f32 %v2701, %v2313
        %v2703 = vstv %s2699
        %v2704 = vmul.f32 %v2703, %v2696
        %v2705 = vmul.f32 %v2703, %v2697
        %v2708 = vcombine.low %v2704, %v2705
        %v2710 = vunpack.c.l.s4 1966171168
        %v2711 = vunpack.c.0.s8 %v2710
        %v2712 = vlaneseq
        %v2713 = vshrl.u32 %v2712, 7
        %v2714 = vsub.s32 %v2711, %v2713
        %v2715 = vrot.slane %v2708, %v2714
        %v2717 = vunpack.c.l.s4 1966171168
        %v2718 = vunpack.c.0.s8 %v2717
        %v2719 = vlaneseq
        %v2720 = vshrl.u32 %v2719, 7
        %v2721 = vsub.s32 %v2718, %v2720
        %v2722 = vrot.slane %v2715, %v2721
        %v2724 = vadd.f32 %v2702, %v2722
        %v2725 = vstv %s2700
        %v2726 = vadd.f32 %v2724, %v2725
        %v2728 = vlaneseq
        %v2729 = vshrl.u32 %v2728, 7
        %v2730 = vsub.s32 0, %v2729
        %v2731 = vrot.slane %v2726, %v2730
        %v2732 = vlaneseq
        %v2733 = vshrl.u32 %v2732, 7
        %v2734 = vsub.s32 1, %v2733
        %v2735 = vrot.slane %v2726, %v2734
        %2738 = vrot.lane.b32.xlu0 %v2731, 17
        %v2739 = vpop.permute.xlu0 %2738
        %2740 = vrot.lane.b32.xlu0 %v2735, 17
        %v2741 = vpop.permute.xlu0 %2740
        %v2742 = vsel %vm353, %v2739, %v2741
        %v2743 = vsel %vm353, %v2741, %v2739
        %v2744 = vmul.f32 %v2743, %v361
        %v2745 = vmul.f32 %v2742, %v365
        %2746 = vrot.lane.b32.xlu0 %v2731, 16
        %v2747 = vpop.permute.xlu0 %2746
        %2748 = vrot.lane.b32.xlu0 %v2735, 16
        %v2749 = vpop.permute.xlu0 %2748
        %v2750 = vsel %vm374, %v2747, %v2749
        %v2751 = vsel %vm374, %v2749, %v2747
        %v2752 = vmul.f32 %v2751, %v383
        %v2753 = vmul.f32 %v2750, %v387
        %2754 = vrot.lane.b32.xlu0 %v2731, 15
        %v2755 = vpop.permute.xlu0 %2754
        %2756 = vrot.lane.b32.xlu0 %v2735, 15
        %v2757 = vpop.permute.xlu0 %2756
        %v2758 = vsel %vm396, %v2755, %v2757
        %v2759 = vsel %vm396, %v2757, %v2755
        %v2760 = vmul.f32 %v2759, %v405
        %v2761 = vmul.f32 %v2758, %v409
        %2762 = vrot.lane.b32.xlu0 %v2731, 1
        %v2763 = vpop.permute.xlu0 %2762
        %2764 = vrot.lane.b32.xlu0 %v2735, 1
        %v2765 = vpop.permute.xlu0 %2764
        %v2766 = vsel %vm418, %v2763, %v2765
        %v2767 = vsel %vm418, %v2765, %v2763
        %v2768 = vmul.f32 %v2767, %v427
        %v2769 = vmul.f32 %v2766, %v431
        %2770 = vrot.lane.b32.xlu0 %v2731, 127
        %v2771 = vpop.permute.xlu0 %2770
        %2772 = vrot.lane.b32.xlu0 %v2735, 127
        %v2773 = vpop.permute.xlu0 %2772
        %v2774 = vsel %vm440, %v2771, %v2773
        %v2775 = vsel %vm440, %v2773, %v2771
        %v2776 = vmul.f32 %v2774, %v449
        %v2777 = vmul.f32 %v2775, %v453
        %2778 = vrot.lane.b32.xlu0 %v2731, 113
        %v2779 = vpop.permute.xlu0 %2778
        %2780 = vrot.lane.b32.xlu0 %v2735, 113
        %v2781 = vpop.permute.xlu0 %2780
        %v2782 = vsel %vm462, %v2779, %v2781
        %v2783 = vsel %vm462, %v2781, %v2779
        %v2784 = vmul.f32 %v2782, %v471
        %v2785 = vmul.f32 %v2783, %v475
        %2786 = vrot.lane.b32.xlu0 %v2731, 112
        %v2787 = vpop.permute.xlu0 %2786
        %2788 = vrot.lane.b32.xlu0 %v2735, 112
        %v2789 = vpop.permute.xlu0 %2788
        %v2790 = vsel %vm484, %v2787, %v2789
        %v2791 = vsel %vm484, %v2789, %v2787
        %v2792 = vmul.f32 %v2790, %v493
        %v2793 = vmul.f32 %v2791, %v497
        %2794 = vrot.lane.b32.xlu0 %v2731, 111
        %v2795 = vpop.permute.xlu0 %2794
        %2796 = vrot.lane.b32.xlu0 %v2735, 111
        %v2797 = vpop.permute.xlu0 %2796
        %v2798 = vsel %vm506, %v2795, %v2797
        %v2799 = vsel %vm506, %v2797, %v2795
        %v2800 = vmul.f32 %v2798, %v515
        %v2801 = vmul.f32 %v2799, %v519
        %v2804 = vrot.slane %v2752, 7
        %v2805 = vrot.slane %v2753, 7
        %v2810 = vrot.slane %v2760, 6
        %v2811 = vrot.slane %v2761, 6
        %v2816 = vrot.slane %v2768, 5
        %v2817 = vrot.slane %v2769, 5
        %v2822 = vrot.slane %v2776, 3
        %v2823 = vrot.slane %v2777, 3
        %v2828 = vrot.slane %v2784, 2
        %v2829 = vrot.slane %v2785, 2
        %v2834 = vrot.slane %v2792, 1
        %v2835 = vrot.slane %v2793, 1
        %v2838 = vsel %vm560, %v2744, %v2804
        %v2839 = vsel %vm560, %v2745, %v2805
        %v2840 = vsel %vm563, %v2838, %v2810
        %v2841 = vsel %vm563, %v2839, %v2811
        %v2842 = vsel %vm566, %v2840, %v2816
        %v2843 = vsel %vm566, %v2841, %v2817
        %v2844 = vsel %vm569, %v2842, %v2731
        %v2845 = vsel %vm569, %v2843, %v2735
        %v2846 = vsel %vm572, %v2844, %v2822
        %v2847 = vsel %vm572, %v2845, %v2823
        %v2848 = vsel %vm575, %v2846, %v2828
        %v2849 = vsel %vm575, %v2847, %v2829
        %v2850 = vsel %vm578, %v2848, %v2834
        %v2851 = vsel %vm578, %v2849, %v2835
        %v2852 = vpack.c.bf16 %v2800, %v2850
        %v2853 = vpack.c.bf16 %v2801, %v2851
        %v2855 = vand.u32 %v2852, %v593
        %v2858 = vand.u32 %v2853, %v593
        %2860 = vmatprep.subr.bf16.mxu0 %v2858
        %2861 = vmatpush1.bf16.msra.mxu0 %v2855
        %2862 = vmatprep.subr.bf16.mxu0 0
        %2863 = vmatpush1.bf16.msra.mxu0 0
        %2864 = vmatprep.subr.bf16.mxu0 0
        %2865 = vmatpush1.bf16.msra.mxu0 0
        %2866 = vmatprep.subr.bf16.mxu0 0
        %2867 = vmatpush1.bf16.msra.mxu0 0
        %2868 = vmatprep.subr.bf16.mxu0 0
        %2869 = vmatpush1.bf16.msra.mxu0 0
        %2870 = vmatprep.subr.bf16.mxu0 0
        %2871 = vmatpush1.bf16.msra.mxu0 0
        %2872 = vmatprep.subr.bf16.mxu0 0
        %2873 = vmatpush1.bf16.msra.mxu0 0
        %2874 = vmatprep.subr.bf16.mxu0 0
        %2875 = vmatpush1.bf16.msra.mxu0 0
        %2876 = vmatprep.subr.bf16.mxu0 0
        %2877 = vmatpush1.bf16.msra.mxu0 0
        %2878 = vmatprep.subr.bf16.mxu0 0
        %2879 = vmatpush1.bf16.msra.mxu0 0
        %2880 = vmatprep.subr.bf16.mxu0 0
        %2881 = vmatpush1.bf16.msra.mxu0 0
        %2882 = vmatprep.subr.bf16.mxu0 0
        %2883 = vmatpush1.bf16.msra.mxu0 0
        %2884 = vmatprep.subr.bf16.mxu0 0
        %2885 = vmatpush1.bf16.msra.mxu0 0
        %2886 = vmatprep.subr.bf16.mxu0 0
        %2887 = vmatpush1.bf16.msra.mxu0 0
        %2888 = vmatprep.subr.bf16.mxu0 0
        %2889 = vmatpush1.bf16.msra.mxu0 0
        %2890 = vmatprep.subr.bf16.mxu0 0
        %2891 = vmatpush1.bf16.msra.mxu0 0
        %2892 = vmatprep.mubr.bf16.mxu0 0
        %2893 = vmatmul.mubr.bf16.gmra.mrb[0].mxu0 %v779
        %v2894 = vpop.f32.mrb[0].mxu0
        %v2895 = vadd.f32 %v635, %v2894
        %v2896 = vpop.f32.mrb[0].mxu0
        %v2897 = vadd.f32 %v637, %v2896
        %v2898 = vpop.f32.mrb[0].mxu0
        %v2899 = vadd.f32 %v639, %v2898
        %v2900 = vpop.f32.mrb[0].mxu0
        %v2901 = vadd.f32 %v641, %v2900
        %2902 = vdwg.mxu0
        %s2903 = scalar_lea.vmem %s1, 80
        %v2904 = vld [vmem:[%s2903] sm:$0xff]
        %v2905 = vld [vmem:[%s2903 + $0x8] sm:$0xff]
        %2907 = vset.pattern.permute.xlu0 0
        %2908 = vperm.xlu0 %2907, %v2904
        %v2909 = vpop.permute.xlu0 %2908
        %2912 = vset.pattern.permute.xlu0 0
        %2913 = vperm.xlu0 %2912, %v2905
        %v2914 = vpop.permute.xlu0 %2913
        %v2916 = vadd.f32 %v2895, %v2909
        %v2917 = vadd.f32 %v2897, %v2909
        %v2918 = vadd.f32 %v2899, %v2914
        %v2919 = vadd.f32 %v2901, %v2914
        %v2920 = vmax.f32 %v2916, 0.0
        %v2921 = vmax.f32 %v2917, 0.0
        %v2922 = vmax.f32 %v2918, 0.0
        %v2923 = vmax.f32 %v2919, 0.0
        %2924 = vmatprep.subr.mxu0 %v2921
        %2925 = vmatpush1.msra.mxu0 %v2920
        %2926 = vmatprep.subr.mxu0 %v2923
        %2927 = vmatpush1.msra.mxu0 %v2922
        %2928 = vmatprep.subr.mxu0 0.0
        %2929 = vmatpush1.msra.mxu0 0.0
        %2930 = vmatprep.subr.mxu0 0.0
        %2931 = vmatpush1.msra.mxu0 0.0
        %2932 = vmatprep.subr.mxu0 0.0
        %2933 = vmatpush1.msra.mxu0 0.0
        %2934 = vmatprep.subr.mxu0 0.0
        %2935 = vmatpush1.msra.mxu0 0.0
        %2936 = vmatprep.subr.mxu0 0.0
        %2937 = vmatpush1.msra.mxu0 0.0
        %2938 = vmatprep.subr.mxu0 0.0
        %2939 = vmatpush1.msra.mxu0 0.0
        %2940 = vmatprep.subr.mxu0 0.0
        %2941 = vmatpush1.msra.mxu0 0.0
        %2942 = vmatprep.subr.mxu0 0.0
        %2943 = vmatpush1.msra.mxu0 0.0
        %2944 = vmatprep.subr.mxu0 0.0
        %2945 = vmatpush1.msra.mxu0 0.0
        %2946 = vmatprep.subr.mxu0 0.0
        %2947 = vmatpush1.msra.mxu0 0.0
        %2948 = vmatprep.subr.mxu0 0.0
        %2949 = vmatpush1.msra.mxu0 0.0
        %2950 = vmatprep.subr.mxu0 0.0
        %2951 = vmatpush1.msra.mxu0 0.0
        %2952 = vmatprep.subr.mxu0 0.0
        %2953 = vmatpush1.msra.mxu0 0.0
        %2954 = vmatprep.subr.mxu0 0.0
        %2955 = vmatpush1.msra.mxu0 0.0
        %2956 = vmatprep.subr.mxu0 0.0
        %2957 = vmatpush1.msra.mxu0 0.0
        %2958 = vmatprep.subr.mxu0 0.0
        %2959 = vmatpush1.msra.mxu0 0.0
        %2960 = vmatprep.subr.mxu0 0.0
        %2961 = vmatpush1.msra.mxu0 0.0
        %2962 = vmatprep.subr.mxu0 0.0
        %2963 = vmatpush1.msra.mxu0 0.0
        %2964 = vmatprep.subr.mxu0 0.0
        %2965 = vmatpush1.msra.mxu0 0.0
        %2966 = vmatprep.subr.mxu0 0.0
        %2967 = vmatpush1.msra.mxu0 0.0
        %2968 = vmatprep.subr.mxu0 0.0
        %2969 = vmatpush1.msra.mxu0 0.0
        %2970 = vmatprep.subr.mxu0 0.0
        %2971 = vmatpush1.msra.mxu0 0.0
        %2972 = vmatprep.subr.mxu0 0.0
        %2973 = vmatpush1.msra.mxu0 0.0
        %2974 = vmatprep.subr.mxu0 0.0
        %2975 = vmatpush1.msra.mxu0 0.0
        %2976 = vmatprep.subr.mxu0 0.0
        %2977 = vmatpush1.msra.mxu0 0.0
        %2978 = vmatprep.subr.mxu0 0.0
        %2979 = vmatpush1.msra.mxu0 0.0
        %2980 = vmatprep.subr.mxu0 0.0
        %2981 = vmatpush1.msra.mxu0 0.0
        %2982 = vmatprep.subr.mxu0 0.0
        %2983 = vmatpush1.msra.mxu0 0.0
        %2984 = vmatprep.subr.mxu0 0.0
        %2985 = vmatpush1.msra.mxu0 0.0
        %2986 = vmatprep.subr.mxu0 0.0
        %2987 = vmatpush1.msra.mxu0 0.0
        %2988 = vmatprep.mubr.f32.mxu0 0.0
        %2989 = vmatmul.mubr.f32.gmra.mrb[0].mxu0 %v854
        %v2990 = vpop.f32.mrb[0].mxu0
        %v2991 = vadd.f32 0.0, %v2990
        %v2992 = vpop.f32.mrb[0].mxu0
        %v2993 = vadd.f32 0.0, %v2992
        %2994 = vmatprep.mubr.f32.mxu0 0.0
        %2995 = vmatmul.mubr.f32.gmra.mrb[0].mxu0 %v857
        %v2996 = vpop.f32.mrb[0].mxu0
        %v2997 = vadd.f32 0.0, %v2996
        %v2998 = vpop.f32.mrb[0].mxu0
        %v2999 = vadd.f32 0.0, %v2998
        %3000 = vdwg.mxu0
        %3001 = vrot.lane.b32.xlu0 %v2991, 17
        %v3002 = vpop.permute.xlu0 %3001
        %3003 = vrot.lane.b32.xlu0 %v2993, 17
        %v3004 = vpop.permute.xlu0 %3003
        %v3005 = vsel %vm353, %v3002, %v3004
        %v3006 = vsel %vm353, %v3004, %v3002
        %v3007 = vmul.f32 %v3006, %v361
        %v3008 = vmul.f32 %v3005, %v365
        %v3011 = vrot.slane %v2991, 1
        %v3012 = vrot.slane %v2993, 1
        %3015 = vrot.lane.b32.xlu0 %v3011, 16
        %v3016 = vpop.permute.xlu0 %3015
        %3017 = vrot.lane.b32.xlu0 %v3012, 16
        %v3018 = vpop.permute.xlu0 %3017
        %v3019 = vsel %vm374, %v3016, %v3018
        %v3020 = vsel %vm374, %v3018, %v3016
        %v3021 = vmul.f32 %v3020, %v383
        %v3022 = vmul.f32 %v3019, %v387
        %v3023 = vadd.f32 %v3007, %v3021
        %v3024 = vadd.f32 %v3008, %v3022
        %v3025 = vrot.slane %v2991, 2
        %v3026 = vrot.slane %v2993, 2
        %3029 = vrot.lane.b32.xlu0 %v3025, 15
        %v3030 = vpop.permute.xlu0 %3029
        %3031 = vrot.lane.b32.xlu0 %v3026, 15
        %v3032 = vpop.permute.xlu0 %3031
        %v3033 = vsel %vm396, %v3030, %v3032
        %v3034 = vsel %vm396, %v3032, %v3030
        %v3035 = vmul.f32 %v3034, %v405
        %v3036 = vmul.f32 %v3033, %v409
        %v3037 = vadd.f32 %v3023, %v3035
        %v3038 = vadd.f32 %v3024, %v3036
        %v3039 = vrot.slane %v2991, 3
        %v3040 = vrot.slane %v2993, 3
        %3043 = vrot.lane.b32.xlu0 %v3039, 1
        %v3044 = vpop.permute.xlu0 %3043
        %3045 = vrot.lane.b32.xlu0 %v3040, 1
        %v3046 = vpop.permute.xlu0 %3045
        %v3047 = vsel %vm418, %v3044, %v3046
        %v3048 = vsel %vm418, %v3046, %v3044
        %v3049 = vmul.f32 %v3048, %v427
        %v3050 = vmul.f32 %v3047, %v431
        %v3051 = vadd.f32 %v3037, %v3049
        %v3052 = vadd.f32 %v3038, %v3050
        %v3053 = vrot.slane %v2991, 4
        %v3054 = vrot.slane %v2993, 4
        %v3057 = vadd.f32 %v3051, %v3053
        %v3058 = vadd.f32 %v3052, %v3054
        %v3059 = vrot.slane %v2991, 5
        %v3060 = vrot.slane %v2993, 5
        %3063 = vrot.lane.b32.xlu0 %v3059, 127
        %v3064 = vpop.permute.xlu0 %3063
        %3065 = vrot.lane.b32.xlu0 %v3060, 127
        %v3066 = vpop.permute.xlu0 %3065
        %v3067 = vsel %vm440, %v3064, %v3066
        %v3068 = vsel %vm440, %v3066, %v3064
        %v3069 = vmul.f32 %v3067, %v449
        %v3070 = vmul.f32 %v3068, %v453
        %v3071 = vadd.f32 %v3057, %v3069
        %v3072 = vadd.f32 %v3058, %v3070
        %v3073 = vrot.slane %v2991, 6
        %v3074 = vrot.slane %v2993, 6
        %3077 = vrot.lane.b32.xlu0 %v3073, 113
        %v3078 = vpop.permute.xlu0 %3077
        %3079 = vrot.lane.b32.xlu0 %v3074, 113
        %v3080 = vpop.permute.xlu0 %3079
        %v3081 = vsel %vm462, %v3078, %v3080
        %v3082 = vsel %vm462, %v3080, %v3078
        %v3083 = vmul.f32 %v3081, %v471
        %v3084 = vmul.f32 %v3082, %v475
        %v3085 = vadd.f32 %v3071, %v3083
        %v3086 = vadd.f32 %v3072, %v3084
        %v3087 = vrot.slane %v2991, 7
        %v3088 = vrot.slane %v2993, 7
        %3091 = vrot.lane.b32.xlu0 %v3087, 112
        %v3092 = vpop.permute.xlu0 %3091
        %3093 = vrot.lane.b32.xlu0 %v3088, 112
        %v3094 = vpop.permute.xlu0 %3093
        %v3095 = vsel %vm484, %v3092, %v3094
        %v3096 = vsel %vm484, %v3094, %v3092
        %v3097 = vmul.f32 %v3095, %v493
        %v3098 = vmul.f32 %v3096, %v497
        %v3099 = vadd.f32 %v3085, %v3097
        %v3100 = vadd.f32 %v3086, %v3098
        %3101 = vrot.lane.b32.xlu0 %v2997, 111
        %v3102 = vpop.permute.xlu0 %3101
        %3103 = vrot.lane.b32.xlu0 %v2999, 111
        %v3104 = vpop.permute.xlu0 %3103
        %v3105 = vsel %vm506, %v3102, %v3104
        %v3106 = vsel %vm506, %v3104, %v3102
        %v3107 = vmul.f32 %v3105, %v515
        %v3108 = vmul.f32 %v3106, %v519
        %v3109 = vadd.f32 %v3099, %v3107
        %v3110 = vadd.f32 %v3100, %v3108
        %s3111 = sld [smem:[#allocation2 + $0xf]]
        %s3112 = sld [smem:[#allocation2 + $0x10]]
        %s3113 = sld [smem:[#allocation2 + $0x11]]
        %v3114 = vstv %s3111
        %v3115 = vmul.f32 %v3114, %v2726
        %v3116 = vstv %s3112
        %v3117 = vmul.f32 %v3116, %v3109
        %v3118 = vmul.f32 %v3116, %v3110
        %v3121 = vcombine.low %v3117, %v3118
        %v3123 = vunpack.c.l.s4 1966171168
        %v3124 = vunpack.c.0.s8 %v3123
        %v3125 = vlaneseq
        %v3126 = vshrl.u32 %v3125, 7
        %v3127 = vsub.s32 %v3124, %v3126
        %v3128 = vrot.slane %v3121, %v3127
        %v3130 = vunpack.c.l.s4 1966171168
        %v3131 = vunpack.c.0.s8 %v3130
        %v3132 = vlaneseq
        %v3133 = vshrl.u32 %v3132, 7
        %v3134 = vsub.s32 %v3131, %v3133
        %v3135 = vrot.slane %v3128, %v3134
        %v3137 = vadd.f32 %v3115, %v3135
        %v3138 = vstv %s3113
        %v3139 = vadd.f32 %v3137, %v3138
        %v3141 = vlaneseq
        %v3142 = vshrl.u32 %v3141, 7
        %v3143 = vsub.s32 0, %v3142
        %v3144 = vrot.slane %v3139, %v3143
        %v3145 = vlaneseq
        %v3146 = vshrl.u32 %v3145, 7
        %v3147 = vsub.s32 1, %v3146
        %v3148 = vrot.slane %v3139, %v3147
        %3151 = vrot.lane.b32.xlu0 %v3144, 17
        %v3152 = vpop.permute.xlu0 %3151
        %3153 = vrot.lane.b32.xlu0 %v3148, 17
        %v3154 = vpop.permute.xlu0 %3153
        %v3155 = vsel %vm353, %v3152, %v3154
        %v3156 = vsel %vm353, %v3154, %v3152
        %v3157 = vmul.f32 %v3156, %v361
        %v3158 = vmul.f32 %v3155, %v365
        %3159 = vrot.lane.b32.xlu0 %v3144, 16
        %v3160 = vpop.permute.xlu0 %3159
        %3161 = vrot.lane.b32.xlu0 %v3148, 16
        %v3162 = vpop.permute.xlu0 %3161
        %v3163 = vsel %vm374, %v3160, %v3162
        %v3164 = vsel %vm374, %v3162, %v3160
        %v3165 = vmul.f32 %v3164, %v383
        %v3166 = vmul.f32 %v3163, %v387
        %3167 = vrot.lane.b32.xlu0 %v3144, 15
        %v3168 = vpop.permute.xlu0 %3167
        %3169 = vrot.lane.b32.xlu0 %v3148, 15
        %v3170 = vpop.permute.xlu0 %3169
        %v3171 = vsel %vm396, %v3168, %v3170
        %v3172 = vsel %vm396, %v3170, %v3168
        %v3173 = vmul.f32 %v3172, %v405
        %v3174 = vmul.f32 %v3171, %v409
        %3175 = vrot.lane.b32.xlu0 %v3144, 1
        %v3176 = vpop.permute.xlu0 %3175
        %3177 = vrot.lane.b32.xlu0 %v3148, 1
        %v3178 = vpop.permute.xlu0 %3177
        %v3179 = vsel %vm418, %v3176, %v3178
        %v3180 = vsel %vm418, %v3178, %v3176
        %v3181 = vmul.f32 %v3180, %v427
        %v3182 = vmul.f32 %v3179, %v431
        %3183 = vrot.lane.b32.xlu0 %v3144, 127
        %v3184 = vpop.permute.xlu0 %3183
        %3185 = vrot.lane.b32.xlu0 %v3148, 127
        %v3186 = vpop.permute.xlu0 %3185
        %v3187 = vsel %vm440, %v3184, %v3186
        %v3188 = vsel %vm440, %v3186, %v3184
        %v3189 = vmul.f32 %v3187, %v449
        %v3190 = vmul.f32 %v3188, %v453
        %3191 = vrot.lane.b32.xlu0 %v3144, 113
        %v3192 = vpop.permute.xlu0 %3191
        %3193 = vrot.lane.b32.xlu0 %v3148, 113
        %v3194 = vpop.permute.xlu0 %3193
        %v3195 = vsel %vm462, %v3192, %v3194
        %v3196 = vsel %vm462, %v3194, %v3192
        %v3197 = vmul.f32 %v3195, %v471
        %v3198 = vmul.f32 %v3196, %v475
        %3199 = vrot.lane.b32.xlu0 %v3144, 112
        %v3200 = vpop.permute.xlu0 %3199
        %3201 = vrot.lane.b32.xlu0 %v3148, 112
        %v3202 = vpop.permute.xlu0 %3201
        %v3203 = vsel %vm484, %v3200, %v3202
        %v3204 = vsel %vm484, %v3202, %v3200
        %v3205 = vmul.f32 %v3203, %v493
        %v3206 = vmul.f32 %v3204, %v497
        %3207 = vrot.lane.b32.xlu0 %v3144, 111
        %v3208 = vpop.permute.xlu0 %3207
        %3209 = vrot.lane.b32.xlu0 %v3148, 111
        %v3210 = vpop.permute.xlu0 %3209
        %v3211 = vsel %vm506, %v3208, %v3210
        %v3212 = vsel %vm506, %v3210, %v3208
        %v3213 = vmul.f32 %v3211, %v515
        %v3214 = vmul.f32 %v3212, %v519
        %v3217 = vrot.slane %v3165, 7
        %v3218 = vrot.slane %v3166, 7
        %v3223 = vrot.slane %v3173, 6
        %v3224 = vrot.slane %v3174, 6
        %v3229 = vrot.slane %v3181, 5
        %v3230 = vrot.slane %v3182, 5
        %v3235 = vrot.slane %v3189, 3
        %v3236 = vrot.slane %v3190, 3
        %v3241 = vrot.slane %v3197, 2
        %v3242 = vrot.slane %v3198, 2
        %v3247 = vrot.slane %v3205, 1
        %v3248 = vrot.slane %v3206, 1
        %v3251 = vsel %vm560, %v3157, %v3217
        %v3252 = vsel %vm560, %v3158, %v3218
        %v3253 = vsel %vm563, %v3251, %v3223
        %v3254 = vsel %vm563, %v3252, %v3224
        %v3255 = vsel %vm566, %v3253, %v3229
        %v3256 = vsel %vm566, %v3254, %v3230
        %v3257 = vsel %vm569, %v3255, %v3144
        %v3258 = vsel %vm569, %v3256, %v3148
        %v3259 = vsel %vm572, %v3257, %v3235
        %v3260 = vsel %vm572, %v3258, %v3236
        %v3261 = vsel %vm575, %v3259, %v3241
        %v3262 = vsel %vm575, %v3260, %v3242
        %v3263 = vsel %vm578, %v3261, %v3247
        %v3264 = vsel %vm578, %v3262, %v3248
        %v3265 = vpack.c.bf16 %v3213, %v3263
        %v3266 = vpack.c.bf16 %v3214, %v3264
        %v3268 = vand.u32 %v3265, %v593
        %v3271 = vand.u32 %v3266, %v593
        %3273 = vmatprep.subr.bf16.mxu0 %v3271
        %3274 = vmatpush1.bf16.msra.mxu0 %v3268
        %3275 = vmatprep.subr.bf16.mxu0 0
        %3276 = vmatpush1.bf16.msra.mxu0 0
        %3277 = vmatprep.subr.bf16.mxu0 0
        %3278 = vmatpush1.bf16.msra.mxu0 0
        %3279 = vmatprep.subr.bf16.mxu0 0
        %3280 = vmatpush1.bf16.msra.mxu0 0
        %3281 = vmatprep.subr.bf16.mxu0 0
        %3282 = vmatpush1.bf16.msra.mxu0 0
        %3283 = vmatprep.subr.bf16.mxu0 0
        %3284 = vmatpush1.bf16.msra.mxu0 0
        %3285 = vmatprep.subr.bf16.mxu0 0
        %3286 = vmatpush1.bf16.msra.mxu0 0
        %3287 = vmatprep.subr.bf16.mxu0 0
        %3288 = vmatpush1.bf16.msra.mxu0 0
        %3289 = vmatprep.subr.bf16.mxu0 0
        %3290 = vmatpush1.bf16.msra.mxu0 0
        %3291 = vmatprep.subr.bf16.mxu0 0
        %3292 = vmatpush1.bf16.msra.mxu0 0
        %3293 = vmatprep.subr.bf16.mxu0 0
        %3294 = vmatpush1.bf16.msra.mxu0 0
        %3295 = vmatprep.subr.bf16.mxu0 0
        %3296 = vmatpush1.bf16.msra.mxu0 0
        %3297 = vmatprep.subr.bf16.mxu0 0
        %3298 = vmatpush1.bf16.msra.mxu0 0
        %3299 = vmatprep.subr.bf16.mxu0 0
        %3300 = vmatpush1.bf16.msra.mxu0 0
        %3301 = vmatprep.subr.bf16.mxu0 0
        %3302 = vmatpush1.bf16.msra.mxu0 0
        %3303 = vmatprep.subr.bf16.mxu0 0
        %3304 = vmatpush1.bf16.msra.mxu0 0
        %3305 = vmatprep.mubr.bf16.mxu0 0
        %3306 = vmatmul.mubr.bf16.gmra.mrb[0].mxu0 %v779
        %v3307 = vpop.f32.mrb[0].mxu0
        %v3308 = vadd.f32 %v635, %v3307
        %v3309 = vpop.f32.mrb[0].mxu0
        %v3310 = vadd.f32 %v637, %v3309
        %v3311 = vpop.f32.mrb[0].mxu0
        %v3312 = vadd.f32 %v639, %v3311
        %v3313 = vpop.f32.mrb[0].mxu0
        %v3314 = vadd.f32 %v641, %v3313
        %3315 = vdwg.mxu0
        %s3316 = scalar_lea.vmem %s1, 96
        %v3317 = vld [vmem:[%s3316] sm:$0xff]
        %v3318 = vld [vmem:[%s3316 + $0x8] sm:$0xff]
        %3320 = vset.pattern.permute.xlu0 0
        %3321 = vperm.xlu0 %3320, %v3317
        %v3322 = vpop.permute.xlu0 %3321
        %3325 = vset.pattern.permute.xlu0 0
        %3326 = vperm.xlu0 %3325, %v3318
        %v3327 = vpop.permute.xlu0 %3326
        %v3329 = vadd.f32 %v3308, %v3322
        %v3330 = vadd.f32 %v3310, %v3322
        %v3331 = vadd.f32 %v3312, %v3327
        %v3332 = vadd.f32 %v3314, %v3327
        %v3333 = vmax.f32 %v3329, 0.0
        %v3334 = vmax.f32 %v3330, 0.0
        %v3335 = vmax.f32 %v3331, 0.0
        %v3336 = vmax.f32 %v3332, 0.0
        %3337 = vmatprep.subr.mxu0 %v3334
        %3338 = vmatpush1.msra.mxu0 %v3333
        %3339 = vmatprep.subr.mxu0 %v3336
        %3340 = vmatpush1.msra.mxu0 %v3335
        %3341 = vmatprep.subr.mxu0 0.0
        %3342 = vmatpush1.msra.mxu0 0.0
        %3343 = vmatprep.subr.mxu0 0.0
        %3344 = vmatpush1.msra.mxu0 0.0
        %3345 = vmatprep.subr.mxu0 0.0
        %3346 = vmatpush1.msra.mxu0 0.0
        %3347 = vmatprep.subr.mxu0 0.0
        %3348 = vmatpush1.msra.mxu0 0.0
        %3349 = vmatprep.subr.mxu0 0.0
        %3350 = vmatpush1.msra.mxu0 0.0
        %3351 = vmatprep.subr.mxu0 0.0
        %3352 = vmatpush1.msra.mxu0 0.0
        %3353 = vmatprep.subr.mxu0 0.0
        %3354 = vmatpush1.msra.mxu0 0.0
        %3355 = vmatprep.subr.mxu0 0.0
        %3356 = vmatpush1.msra.mxu0 0.0
        %3357 = vmatprep.subr.mxu0 0.0
        %3358 = vmatpush1.msra.mxu0 0.0
        %3359 = vmatprep.subr.mxu0 0.0
        %3360 = vmatpush1.msra.mxu0 0.0
        %3361 = vmatprep.subr.mxu0 0.0
        %3362 = vmatpush1.msra.mxu0 0.0
        %3363 = vmatprep.subr.mxu0 0.0
        %3364 = vmatpush1.msra.mxu0 0.0
        %3365 = vmatprep.subr.mxu0 0.0
        %3366 = vmatpush1.msra.mxu0 0.0
        %3367 = vmatprep.subr.mxu0 0.0
        %3368 = vmatpush1.msra.mxu0 0.0
        %3369 = vmatprep.subr.mxu0 0.0
        %3370 = vmatpush1.msra.mxu0 0.0
        %3371 = vmatprep.subr.mxu0 0.0
        %3372 = vmatpush1.msra.mxu0 0.0
        %3373 = vmatprep.subr.mxu0 0.0
        %3374 = vmatpush1.msra.mxu0 0.0
        %3375 = vmatprep.subr.mxu0 0.0
        %3376 = vmatpush1.msra.mxu0 0.0
        %3377 = vmatprep.subr.mxu0 0.0
        %3378 = vmatpush1.msra.mxu0 0.0
        %3379 = vmatprep.subr.mxu0 0.0
        %3380 = vmatpush1.msra.mxu0 0.0
        %3381 = vmatprep.subr.mxu0 0.0
        %3382 = vmatpush1.msra.mxu0 0.0
        %3383 = vmatprep.subr.mxu0 0.0
        %3384 = vmatpush1.msra.mxu0 0.0
        %3385 = vmatprep.subr.mxu0 0.0
        %3386 = vmatpush1.msra.mxu0 0.0
        %3387 = vmatprep.subr.mxu0 0.0
        %3388 = vmatpush1.msra.mxu0 0.0
        %3389 = vmatprep.subr.mxu0 0.0
        %3390 = vmatpush1.msra.mxu0 0.0
        %3391 = vmatprep.subr.mxu0 0.0
        %3392 = vmatpush1.msra.mxu0 0.0
        %3393 = vmatprep.subr.mxu0 0.0
        %3394 = vmatpush1.msra.mxu0 0.0
        %3395 = vmatprep.subr.mxu0 0.0
        %3396 = vmatpush1.msra.mxu0 0.0
        %3397 = vmatprep.subr.mxu0 0.0
        %3398 = vmatpush1.msra.mxu0 0.0
        %3399 = vmatprep.subr.mxu0 0.0
        %3400 = vmatpush1.msra.mxu0 0.0
        %3401 = vmatprep.mubr.f32.mxu0 0.0
        %3402 = vmatmul.mubr.f32.gmra.mrb[0].mxu0 %v854
        %v3403 = vpop.f32.mrb[0].mxu0
        %v3404 = vadd.f32 0.0, %v3403
        %v3405 = vpop.f32.mrb[0].mxu0
        %v3406 = vadd.f32 0.0, %v3405
        %3407 = vmatprep.mubr.f32.mxu0 0.0
        %3408 = vmatmul.mubr.f32.gmra.mrb[0].mxu0 %v857
        %v3409 = vpop.f32.mrb[0].mxu0
        %v3410 = vadd.f32 0.0, %v3409
        %v3411 = vpop.f32.mrb[0].mxu0
        %v3412 = vadd.f32 0.0, %v3411
        %3413 = vdwg.mxu0
        %3414 = vrot.lane.b32.xlu0 %v3404, 17
        %v3415 = vpop.permute.xlu0 %3414
        %3416 = vrot.lane.b32.xlu0 %v3406, 17
        %v3417 = vpop.permute.xlu0 %3416
        %v3418 = vsel %vm353, %v3415, %v3417
        %v3419 = vsel %vm353, %v3417, %v3415
        %v3420 = vmul.f32 %v3419, %v361
        %v3421 = vmul.f32 %v3418, %v365
        %v3424 = vrot.slane %v3404, 1
        %v3425 = vrot.slane %v3406, 1
        %3428 = vrot.lane.b32.xlu0 %v3424, 16
        %v3429 = vpop.permute.xlu0 %3428
        %3430 = vrot.lane.b32.xlu0 %v3425, 16
        %v3431 = vpop.permute.xlu0 %3430
        %v3432 = vsel %vm374, %v3429, %v3431
        %v3433 = vsel %vm374, %v3431, %v3429
        %v3434 = vmul.f32 %v3433, %v383
        %v3435 = vmul.f32 %v3432, %v387
        %v3436 = vadd.f32 %v3420, %v3434
        %v3437 = vadd.f32 %v3421, %v3435
        %v3438 = vrot.slane %v3404, 2
        %v3439 = vrot.slane %v3406, 2
        %3442 = vrot.lane.b32.xlu0 %v3438, 15
        %v3443 = vpop.permute.xlu0 %3442
        %3444 = vrot.lane.b32.xlu0 %v3439, 15
        %v3445 = vpop.permute.xlu0 %3444
        %v3446 = vsel %vm396, %v3443, %v3445
        %v3447 = vsel %vm396, %v3445, %v3443
        %v3448 = vmul.f32 %v3447, %v405
        %v3449 = vmul.f32 %v3446, %v409
        %v3450 = vadd.f32 %v3436, %v3448
        %v3451 = vadd.f32 %v3437, %v3449
        %v3452 = vrot.slane %v3404, 3
        %v3453 = vrot.slane %v3406, 3
        %3456 = vrot.lane.b32.xlu0 %v3452, 1
        %v3457 = vpop.permute.xlu0 %3456
        %3458 = vrot.lane.b32.xlu0 %v3453, 1
        %v3459 = vpop.permute.xlu0 %3458
        %v3460 = vsel %vm418, %v3457, %v3459
        %v3461 = vsel %vm418, %v3459, %v3457
        %v3462 = vmul.f32 %v3461, %v427
        %v3463 = vmul.f32 %v3460, %v431
        %v3464 = vadd.f32 %v3450, %v3462
        %v3465 = vadd.f32 %v3451, %v3463
        %v3466 = vrot.slane %v3404, 4
        %v3467 = vrot.slane %v3406, 4
        %v3470 = vadd.f32 %v3464, %v3466
        %v3471 = vadd.f32 %v3465, %v3467
        %v3472 = vrot.slane %v3404, 5
        %v3473 = vrot.slane %v3406, 5
        %3476 = vrot.lane.b32.xlu0 %v3472, 127
        %v3477 = vpop.permute.xlu0 %3476
        %3478 = vrot.lane.b32.xlu0 %v3473, 127
        %v3479 = vpop.permute.xlu0 %3478
        %v3480 = vsel %vm440, %v3477, %v3479
        %v3481 = vsel %vm440, %v3479, %v3477
        %v3482 = vmul.f32 %v3480, %v449
        %v3483 = vmul.f32 %v3481, %v453
        %v3484 = vadd.f32 %v3470, %v3482
        %v3485 = vadd.f32 %v3471, %v3483
        %v3486 = vrot.slane %v3404, 6
        %v3487 = vrot.slane %v3406, 6
        %3490 = vrot.lane.b32.xlu0 %v3486, 113
        %v3491 = vpop.permute.xlu0 %3490
        %3492 = vrot.lane.b32.xlu0 %v3487, 113
        %v3493 = vpop.permute.xlu0 %3492
        %v3494 = vsel %vm462, %v3491, %v3493
        %v3495 = vsel %vm462, %v3493, %v3491
        %v3496 = vmul.f32 %v3494, %v471
        %v3497 = vmul.f32 %v3495, %v475
        %v3498 = vadd.f32 %v3484, %v3496
        %v3499 = vadd.f32 %v3485, %v3497
        %v3500 = vrot.slane %v3404, 7
        %v3501 = vrot.slane %v3406, 7
        %3504 = vrot.lane.b32.xlu0 %v3500, 112
        %v3505 = vpop.permute.xlu0 %3504
        %3506 = vrot.lane.b32.xlu0 %v3501, 112
        %v3507 = vpop.permute.xlu0 %3506
        %v3508 = vsel %vm484, %v3505, %v3507
        %v3509 = vsel %vm484, %v3507, %v3505
        %v3510 = vmul.f32 %v3508, %v493
        %v3511 = vmul.f32 %v3509, %v497
        %v3512 = vadd.f32 %v3498, %v3510
        %v3513 = vadd.f32 %v3499, %v3511
        %3514 = vrot.lane.b32.xlu0 %v3410, 111
        %v3515 = vpop.permute.xlu0 %3514
        %3516 = vrot.lane.b32.xlu0 %v3412, 111
        %v3517 = vpop.permute.xlu0 %3516
        %v3518 = vsel %vm506, %v3515, %v3517
        %v3519 = vsel %vm506, %v3517, %v3515
        %v3520 = vmul.f32 %v3518, %v515
        %v3521 = vmul.f32 %v3519, %v519
        %v3522 = vadd.f32 %v3512, %v3520
        %v3523 = vadd.f32 %v3513, %v3521
        %s3524 = sld [smem:[#allocation2 + $0x12]]
        %s3525 = sld [smem:[#allocation2 + $0x13]]
        %s3526 = sld [smem:[#allocation2 + $0x14]]
        %v3527 = vstv %s3524
        %v3528 = vmul.f32 %v3527, %v3139
        %v3529 = vstv %s3525
        %v3530 = vmul.f32 %v3529, %v3522
        %v3531 = vmul.f32 %v3529, %v3523
        %v3534 = vcombine.low %v3530, %v3531
        %v3536 = vunpack.c.l.s4 1966171168
        %v3537 = vunpack.c.0.s8 %v3536
        %v3538 = vlaneseq
        %v3539 = vshrl.u32 %v3538, 7
        %v3540 = vsub.s32 %v3537, %v3539
        %v3541 = vrot.slane %v3534, %v3540
        %v3543 = vunpack.c.l.s4 1966171168
        %v3544 = vunpack.c.0.s8 %v3543
        %v3545 = vlaneseq
        %v3546 = vshrl.u32 %v3545, 7
        %v3547 = vsub.s32 %v3544, %v3546
        %v3548 = vrot.slane %v3541, %v3547
        %v3550 = vadd.f32 %v3528, %v3548
        %v3551 = vstv %s3526
        %v3552 = vadd.f32 %v3550, %v3551
        %v3554 = vlaneseq
        %v3555 = vshrl.u32 %v3554, 7
        %v3556 = vsub.s32 0, %v3555
        %v3557 = vrot.slane %v3552, %v3556
        %v3558 = vlaneseq
        %v3559 = vshrl.u32 %v3558, 7
        %v3560 = vsub.s32 1, %v3559
        %v3561 = vrot.slane %v3552, %v3560
        %3564 = vrot.lane.b32.xlu0 %v3557, 17
        %v3565 = vpop.permute.xlu0 %3564
        %3566 = vrot.lane.b32.xlu0 %v3561, 17
        %v3567 = vpop.permute.xlu0 %3566
        %v3568 = vsel %vm353, %v3565, %v3567
        %v3569 = vsel %vm353, %v3567, %v3565
        %v3570 = vmul.f32 %v3569, %v361
        %v3571 = vmul.f32 %v3568, %v365
        %3572 = vrot.lane.b32.xlu0 %v3557, 16
        %v3573 = vpop.permute.xlu0 %3572
        %3574 = vrot.lane.b32.xlu0 %v3561, 16
        %v3575 = vpop.permute.xlu0 %3574
        %v3576 = vsel %vm374, %v3573, %v3575
        %v3577 = vsel %vm374, %v3575, %v3573
        %v3578 = vmul.f32 %v3577, %v383
        %v3579 = vmul.f32 %v3576, %v387
        %3580 = vrot.lane.b32.xlu0 %v3557, 15
        %v3581 = vpop.permute.xlu0 %3580
        %3582 = vrot.lane.b32.xlu0 %v3561, 15
        %v3583 = vpop.permute.xlu0 %3582
        %v3584 = vsel %vm396, %v3581, %v3583
        %v3585 = vsel %vm396, %v3583, %v3581
        %v3586 = vmul.f32 %v3585, %v405
        %v3587 = vmul.f32 %v3584, %v409
        %3588 = vrot.lane.b32.xlu0 %v3557, 1
        %v3589 = vpop.permute.xlu0 %3588
        %3590 = vrot.lane.b32.xlu0 %v3561, 1
        %v3591 = vpop.permute.xlu0 %3590
        %v3592 = vsel %vm418, %v3589, %v3591
        %v3593 = vsel %vm418, %v3591, %v3589
        %v3594 = vmul.f32 %v3593, %v427
        %v3595 = vmul.f32 %v3592, %v431
        %3596 = vrot.lane.b32.xlu0 %v3557, 127
        %v3597 = vpop.permute.xlu0 %3596
        %3598 = vrot.lane.b32.xlu0 %v3561, 127
        %v3599 = vpop.permute.xlu0 %3598
        %v3600 = vsel %vm440, %v3597, %v3599
        %v3601 = vsel %vm440, %v3599, %v3597
        %v3602 = vmul.f32 %v3600, %v449
        %v3603 = vmul.f32 %v3601, %v453
        %3604 = vrot.lane.b32.xlu0 %v3557, 113
        %v3605 = vpop.permute.xlu0 %3604
        %3606 = vrot.lane.b32.xlu0 %v3561, 113
        %v3607 = vpop.permute.xlu0 %3606
        %v3608 = vsel %vm462, %v3605, %v3607
        %v3609 = vsel %vm462, %v3607, %v3605
        %v3610 = vmul.f32 %v3608, %v471
        %v3611 = vmul.f32 %v3609, %v475
        %3612 = vrot.lane.b32.xlu0 %v3557, 112
        %v3613 = vpop.permute.xlu0 %3612
        %3614 = vrot.lane.b32.xlu0 %v3561, 112
        %v3615 = vpop.permute.xlu0 %3614
        %v3616 = vsel %vm484, %v3613, %v3615
        %v3617 = vsel %vm484, %v3615, %v3613
        %v3618 = vmul.f32 %v3616, %v493
        %v3619 = vmul.f32 %v3617, %v497
        %3620 = vrot.lane.b32.xlu0 %v3557, 111
        %v3621 = vpop.permute.xlu0 %3620
        %3622 = vrot.lane.b32.xlu0 %v3561, 111
        %v3623 = vpop.permute.xlu0 %3622
        %v3624 = vsel %vm506, %v3621, %v3623
        %v3625 = vsel %vm506, %v3623, %v3621
        %v3626 = vmul.f32 %v3624, %v515
        %v3627 = vmul.f32 %v3625, %v519
        %v3630 = vrot.slane %v3578, 7
        %v3631 = vrot.slane %v3579, 7
        %v3636 = vrot.slane %v3586, 6
        %v3637 = vrot.slane %v3587, 6
        %v3642 = vrot.slane %v3594, 5
        %v3643 = vrot.slane %v3595, 5
        %v3648 = vrot.slane %v3602, 3
        %v3649 = vrot.slane %v3603, 3
        %v3654 = vrot.slane %v3610, 2
        %v3655 = vrot.slane %v3611, 2
        %v3660 = vrot.slane %v3618, 1
        %v3661 = vrot.slane %v3619, 1
        %v3664 = vsel %vm560, %v3570, %v3630
        %v3665 = vsel %vm560, %v3571, %v3631
        %v3666 = vsel %vm563, %v3664, %v3636
        %v3667 = vsel %vm563, %v3665, %v3637
        %v3668 = vsel %vm566, %v3666, %v3642
        %v3669 = vsel %vm566, %v3667, %v3643
        %v3670 = vsel %vm569, %v3668, %v3557
        %v3671 = vsel %vm569, %v3669, %v3561
        %v3672 = vsel %vm572, %v3670, %v3648
        %v3673 = vsel %vm572, %v3671, %v3649
        %v3674 = vsel %vm575, %v3672, %v3654
        %v3675 = vsel %vm575, %v3673, %v3655
        %v3676 = vsel %vm578, %v3674, %v3660
        %v3677 = vsel %vm578, %v3675, %v3661
        %v3678 = vpack.c.bf16 %v3626, %v3676
        %v3679 = vpack.c.bf16 %v3627, %v3677
        %v3681 = vand.u32 %v3678, %v593
        %v3684 = vand.u32 %v3679, %v593
        %3686 = vmatprep.subr.bf16.mxu0 %v3684
        %3687 = vmatpush1.bf16.msra.mxu0 %v3681
        %3688 = vmatprep.subr.bf16.mxu0 0
        %3689 = vmatpush1.bf16.msra.mxu0 0
        %3690 = vmatprep.subr.bf16.mxu0 0
        %3691 = vmatpush1.bf16.msra.mxu0 0
        %3692 = vmatprep.subr.bf16.mxu0 0
        %3693 = vmatpush1.bf16.msra.mxu0 0
        %3694 = vmatprep.subr.bf16.mxu0 0
        %3695 = vmatpush1.bf16.msra.mxu0 0
        %3696 = vmatprep.subr.bf16.mxu0 0
        %3697 = vmatpush1.bf16.msra.mxu0 0
        %3698 = vmatprep.subr.bf16.mxu0 0
        %3699 = vmatpush1.bf16.msra.mxu0 0
        %3700 = vmatprep.subr.bf16.mxu0 0
        %3701 = vmatpush1.bf16.msra.mxu0 0
        %3702 = vmatprep.subr.bf16.mxu0 0
        %3703 = vmatpush1.bf16.msra.mxu0 0
        %3704 = vmatprep.subr.bf16.mxu0 0
        %3705 = vmatpush1.bf16.msra.mxu0 0
        %3706 = vmatprep.subr.bf16.mxu0 0
        %3707 = vmatpush1.bf16.msra.mxu0 0
        %3708 = vmatprep.subr.bf16.mxu0 0
        %3709 = vmatpush1.bf16.msra.mxu0 0
        %3710 = vmatprep.subr.bf16.mxu0 0
        %3711 = vmatpush1.bf16.msra.mxu0 0
        %3712 = vmatprep.subr.bf16.mxu0 0
        %3713 = vmatpush1.bf16.msra.mxu0 0
        %3714 = vmatprep.subr.bf16.mxu0 0
        %3715 = vmatpush1.bf16.msra.mxu0 0
        %3716 = vmatprep.subr.bf16.mxu0 0
        %3717 = vmatpush1.bf16.msra.mxu0 0
        %3718 = vmatprep.mubr.bf16.mxu0 0
        %3719 = vmatmul.mubr.bf16.gmra.mrb[0].mxu0 %v779
        %v3720 = vpop.f32.mrb[0].mxu0
        %v3721 = vadd.f32 %v635, %v3720
        %v3722 = vpop.f32.mrb[0].mxu0
        %v3723 = vadd.f32 %v637, %v3722
        %v3724 = vpop.f32.mrb[0].mxu0
        %v3725 = vadd.f32 %v639, %v3724
        %v3726 = vpop.f32.mrb[0].mxu0
        %v3727 = vadd.f32 %v641, %v3726
        %3728 = vdwg.mxu0
        %s3729 = scalar_lea.vmem %s1, 112
        %v3730 = vld [vmem:[%s3729] sm:$0xff]
        %v3731 = vld [vmem:[%s3729 + $0x8] sm:$0xff]
        %3733 = vset.pattern.permute.xlu0 0
        %3734 = vperm.xlu0 %3733, %v3730
        %v3735 = vpop.permute.xlu0 %3734
        %3738 = vset.pattern.permute.xlu0 0
        %3739 = vperm.xlu0 %3738, %v3731
        %v3740 = vpop.permute.xlu0 %3739
        %v3742 = vadd.f32 %v3721, %v3735
        %v3743 = vadd.f32 %v3723, %v3735
        %v3744 = vadd.f32 %v3725, %v3740
        %v3745 = vadd.f32 %v3727, %v3740
        %v3746 = vmax.f32 %v3742, 0.0
        %v3747 = vmax.f32 %v3743, 0.0
        %v3748 = vmax.f32 %v3744, 0.0
        %v3749 = vmax.f32 %v3745, 0.0
        %3750 = vmatprep.subr.mxu0 %v3747
        %3751 = vmatpush1.msra.mxu0 %v3746
        %3752 = vmatprep.subr.mxu0 %v3749
        %3753 = vmatpush1.msra.mxu0 %v3748
        %3754 = vmatprep.subr.mxu0 0.0
        %3755 = vmatpush1.msra.mxu0 0.0
        %3756 = vmatprep.subr.mxu0 0.0
        %3757 = vmatpush1.msra.mxu0 0.0
        %3758 = vmatprep.subr.mxu0 0.0
        %3759 = vmatpush1.msra.mxu0 0.0
        %3760 = vmatprep.subr.mxu0 0.0
        %3761 = vmatpush1.msra.mxu0 0.0
        %3762 = vmatprep.subr.mxu0 0.0
        %3763 = vmatpush1.msra.mxu0 0.0
        %3764 = vmatprep.subr.mxu0 0.0
        %3765 = vmatpush1.msra.mxu0 0.0
        %3766 = vmatprep.subr.mxu0 0.0
        %3767 = vmatpush1.msra.mxu0 0.0
        %3768 = vmatprep.subr.mxu0 0.0
        %3769 = vmatpush1.msra.mxu0 0.0
        %3770 = vmatprep.subr.mxu0 0.0
        %3771 = vmatpush1.msra.mxu0 0.0
        %3772 = vmatprep.subr.mxu0 0.0
        %3773 = vmatpush1.msra.mxu0 0.0
        %3774 = vmatprep.subr.mxu0 0.0
        %3775 = vmatpush1.msra.mxu0 0.0
        %3776 = vmatprep.subr.mxu0 0.0
        %3777 = vmatpush1.msra.mxu0 0.0
        %3778 = vmatprep.subr.mxu0 0.0
        %3779 = vmatpush1.msra.mxu0 0.0
        %3780 = vmatprep.subr.mxu0 0.0
        %3781 = vmatpush1.msra.mxu0 0.0
        %3782 = vmatprep.subr.mxu0 0.0
        %3783 = vmatpush1.msra.mxu0 0.0
        %3784 = vmatprep.subr.mxu0 0.0
        %3785 = vmatpush1.msra.mxu0 0.0
        %3786 = vmatprep.subr.mxu0 0.0
        %3787 = vmatpush1.msra.mxu0 0.0
        %3788 = vmatprep.subr.mxu0 0.0
        %3789 = vmatpush1.msra.mxu0 0.0
        %3790 = vmatprep.subr.mxu0 0.0
        %3791 = vmatpush1.msra.mxu0 0.0
        %3792 = vmatprep.subr.mxu0 0.0
        %3793 = vmatpush1.msra.mxu0 0.0
        %3794 = vmatprep.subr.mxu0 0.0
        %3795 = vmatpush1.msra.mxu0 0.0
        %3796 = vmatprep.subr.mxu0 0.0
        %3797 = vmatpush1.msra.mxu0 0.0
        %3798 = vmatprep.subr.mxu0 0.0
        %3799 = vmatpush1.msra.mxu0 0.0
        %3800 = vmatprep.subr.mxu0 0.0
        %3801 = vmatpush1.msra.mxu0 0.0
        %3802 = vmatprep.subr.mxu0 0.0
        %3803 = vmatpush1.msra.mxu0 0.0
        %3804 = vmatprep.subr.mxu0 0.0
        %3805 = vmatpush1.msra.mxu0 0.0
        %3806 = vmatprep.subr.mxu0 0.0
        %3807 = vmatpush1.msra.mxu0 0.0
        %3808 = vmatprep.subr.mxu0 0.0
        %3809 = vmatpush1.msra.mxu0 0.0
        %3810 = vmatprep.subr.mxu0 0.0
        %3811 = vmatpush1.msra.mxu0 0.0
        %3812 = vmatprep.subr.mxu0 0.0
        %3813 = vmatpush1.msra.mxu0 0.0
        %3814 = vmatprep.mubr.f32.mxu0 0.0
        %3815 = vmatmul.mubr.f32.gmra.mrb[0].mxu0 %v854
        %v3816 = vpop.f32.mrb[0].mxu0
        %v3817 = vadd.f32 0.0, %v3816
        %v3818 = vpop.f32.mrb[0].mxu0
        %v3819 = vadd.f32 0.0, %v3818
        %3820 = vmatprep.mubr.f32.mxu0 0.0
        %3821 = vmatmul.mubr.f32.gmra.mrb[0].mxu0 %v857
        %v3822 = vpop.f32.mrb[0].mxu0
        %v3823 = vadd.f32 0.0, %v3822
        %v3824 = vpop.f32.mrb[0].mxu0
        %v3825 = vadd.f32 0.0, %v3824
        %3826 = vdwg.mxu0
        %3827 = vrot.lane.b32.xlu0 %v3817, 17
        %v3828 = vpop.permute.xlu0 %3827
        %3829 = vrot.lane.b32.xlu0 %v3819, 17
        %v3830 = vpop.permute.xlu0 %3829
        %v3831 = vsel %vm353, %v3828, %v3830
        %v3832 = vsel %vm353, %v3830, %v3828
        %v3833 = vmul.f32 %v3832, %v361
        %v3834 = vmul.f32 %v3831, %v365
        %v3837 = vrot.slane %v3817, 1
        %v3838 = vrot.slane %v3819, 1
        %3841 = vrot.lane.b32.xlu0 %v3837, 16
        %v3842 = vpop.permute.xlu0 %3841
        %3843 = vrot.lane.b32.xlu0 %v3838, 16
        %v3844 = vpop.permute.xlu0 %3843
        %v3845 = vsel %vm374, %v3842, %v3844
        %v3846 = vsel %vm374, %v3844, %v3842
        %v3847 = vmul.f32 %v3846, %v383
        %v3848 = vmul.f32 %v3845, %v387
        %v3849 = vadd.f32 %v3833, %v3847
        %v3850 = vadd.f32 %v3834, %v3848
        %v3851 = vrot.slane %v3817, 2
        %v3852 = vrot.slane %v3819, 2
        %3855 = vrot.lane.b32.xlu0 %v3851, 15
        %v3856 = vpop.permute.xlu0 %3855
        %3857 = vrot.lane.b32.xlu0 %v3852, 15
        %v3858 = vpop.permute.xlu0 %3857
        %v3859 = vsel %vm396, %v3856, %v3858
        %v3860 = vsel %vm396, %v3858, %v3856
        %v3861 = vmul.f32 %v3860, %v405
        %v3862 = vmul.f32 %v3859, %v409
        %v3863 = vadd.f32 %v3849, %v3861
        %v3864 = vadd.f32 %v3850, %v3862
        %v3865 = vrot.slane %v3817, 3
        %v3866 = vrot.slane %v3819, 3
        %3869 = vrot.lane.b32.xlu0 %v3865, 1
        %v3870 = vpop.permute.xlu0 %3869
        %3871 = vrot.lane.b32.xlu0 %v3866, 1
        %v3872 = vpop.permute.xlu0 %3871
        %v3873 = vsel %vm418, %v3870, %v3872
        %v3874 = vsel %vm418, %v3872, %v3870
        %v3875 = vmul.f32 %v3874, %v427
        %v3876 = vmul.f32 %v3873, %v431
        %v3877 = vadd.f32 %v3863, %v3875
        %v3878 = vadd.f32 %v3864, %v3876
        %v3879 = vrot.slane %v3817, 4
        %v3880 = vrot.slane %v3819, 4
        %v3883 = vadd.f32 %v3877, %v3879
        %v3884 = vadd.f32 %v3878, %v3880
        %v3885 = vrot.slane %v3817, 5
        %v3886 = vrot.slane %v3819, 5
        %3889 = vrot.lane.b32.xlu0 %v3885, 127
        %v3890 = vpop.permute.xlu0 %3889
        %3891 = vrot.lane.b32.xlu0 %v3886, 127
        %v3892 = vpop.permute.xlu0 %3891
        %v3893 = vsel %vm440, %v3890, %v3892
        %v3894 = vsel %vm440, %v3892, %v3890
        %v3895 = vmul.f32 %v3893, %v449
        %v3896 = vmul.f32 %v3894, %v453
        %v3897 = vadd.f32 %v3883, %v3895
        %v3898 = vadd.f32 %v3884, %v3896
        %v3899 = vrot.slane %v3817, 6
        %v3900 = vrot.slane %v3819, 6
        %3903 = vrot.lane.b32.xlu0 %v3899, 113
        %v3904 = vpop.permute.xlu0 %3903
        %3905 = vrot.lane.b32.xlu0 %v3900, 113
        %v3906 = vpop.permute.xlu0 %3905
        %v3907 = vsel %vm462, %v3904, %v3906
        %v3908 = vsel %vm462, %v3906, %v3904
        %v3909 = vmul.f32 %v3907, %v471
        %v3910 = vmul.f32 %v3908, %v475
        %v3911 = vadd.f32 %v3897, %v3909
        %v3912 = vadd.f32 %v3898, %v3910
        %v3913 = vrot.slane %v3817, 7
        %v3914 = vrot.slane %v3819, 7
        %3917 = vrot.lane.b32.xlu0 %v3913, 112
        %v3918 = vpop.permute.xlu0 %3917
        %3919 = vrot.lane.b32.xlu0 %v3914, 112
        %v3920 = vpop.permute.xlu0 %3919
        %v3921 = vsel %vm484, %v3918, %v3920
        %v3922 = vsel %vm484, %v3920, %v3918
        %v3923 = vmul.f32 %v3921, %v493
        %v3924 = vmul.f32 %v3922, %v497
        %v3925 = vadd.f32 %v3911, %v3923
        %v3926 = vadd.f32 %v3912, %v3924
        %3927 = vrot.lane.b32.xlu0 %v3823, 111
        %v3928 = vpop.permute.xlu0 %3927
        %3929 = vrot.lane.b32.xlu0 %v3825, 111
        %v3930 = vpop.permute.xlu0 %3929
        %v3931 = vsel %vm506, %v3928, %v3930
        %v3932 = vsel %vm506, %v3930, %v3928
        %v3933 = vmul.f32 %v3931, %v515
        %v3934 = vmul.f32 %v3932, %v519
        %v3935 = vadd.f32 %v3925, %v3933
        %v3936 = vadd.f32 %v3926, %v3934
        %s3937 = sld [smem:[#allocation2 + $0x15]]
        %s3938 = sld [smem:[#allocation2 + $0x16]]
        %s3939 = sld [smem:[#allocation2 + $0x17]]
        %v3940 = vstv %s3937
        %v3941 = vmul.f32 %v3940, %v3552
        %v3942 = vstv %s3938
        %v3943 = vmul.f32 %v3942, %v3935
        %v3944 = vmul.f32 %v3942, %v3936
        %v3947 = vcombine.low %v3943, %v3944
        %v3949 = vunpack.c.l.s4 1966171168
        %v3950 = vunpack.c.0.s8 %v3949
        %v3951 = vlaneseq
        %v3952 = vshrl.u32 %v3951, 7
        %v3953 = vsub.s32 %v3950, %v3952
        %v3954 = vrot.slane %v3947, %v3953
        %v3956 = vunpack.c.l.s4 1966171168
        %v3957 = vunpack.c.0.s8 %v3956
        %v3958 = vlaneseq
        %v3959 = vshrl.u32 %v3958, 7
        %v3960 = vsub.s32 %v3957, %v3959
        %v3961 = vrot.slane %v3954, %v3960
        %v3963 = vadd.f32 %v3941, %v3961
        %v3964 = vstv %s3939
        %v3965 = vadd.f32 %v3963, %v3964
        %v3966 = vlaneseq
        %vm3967 = vcmp.ge.s32.totalorder %v3966, 0
        %vm3968 = vcmp.lt.s32.totalorder %v3966, 256
        %vm3969 = vmand %vm3967, %vm3968
        %3970 = vst.msk [vmem:[%s331] sm:$0x3] %vm3969, %v3965
        %p3971 = scmp.lt.s32.totalorder %s20, 1
        %s3972 = scalar_select %p3971, %s20, 1
        %s3973 = smul.addr %s3972, 2
        %s3974 = scalar_lea.vmem %s8, %s3973
        // Predicated region
        $region57: #{_ddim_sample_jit.1} parent=51 // pred_check
          %p3975 = pneg %p216
        $region58: #{_ddim_sample_jit.1} parent=51 // pred_check_branch
          %3977 = sbr.rel (%p3975) target = $region60
        $region59: #{_ddim_sample_jit.1} parent=51 // pred_region
          _
        $region60: #{_ddim_sample_jit.1} parent=51 // pred_fallthru
          _
      $region52: #{_ddim_sample_jit.1} parent=5 // pred_fallthru
        _
      %p3978 = scmp.le.s32.totalorder 2, %s15
      // Predicated region
      $region61: #{_ddim_sample_jit.1} parent=5 // pred_check
        %p3979 = pneg %p3978
      $region62: #{_ddim_sample_jit.1} parent=5 // pred_check_branch
        %3981 = sbr.rel (%p3979) target = $region64
      $region63: #{_ddim_sample_jit.1} parent=5 // pred_region
        %s3982 = ssub.s32 %s15, 2
        // Predicated region
        $region65: #{_ddim_sample_jit.1} parent=63 // pred_check
          %p3983 = pneg %p222
        $region66: #{_ddim_sample_jit.1} parent=63 // pred_check_branch
          %3985 = sbr.rel (%p3983) target = $region68
        $region67: #{_ddim_sample_jit.1} parent=63 // pred_region
          %p3986 = scmp.lt.s32.totalorder %s21, 1
          %s3987 = scalar_select %p3986, %s21, 1
          %s3988 = smul.addr %s3987, 2
          %s3989 = scalar_lea.vmem %s8, %s3988
        $region68: #{_ddim_sample_jit.1} parent=63 // pred_fallthru
          _
      $region64: #{_ddim_sample_jit.1} parent=5 // pred_fallthru
        _
    $region6: #{_ddim_sample_jit.1} parent=1 // loop_footer
      %s19 = sadd.s32 1, %s15
    $region7: #{_ddim_sample_jit.1} parent=1 // loop_footer_branch
      %14 = sbr.rel target = $region3
    $region8: #{_ddim_sample_jit.1} parent=1 // loop_exit
      _
    %3990 = vsyncpa [#allocation3], 1
    %s3991 = scalar_lea.sflag [#allocation3], 1
    %3992 = vsyncpa %s3991, 1

</llo_original>
